<compile_context>
chip_gen: v7x
topology: tpu7x:2x2x1
jax: 0.10.0
libtpu: 0.0.40
codegen_flags: <defaults>
</compile_context>

<pallas_src>
import functools
import math

import jax
import jax.numpy as jnp
from jax import lax
from jax.experimental import pallas as pl
from jax.experimental.pallas import tpu as pltpu


# ------------------------------ configuration ------------------------------
VOCAB = 100
MAX_POS = 16
HIDDEN = 128
N_HEADS = 2
HEAD_DIM = HIDDEN // N_HEADS
INTERMEDIATE = 256
N_LAYERS = 2
N_LABELS = 4
LOGIT_PAD = 128          # lane-dense classifier output width (real logits: first 4)
LN_EPS = 1e-12
MASK_BIAS = -10000.0


# ------------------------------ fused kernel -------------------------------

def _layernorm(x, g, b, eps):
    mean = jnp.mean(x, axis=-1, keepdims=True)
    xc = x - mean
    var = jnp.mean(xc * xc, axis=-1, keepdims=True)
    return xc * lax.rsqrt(var + eps) * g + b


def _bert_kernel(word_ref, pos_type_ref, attn_mask_ref, cls_sel_ref,
                 emb_ln_g_ref, emb_ln_b_ref,
                 wqkv_ref, bqkv_ref, wo_ref, bo_ref,
                 ln1_g_ref, ln1_b_ref,
                 w1_ref, b1_ref, w2_ref, b2_ref,
                 ln2_g_ref, ln2_b_ref,
                 pooler_w_ref, pooler_b_ref,
                 cls_w_ref, cls_b_ref,
                 logits_ref,
                 *, batch, seq, n_heads, head_dim, n_layers, eps):
    H = n_heads * head_dim
    M = batch * seq
    scale = 1.0 / math.sqrt(head_dim)

    # ---- embeddings: word gather done in JAX; pos/type adds + LN fused here ----
    pos_type = pos_type_ref[...]                                    # [S, H]
    emb = word_ref[...] + jnp.concatenate([pos_type] * batch, axis=0)
    x = _layernorm(emb, emb_ln_g_ref[...], emb_ln_b_ref[...], eps)  # [M, H] f32

    attn_mask = attn_mask_ref[...]                                  # [M, M] additive bias
    col = lax.broadcasted_iota(jnp.int32, (1, H), 1)                # head-column index

    for li in range(n_layers):
        # ---------------- fused QKV projection (one [H,3H] matmul) -----------
        qkv = jnp.dot(x.astype(jnp.bfloat16), wqkv_ref[li],
                      preferred_element_type=jnp.float32) + bqkv_ref[li]
        q = qkv[:, 0:H]
        k = qkv[:, H:2 * H]
        v = qkv[:, 2 * H:3 * H]

        # -------- multi-head attention; head split via column masks ----------
        # (whole batch at once; cross-batch + padding handled by attn_mask)
        ctx = jnp.zeros((M, H), jnp.float32)
        for h in range(n_heads):
            hm = ((col >= h * head_dim) & (col < (h + 1) * head_dim)
                  ).astype(jnp.float32)                              # [1, H]
            qh = (q * hm).astype(jnp.bfloat16)
            kh = (k * hm).astype(jnp.bfloat16)
            vh = (v * hm).astype(jnp.bfloat16)
            s = lax.dot_general(qh, kh, (((1,), (1,)), ((), ())),    # q @ k^T
                                preferred_element_type=jnp.float32) * scale
            s = s + attn_mask                                        # [M, M]
            m = jnp.max(s, axis=-1, keepdims=True)
            p = jnp.exp(s - m)
            p = p * pl.reciprocal(jnp.sum(p, axis=-1, keepdims=True), approx=True)
            ctx = ctx + jnp.dot(p.astype(jnp.bfloat16), vh,
                                preferred_element_type=jnp.float32)  # head h cols only

        # -------- attention output projection + residual + LayerNorm ---------
        attn_out = jnp.dot(ctx.astype(jnp.bfloat16), wo_ref[li],
                           preferred_element_type=jnp.float32) + bo_ref[li]
        x = _layernorm(x + attn_out, ln1_g_ref[li], ln1_b_ref[li], eps)

        # -------------- feed-forward + residual + LayerNorm -------------------
        h1 = jnp.dot(x.astype(jnp.bfloat16), w1_ref[li],
                     preferred_element_type=jnp.float32) + b1_ref[li]
        h1 = jax.nn.gelu(h1, approximate=True)   # TODO(synk): HF BERT default is exact erf GELU
        ff = jnp.dot(h1.astype(jnp.bfloat16), w2_ref[li],
                     preferred_element_type=jnp.float32) + b2_ref[li]
        x = _layernorm(x + ff, ln2_g_ref[li], ln2_b_ref[li], eps)

    # ---- pooler: tanh(W * hidden[CLS]); CLS rows picked via one-hot matmul ----
    cls_hidden = jnp.dot(cls_sel_ref[...], x,
                         preferred_element_type=jnp.float32)         # [B, H]
    pooled = jnp.tanh(jnp.dot(cls_hidden.astype(jnp.bfloat16), pooler_w_ref[...],
                              preferred_element_type=jnp.float32) + pooler_b_ref[...])

    # ---- classifier head: ReLU(Linear(pooled)), lane-dense 128-wide output ----
    logits = jnp.dot(pooled.astype(jnp.bfloat16), cls_w_ref[...],
                     preferred_element_type=jnp.float32) + cls_b_ref[...]
    logits_ref[...] = jnp.maximum(logits, 0.0)


# ------------------------------- parameters --------------------------------

def init_params(key):
    def nrm(k, shape):
        return jax.random.normal(k, shape, dtype=jnp.float32) * 0.02

    ks = iter(jax.random.split(key, 16))
    p = {
        "word_emb": nrm(next(ks), (VOCAB, HIDDEN)),
        "pos_emb": nrm(next(ks), (MAX_POS, HIDDEN)),
        "type_emb": nrm(next(ks), (2, HIDDEN)),
        "emb_ln_g": jnp.ones((1, HIDDEN), jnp.float32),
        "emb_ln_b": jnp.zeros((1, HIDDEN), jnp.float32),
        # per-layer weights stacked on a leading layer axis; QKV fused to [H,3H].
        # Matmul weights stored bf16 (halves DMA/VMEM); accumulation stays f32.
        "wqkv": nrm(next(ks), (N_LAYERS, HIDDEN, 3 * HIDDEN)).astype(jnp.bfloat16),
        "bqkv": jnp.zeros((N_LAYERS, 1, 3 * HIDDEN), jnp.float32),
        "wo":   nrm(next(ks), (N_LAYERS, HIDDEN, HIDDEN)).astype(jnp.bfloat16),
        "bo":   jnp.zeros((N_LAYERS, 1, HIDDEN), jnp.float32),
        "ln1_g": jnp.ones((N_LAYERS, 1, HIDDEN), jnp.float32),
        "ln1_b": jnp.zeros((N_LAYERS, 1, HIDDEN), jnp.float32),
        "w1":   nrm(next(ks), (N_LAYERS, HIDDEN, INTERMEDIATE)).astype(jnp.bfloat16),
        "b1":   jnp.zeros((N_LAYERS, 1, INTERMEDIATE), jnp.float32),
        "w2":   nrm(next(ks), (N_LAYERS, INTERMEDIATE, HIDDEN)).astype(jnp.bfloat16),
        "b2":   jnp.zeros((N_LAYERS, 1, HIDDEN), jnp.float32),
        "ln2_g": jnp.ones((N_LAYERS, 1, HIDDEN), jnp.float32),
        "ln2_b": jnp.zeros((N_LAYERS, 1, HIDDEN), jnp.float32),
        "pooler_w": nrm(next(ks), (HIDDEN, HIDDEN)).astype(jnp.bfloat16),
        "pooler_b": jnp.zeros((1, HIDDEN), jnp.float32),
    }
    cls_w = nrm(next(ks), (HIDDEN, N_LABELS)).astype(jnp.bfloat16)
    p["cls_w_pad"] = jnp.zeros((HIDDEN, LOGIT_PAD), jnp.bfloat16).at[:, :N_LABELS].set(cls_w)
    p["cls_b_pad"] = jnp.zeros((1, LOGIT_PAD), jnp.float32)
    return p


# ------------------------------ forward pass --------------------------------

def bert_classifier_forward(params, input_ids, mask):
    """Equivalent of BertClassifier.forward(input_id, mask)."""
    B, S = input_ids.shape
    M = B * S

    # Plain-JAX glue: word-embedding gather + small constant masks.
    word = params["word_emb"][input_ids].reshape(M, HIDDEN)
    pos_type = params["pos_emb"][:S] + params["type_emb"][0][None, :]       # [S, H]

    # Combined additive attention bias [M, M]: 0 within the same batch item on
    # valid key tokens, -10000 for padding keys and cross-batch positions.
    batch_id = jnp.repeat(jnp.arange(B), S)
    same_batch = batch_id[:, None] == batch_id[None, :]
    valid_key = (mask.reshape(M) > 0)[None, :]
    attn_mask = jnp.where(same_batch & valid_key, 0.0, MASK_BIAS).astype(jnp.float32)

    # One-hot selector that pulls the [CLS] row of every batch item.
    cls_sel = jax.nn.one_hot(jnp.arange(B) * S, M, dtype=jnp.float32)        # [B, M]

    kernel = functools.partial(
        _bert_kernel, batch=B, seq=S, n_heads=N_HEADS,
        head_dim=HEAD_DIM, n_layers=N_LAYERS, eps=LN_EPS)

    logits_pad = pl.pallas_call(
        kernel,
        out_shape=jax.ShapeDtypeStruct((B, LOGIT_PAD), jnp.float32),
        compiler_params=pltpu.CompilerParams(vmem_limit_bytes=32 * 1024 * 1024),
    )(word, pos_type, attn_mask, cls_sel,
      params["emb_ln_g"], params["emb_ln_b"],
      params["wqkv"], params["bqkv"], params["wo"], params["bo"],
      params["ln1_g"], params["ln1_b"],
      params["w1"], params["b1"], params["w2"], params["b2"],
      params["ln2_g"], params["ln2_b"],
      params["pooler_w"], params["pooler_b"],
      params["cls_w_pad"], params["cls_b_pad"])

    return logits_pad[:, :N_LABELS]


# ----------------------------------- main -----------------------------------

if __name__ == "__main__":
    key = jax.random.PRNGKey(0)
    k_params, k_ids = jax.random.split(key)

    params = init_params(k_params)

    B, S = 2, 8
    input_ids = jax.random.randint(k_ids, (B, S), 0, VOCAB, dtype=jnp.int32)
    mask = jnp.array([[1, 1, 1, 1, 1, 1, 1, 1],
                      [1, 1, 1, 1, 1, 1, 0, 0]], dtype=jnp.int32)

    fwd = jax.jit(bert_classifier_forward)
    out = jax.block_until_ready(fwd(params, input_ids, mask))

    assert out.shape == (B, N_LABELS)
    assert bool(jnp.all(jnp.isfinite(out)))
    assert bool(jnp.all(out >= 0.0))          # ReLU output is non-negative
    print("KERNEL_OK")
</pallas_src>

<mosaic_0001>
module attributes {stable_mosaic.version = 11 : i64} {
  func.func @_bert_kernel(%arg0: memref<16x128xf32, #tpu.memory_space<vmem>>, %arg1: memref<8x128xf32, #tpu.memory_space<vmem>>, %arg2: memref<16x16xf32, #tpu.memory_space<vmem>>, %arg3: memref<2x16xf32, #tpu.memory_space<vmem>>, %arg4: memref<1x128xf32, #tpu.memory_space<vmem>>, %arg5: memref<1x128xf32, #tpu.memory_space<vmem>>, %arg6: memref<2x128x384xbf16, #tpu.memory_space<vmem>>, %arg7: memref<2x1x384xf32, #tpu.memory_space<vmem>>, %arg8: memref<2x128x128xbf16, #tpu.memory_space<vmem>>, %arg9: memref<2x1x128xf32, #tpu.memory_space<vmem>>, %arg10: memref<2x1x128xf32, #tpu.memory_space<vmem>>, %arg11: memref<2x1x128xf32, #tpu.memory_space<vmem>>, %arg12: memref<2x128x256xbf16, #tpu.memory_space<vmem>>, %arg13: memref<2x1x256xf32, #tpu.memory_space<vmem>>, %arg14: memref<2x256x128xbf16, #tpu.memory_space<vmem>>, %arg15: memref<2x1x128xf32, #tpu.memory_space<vmem>>, %arg16: memref<2x1x128xf32, #tpu.memory_space<vmem>>, %arg17: memref<2x1x128xf32, #tpu.memory_space<vmem>>, %arg18: memref<128x128xbf16, #tpu.memory_space<vmem>>, %arg19: memref<1x128xf32, #tpu.memory_space<vmem>>, %arg20: memref<128x128xbf16, #tpu.memory_space<vmem>>, %arg21: memref<1x128xf32, #tpu.memory_space<vmem>>, %arg22: memref<2x128xf32, #tpu.memory_space<vmem>>) attributes {dimension_semantics = [], scalar_prefetch = 0 : i64, scratch_operands = 0 : i64, tpu.core_type = #tpu.core_type<tc>} {
    %c0 = arith.constant 0 : index
    %c0_0 = arith.constant 0 : index
    %0 = vector.load %arg1[%c0, %c0_0] : memref<8x128xf32, #tpu.memory_space<vmem>>, vector<8x128xf32>
    %c0_1 = arith.constant 0 : index
    %c0_2 = arith.constant 0 : index
    %1 = vector.load %arg0[%c0_1, %c0_2] : memref<16x128xf32, #tpu.memory_space<vmem>>, vector<16x128xf32>
    %2 = tpu.concatenate %0, %0 in 0 : vector<8x128xf32>, vector<8x128xf32> -> vector<16x128xf32>
    %3 = arith.addf %1, %2 : vector<16x128xf32>
    %c0_3 = arith.constant 0 : index
    %c0_4 = arith.constant 0 : index
    %4 = vector.load %arg4[%c0_3, %c0_4] : memref<1x128xf32, #tpu.memory_space<vmem>>, vector<1x128xf32>
    %c0_5 = arith.constant 0 : index
    %c0_6 = arith.constant 0 : index
    %5 = vector.load %arg5[%c0_5, %c0_6] : memref<1x128xf32, #tpu.memory_space<vmem>>, vector<1x128xf32>
    %cst = arith.constant dense<0.000000e+00> : vector<16xf32>
    %6 = vector.multi_reduction <add>, %3, %cst [1] : vector<16x128xf32> to vector<16xf32>
    %7 = vector.shape_cast %6 : vector<16xf32> to vector<16x1xf32>
    %cst_7 = arith.constant 1.280000e+02 : f32
    %8 = vector.broadcast %cst_7 : f32 to vector<16x1xf32>
    %9 = arith.divf %7, %8 : vector<16x1xf32>
    %10 = vector.broadcast %9 : vector<16x1xf32> to vector<16x128xf32>
    %11 = arith.subf %3, %10 : vector<16x128xf32>
    %12 = arith.mulf %11, %11 : vector<16x128xf32>
    %cst_8 = arith.constant dense<0.000000e+00> : vector<16xf32>
    %13 = vector.multi_reduction <add>, %12, %cst_8 [1] : vector<16x128xf32> to vector<16xf32>
    %14 = vector.shape_cast %13 : vector<16xf32> to vector<16x1xf32>
    %cst_9 = arith.constant 1.280000e+02 : f32
    %15 = vector.broadcast %cst_9 : f32 to vector<16x1xf32>
    %16 = arith.divf %14, %15 : vector<16x1xf32>
    %cst_10 = arith.constant 9.99999996E-13 : f32
    %17 = vector.broadcast %cst_10 : f32 to vector<16x1xf32>
    %18 = arith.addf %16, %17 : vector<16x1xf32>
    %19 = math.rsqrt %18 : vector<16x1xf32>
    %20 = vector.broadcast %19 : vector<16x1xf32> to vector<16x128xf32>
    %21 = arith.mulf %11, %20 : vector<16x128xf32>
    %22 = vector.broadcast %4 : vector<1x128xf32> to vector<16x128xf32>
    %23 = arith.mulf %21, %22 : vector<16x128xf32>
    %24 = vector.broadcast %5 : vector<1x128xf32> to vector<16x128xf32>
    %25 = arith.addf %23, %24 : vector<16x128xf32>
    %c0_11 = arith.constant 0 : index
    %c0_12 = arith.constant 0 : index
    %26 = vector.load %arg2[%c0_11, %c0_12] : memref<16x16xf32, #tpu.memory_space<vmem>>, vector<16x16xf32>
    %27 = tpu.iota {dimensions = array<i32: 1>} : vector<1x128xi32>
    %28 = arith.truncf %25 : vector<16x128xf32> to vector<16x128xbf16>
    %c0_13 = arith.constant 0 : index
    %c0_14 = arith.constant 0 : index
    %c0_15 = arith.constant 0 : index
    %29 = vector.load %arg6[%c0_13, %c0_14, %c0_15] : memref<2x128x384xbf16, #tpu.memory_space<vmem>>, vector<1x128x384xbf16>
    %30 = vector.shape_cast %29 : vector<1x128x384xbf16> to vector<128x384xbf16>
    %cst_16 = arith.constant dense<0.000000e+00> : vector<16x384xf32>
    %31 = tpu.matmul %28, %30, %cst_16 {dimension_numbers = #tpu.dot_dimension_numbers<[1], [0], [0], [1], [0, 0, 1, 1], [], []>} : vector<16x128xbf16>, vector<128x384xbf16>, vector<16x384xf32> -> vector<16x384xf32>
    %c0_17 = arith.constant 0 : index
    %c0_18 = arith.constant 0 : index
    %c0_19 = arith.constant 0 : index
    %32 = vector.load %arg7[%c0_17, %c0_18, %c0_19] : memref<2x1x384xf32, #tpu.memory_space<vmem>>, vector<1x1x384xf32>
    %33 = vector.shape_cast %32 : vector<1x1x384xf32> to vector<1x384xf32>
    %34 = vector.broadcast %33 : vector<1x384xf32> to vector<16x384xf32>
    %35 = arith.addf %31, %34 : vector<16x384xf32>
    %36 = vector.extract_strided_slice %35 {offsets = [0, 0], sizes = [16, 128], strides = [1, 1]} : vector<16x384xf32> to vector<16x128xf32>
    %37 = vector.extract_strided_slice %35 {offsets = [0, 128], sizes = [16, 128], strides = [1, 1]} : vector<16x384xf32> to vector<16x128xf32>
    %38 = vector.extract_strided_slice %35 {offsets = [0, 256], sizes = [16, 128], strides = [1, 1]} : vector<16x384xf32> to vector<16x128xf32>
    %cst_20 = arith.constant 0.000000e+00 : f32
    %39 = vector.broadcast %cst_20 : f32 to vector<16x128xf32>
    %c0_i32 = arith.constant 0 : i32
    %40 = vector.broadcast %c0_i32 : i32 to vector<1x128xi32>
    %41 = arith.cmpi sge, %27, %40 : vector<1x128xi32>
    %c64_i32 = arith.constant 64 : i32
    %42 = vector.broadcast %c64_i32 : i32 to vector<1x128xi32>
    %43 = arith.cmpi slt, %27, %42 : vector<1x128xi32>
    %44 = arith.andi %41, %43 : vector<1x128xi1>
    %45 = arith.extui %44 : vector<1x128xi1> to vector<1x128xi32>
    %46 = arith.sitofp %45 : vector<1x128xi32> to vector<1x128xf32>
    %47 = vector.broadcast %46 : vector<1x128xf32> to vector<16x128xf32>
    %48 = arith.mulf %36, %47 : vector<16x128xf32>
    %49 = arith.truncf %48 : vector<16x128xf32> to vector<16x128xbf16>
    %50 = vector.broadcast %46 : vector<1x128xf32> to vector<16x128xf32>
    %51 = arith.mulf %37, %50 : vector<16x128xf32>
    %52 = arith.truncf %51 : vector<16x128xf32> to vector<16x128xbf16>
    %53 = vector.broadcast %46 : vector<1x128xf32> to vector<16x128xf32>
    %54 = arith.mulf %38, %53 : vector<16x128xf32>
    %55 = arith.truncf %54 : vector<16x128xf32> to vector<16x128xbf16>
    %cst_21 = arith.constant dense<0.000000e+00> : vector<16x16xf32>
    %56 = tpu.matmul %49, %52, %cst_21 {dimension_numbers = #tpu.dot_dimension_numbers<[1], [1], [0], [0], [0, 0, 1, 0], [], []>} : vector<16x128xbf16>, vector<16x128xbf16>, vector<16x16xf32> -> vector<16x16xf32>
    %cst_22 = arith.constant 1.250000e-01 : f32
    %57 = vector.broadcast %cst_22 : f32 to vector<16x16xf32>
    %58 = arith.mulf %56, %57 : vector<16x16xf32>
    %59 = arith.addf %58, %26 : vector<16x16xf32>
    %cst_23 = arith.constant dense<0xFF800000> : vector<16xf32>
    %60 = vector.multi_reduction <maximumf>, %59, %cst_23 [1] : vector<16x16xf32> to vector<16xf32>
    %61 = vector.shape_cast %60 : vector<16xf32> to vector<16x1xf32>
    %62 = vector.broadcast %61 : vector<16x1xf32> to vector<16x16xf32>
    %63 = arith.subf %59, %62 : vector<16x16xf32>
    %64 = math.exp %63 : vector<16x16xf32>
    %cst_24 = arith.constant dense<0.000000e+00> : vector<16xf32>
    %65 = vector.multi_reduction <add>, %64, %cst_24 [1] : vector<16x16xf32> to vector<16xf32>
    %66 = vector.shape_cast %65 : vector<16xf32> to vector<16x1xf32>
    %67 = tpu.reciprocal %66 {approx = true} : vector<16x1xf32> -> vector<16x1xf32>
    %68 = vector.broadcast %67 : vector<16x1xf32> to vector<16x16xf32>
    %69 = arith.mulf %64, %68 : vector<16x16xf32>
    %70 = arith.truncf %69 : vector<16x16xf32> to vector<16x16xbf16>
    %cst_25 = arith.constant dense<0.000000e+00> : vector<16x128xf32>
    %71 = tpu.matmul %70, %55, %cst_25 {dimension_numbers = #tpu.dot_dimension_numbers<[1], [0], [0], [1], [0, 0, 1, 1], [], []>} : vector<16x16xbf16>, vector<16x128xbf16>, vector<16x128xf32> -> vector<16x128xf32>
    %72 = arith.addf %39, %71 : vector<16x128xf32>
    %c64_i32_26 = arith.constant 64 : i32
    %73 = vector.broadcast %c64_i32_26 : i32 to vector<1x128xi32>
    %74 = arith.cmpi sge, %27, %73 : vector<1x128xi32>
    %c128_i32 = arith.constant 128 : i32
    %75 = vector.broadcast %c128_i32 : i32 to vector<1x128xi32>
    %76 = arith.cmpi slt, %27, %75 : vector<1x128xi32>
    %77 = arith.andi %74, %76 : vector<1x128xi1>
    %78 = arith.extui %77 : vector<1x128xi1> to vector<1x128xi32>
    %79 = arith.sitofp %78 : vector<1x128xi32> to vector<1x128xf32>
    %80 = vector.broadcast %79 : vector<1x128xf32> to vector<16x128xf32>
    %81 = arith.mulf %36, %80 : vector<16x128xf32>
    %82 = arith.truncf %81 : vector<16x128xf32> to vector<16x128xbf16>
    %83 = vector.broadcast %79 : vector<1x128xf32> to vector<16x128xf32>
    %84 = arith.mulf %37, %83 : vector<16x128xf32>
    %85 = arith.truncf %84 : vector<16x128xf32> to vector<16x128xbf16>
    %86 = vector.broadcast %79 : vector<1x128xf32> to vector<16x128xf32>
    %87 = arith.mulf %38, %86 : vector<16x128xf32>
    %88 = arith.truncf %87 : vector<16x128xf32> to vector<16x128xbf16>
    %cst_27 = arith.constant dense<0.000000e+00> : vector<16x16xf32>
    %89 = tpu.matmul %82, %85, %cst_27 {dimension_numbers = #tpu.dot_dimension_numbers<[1], [1], [0], [0], [0, 0, 1, 0], [], []>} : vector<16x128xbf16>, vector<16x128xbf16>, vector<16x16xf32> -> vector<16x16xf32>
    %cst_28 = arith.constant 1.250000e-01 : f32
    %90 = vector.broadcast %cst_28 : f32 to vector<16x16xf32>
    %91 = arith.mulf %89, %90 : vector<16x16xf32>
    %92 = arith.addf %91, %26 : vector<16x16xf32>
    %cst_29 = arith.constant dense<0xFF800000> : vector<16xf32>
    %93 = vector.multi_reduction <maximumf>, %92, %cst_29 [1] : vector<16x16xf32> to vector<16xf32>
    %94 = vector.shape_cast %93 : vector<16xf32> to vector<16x1xf32>
    %95 = vector.broadcast %94 : vector<16x1xf32> to vector<16x16xf32>
    %96 = arith.subf %92, %95 : vector<16x16xf32>
    %97 = math.exp %96 : vector<16x16xf32>
    %cst_30 = arith.constant dense<0.000000e+00> : vector<16xf32>
    %98 = vector.multi_reduction <add>, %97, %cst_30 [1] : vector<16x16xf32> to vector<16xf32>
    %99 = vector.shape_cast %98 : vector<16xf32> to vector<16x1xf32>
    %100 = tpu.reciprocal %99 {approx = true} : vector<16x1xf32> -> vector<16x1xf32>
    %101 = vector.broadcast %100 : vector<16x1xf32> to vector<16x16xf32>
    %102 = arith.mulf %97, %101 : vector<16x16xf32>
    %103 = arith.truncf %102 : vector<16x16xf32> to vector<16x16xbf16>
    %cst_31 = arith.constant dense<0.000000e+00> : vector<16x128xf32>
    %104 = tpu.matmul %103, %88, %cst_31 {dimension_numbers = #tpu.dot_dimension_numbers<[1], [0], [0], [1], [0, 0, 1, 1], [], []>} : vector<16x16xbf16>, vector<16x128xbf16>, vector<16x128xf32> -> vector<16x128xf32>
    %105 = arith.addf %72, %104 : vector<16x128xf32>
    %106 = arith.truncf %105 : vector<16x128xf32> to vector<16x128xbf16>
    %c0_32 = arith.constant 0 : index
    %c0_33 = arith.constant 0 : index
    %c0_34 = arith.constant 0 : index
    %107 = vector.load %arg8[%c0_32, %c0_33, %c0_34] : memref<2x128x128xbf16, #tpu.memory_space<vmem>>, vector<1x128x128xbf16>
    %108 = vector.shape_cast %107 : vector<1x128x128xbf16> to vector<128x128xbf16>
    %cst_35 = arith.constant dense<0.000000e+00> : vector<16x128xf32>
    %109 = tpu.matmul %106, %108, %cst_35 {dimension_numbers = #tpu.dot_dimension_numbers<[1], [0], [0], [1], [0, 0, 1, 1], [], []>} : vector<16x128xbf16>, vector<128x128xbf16>, vector<16x128xf32> -> vector<16x128xf32>
    %c0_36 = arith.constant 0 : index
    %c0_37 = arith.constant 0 : index
    %c0_38 = arith.constant 0 : index
    %110 = vector.load %arg9[%c0_36, %c0_37, %c0_38] : memref<2x1x128xf32, #tpu.memory_space<vmem>>, vector<1x1x128xf32>
    %111 = vector.shape_cast %110 : vector<1x1x128xf32> to vector<1x128xf32>
    %112 = vector.broadcast %111 : vector<1x128xf32> to vector<16x128xf32>
    %113 = arith.addf %109, %112 : vector<16x128xf32>
    %114 = arith.addf %25, %113 : vector<16x128xf32>
    %c0_39 = arith.constant 0 : index
    %c0_40 = arith.constant 0 : index
    %c0_41 = arith.constant 0 : index
    %115 = vector.load %arg10[%c0_39, %c0_40, %c0_41] : memref<2x1x128xf32, #tpu.memory_space<vmem>>, vector<1x1x128xf32>
    %116 = vector.shape_cast %115 : vector<1x1x128xf32> to vector<1x128xf32>
    %c0_42 = arith.constant 0 : index
    %c0_43 = arith.constant 0 : index
    %c0_44 = arith.constant 0 : index
    %117 = vector.load %arg11[%c0_42, %c0_43, %c0_44] : memref<2x1x128xf32, #tpu.memory_space<vmem>>, vector<1x1x128xf32>
    %118 = vector.shape_cast %117 : vector<1x1x128xf32> to vector<1x128xf32>
    %cst_45 = arith.constant dense<0.000000e+00> : vector<16xf32>
    %119 = vector.multi_reduction <add>, %114, %cst_45 [1] : vector<16x128xf32> to vector<16xf32>
    %120 = vector.shape_cast %119 : vector<16xf32> to vector<16x1xf32>
    %cst_46 = arith.constant 1.280000e+02 : f32
    %121 = vector.broadcast %cst_46 : f32 to vector<16x1xf32>
    %122 = arith.divf %120, %121 : vector<16x1xf32>
    %123 = vector.broadcast %122 : vector<16x1xf32> to vector<16x128xf32>
    %124 = arith.subf %114, %123 : vector<16x128xf32>
    %125 = arith.mulf %124, %124 : vector<16x128xf32>
    %cst_47 = arith.constant dense<0.000000e+00> : vector<16xf32>
    %126 = vector.multi_reduction <add>, %125, %cst_47 [1] : vector<16x128xf32> to vector<16xf32>
    %127 = vector.shape_cast %126 : vector<16xf32> to vector<16x1xf32>
    %cst_48 = arith.constant 1.280000e+02 : f32
    %128 = vector.broadcast %cst_48 : f32 to vector<16x1xf32>
    %129 = arith.divf %127, %128 : vector<16x1xf32>
    %cst_49 = arith.constant 9.99999996E-13 : f32
    %130 = vector.broadcast %cst_49 : f32 to vector<16x1xf32>
    %131 = arith.addf %129, %130 : vector<16x1xf32>
    %132 = math.rsqrt %131 : vector<16x1xf32>
    %133 = vector.broadcast %132 : vector<16x1xf32> to vector<16x128xf32>
    %134 = arith.mulf %124, %133 : vector<16x128xf32>
    %135 = vector.broadcast %116 : vector<1x128xf32> to vector<16x128xf32>
    %136 = arith.mulf %134, %135 : vector<16x128xf32>
    %137 = vector.broadcast %118 : vector<1x128xf32> to vector<16x128xf32>
    %138 = arith.addf %136, %137 : vector<16x128xf32>
    %139 = arith.truncf %138 : vector<16x128xf32> to vector<16x128xbf16>
    %c0_50 = arith.constant 0 : index
    %c0_51 = arith.constant 0 : index
    %c0_52 = arith.constant 0 : index
    %140 = vector.load %arg12[%c0_50, %c0_51, %c0_52] : memref<2x128x256xbf16, #tpu.memory_space<vmem>>, vector<1x128x256xbf16>
    %141 = vector.shape_cast %140 : vector<1x128x256xbf16> to vector<128x256xbf16>
    %cst_53 = arith.constant dense<0.000000e+00> : vector<16x256xf32>
    %142 = tpu.matmul %139, %141, %cst_53 {dimension_numbers = #tpu.dot_dimension_numbers<[1], [0], [0], [1], [0, 0, 1, 1], [], []>} : vector<16x128xbf16>, vector<128x256xbf16>, vector<16x256xf32> -> vector<16x256xf32>
    %c0_54 = arith.constant 0 : index
    %c0_55 = arith.constant 0 : index
    %c0_56 = arith.constant 0 : index
    %143 = vector.load %arg13[%c0_54, %c0_55, %c0_56] : memref<2x1x256xf32, #tpu.memory_space<vmem>>, vector<1x1x256xf32>
    %144 = vector.shape_cast %143 : vector<1x1x256xf32> to vector<1x256xf32>
    %145 = vector.broadcast %144 : vector<1x256xf32> to vector<16x256xf32>
    %146 = arith.addf %142, %145 : vector<16x256xf32>
    %147 = arith.mulf %146, %146 : vector<16x256xf32>
    %148 = arith.mulf %146, %147 : vector<16x256xf32>
    %cst_57 = arith.constant 4.471500e-02 : f32
    %149 = vector.broadcast %cst_57 : f32 to vector<16x256xf32>
    %150 = arith.mulf %149, %148 : vector<16x256xf32>
    %151 = arith.addf %146, %150 : vector<16x256xf32>
    %cst_58 = arith.constant 0.797884583 : f32
    %152 = vector.broadcast %cst_58 : f32 to vector<16x256xf32>
    %153 = arith.mulf %152, %151 : vector<16x256xf32>
    %154 = math.tanh %153 : vector<16x256xf32>
    %cst_59 = arith.constant 1.000000e+00 : f32
    %155 = vector.broadcast %cst_59 : f32 to vector<16x256xf32>
    %156 = arith.addf %155, %154 : vector<16x256xf32>
    %cst_60 = arith.constant 5.000000e-01 : f32
    %157 = vector.broadcast %cst_60 : f32 to vector<16x256xf32>
    %158 = arith.mulf %157, %156 : vector<16x256xf32>
    %159 = arith.mulf %146, %158 : vector<16x256xf32>
    %160 = arith.truncf %159 : vector<16x256xf32> to vector<16x256xbf16>
    %c0_61 = arith.constant 0 : index
    %c0_62 = arith.constant 0 : index
    %c0_63 = arith.constant 0 : index
    %161 = vector.load %arg14[%c0_61, %c0_62, %c0_63] : memref<2x256x128xbf16, #tpu.memory_space<vmem>>, vector<1x256x128xbf16>
    %162 = vector.shape_cast %161 : vector<1x256x128xbf16> to vector<256x128xbf16>
    %cst_64 = arith.constant dense<0.000000e+00> : vector<16x128xf32>
    %163 = tpu.matmul %160, %162, %cst_64 {dimension_numbers = #tpu.dot_dimension_numbers<[1], [0], [0], [1], [0, 0, 1, 1], [], []>} : vector<16x256xbf16>, vector<256x128xbf16>, vector<16x128xf32> -> vector<16x128xf32>
    %c0_65 = arith.constant 0 : index
    %c0_66 = arith.constant 0 : index
    %c0_67 = arith.constant 0 : index
    %164 = vector.load %arg15[%c0_65, %c0_66, %c0_67] : memref<2x1x128xf32, #tpu.memory_space<vmem>>, vector<1x1x128xf32>
    %165 = vector.shape_cast %164 : vector<1x1x128xf32> to vector<1x128xf32>
    %166 = vector.broadcast %165 : vector<1x128xf32> to vector<16x128xf32>
    %167 = arith.addf %163, %166 : vector<16x128xf32>
    %168 = arith.addf %138, %167 : vector<16x128xf32>
    %c0_68 = arith.constant 0 : index
    %c0_69 = arith.constant 0 : index
    %c0_70 = arith.constant 0 : index
    %169 = vector.load %arg16[%c0_68, %c0_69, %c0_70] : memref<2x1x128xf32, #tpu.memory_space<vmem>>, vector<1x1x128xf32>
    %170 = vector.shape_cast %169 : vector<1x1x128xf32> to vector<1x128xf32>
    %c0_71 = arith.constant 0 : index
    %c0_72 = arith.constant 0 : index
    %c0_73 = arith.constant 0 : index
    %171 = vector.load %arg17[%c0_71, %c0_72, %c0_73] : memref<2x1x128xf32, #tpu.memory_space<vmem>>, vector<1x1x128xf32>
    %172 = vector.shape_cast %171 : vector<1x1x128xf32> to vector<1x128xf32>
    %cst_74 = arith.constant dense<0.000000e+00> : vector<16xf32>
    %173 = vector.multi_reduction <add>, %168, %cst_74 [1] : vector<16x128xf32> to vector<16xf32>
    %174 = vector.shape_cast %173 : vector<16xf32> to vector<16x1xf32>
    %cst_75 = arith.constant 1.280000e+02 : f32
    %175 = vector.broadcast %cst_75 : f32 to vector<16x1xf32>
    %176 = arith.divf %174, %175 : vector<16x1xf32>
    %177 = vector.broadcast %176 : vector<16x1xf32> to vector<16x128xf32>
    %178 = arith.subf %168, %177 : vector<16x128xf32>
    %179 = arith.mulf %178, %178 : vector<16x128xf32>
    %cst_76 = arith.constant dense<0.000000e+00> : vector<16xf32>
    %180 = vector.multi_reduction <add>, %179, %cst_76 [1] : vector<16x128xf32> to vector<16xf32>
    %181 = vector.shape_cast %180 : vector<16xf32> to vector<16x1xf32>
    %cst_77 = arith.constant 1.280000e+02 : f32
    %182 = vector.broadcast %cst_77 : f32 to vector<16x1xf32>
    %183 = arith.divf %181, %182 : vector<16x1xf32>
    %cst_78 = arith.constant 9.99999996E-13 : f32
    %184 = vector.broadcast %cst_78 : f32 to vector<16x1xf32>
    %185 = arith.addf %183, %184 : vector<16x1xf32>
    %186 = math.rsqrt %185 : vector<16x1xf32>
    %187 = vector.broadcast %186 : vector<16x1xf32> to vector<16x128xf32>
    %188 = arith.mulf %178, %187 : vector<16x128xf32>
    %189 = vector.broadcast %170 : vector<1x128xf32> to vector<16x128xf32>
    %190 = arith.mulf %188, %189 : vector<16x128xf32>
    %191 = vector.broadcast %172 : vector<1x128xf32> to vector<16x128xf32>
    %192 = arith.addf %190, %191 : vector<16x128xf32>
    %193 = arith.truncf %192 : vector<16x128xf32> to vector<16x128xbf16>
    %c1 = arith.constant 1 : index
    %c0_79 = arith.constant 0 : index
    %c0_80 = arith.constant 0 : index
    %194 = vector.load %arg6[%c1, %c0_79, %c0_80] : memref<2x128x384xbf16, #tpu.memory_space<vmem>>, vector<1x128x384xbf16>
    %195 = vector.shape_cast %194 : vector<1x128x384xbf16> to vector<128x384xbf16>
    %cst_81 = arith.constant dense<0.000000e+00> : vector<16x384xf32>
    %196 = tpu.matmul %193, %195, %cst_81 {dimension_numbers = #tpu.dot_dimension_numbers<[1], [0], [0], [1], [0, 0, 1, 1], [], []>} : vector<16x128xbf16>, vector<128x384xbf16>, vector<16x384xf32> -> vector<16x384xf32>
    %c1_82 = arith.constant 1 : index
    %c0_83 = arith.constant 0 : index
    %c0_84 = arith.constant 0 : index
    %197 = vector.load %arg7[%c1_82, %c0_83, %c0_84] : memref<2x1x384xf32, #tpu.memory_space<vmem>>, vector<1x1x384xf32>
    %198 = vector.shape_cast %197 : vector<1x1x384xf32> to vector<1x384xf32>
    %199 = vector.broadcast %198 : vector<1x384xf32> to vector<16x384xf32>
    %200 = arith.addf %196, %199 : vector<16x384xf32>
    %201 = vector.extract_strided_slice %200 {offsets = [0, 0], sizes = [16, 128], strides = [1, 1]} : vector<16x384xf32> to vector<16x128xf32>
    %202 = vector.extract_strided_slice %200 {offsets = [0, 128], sizes = [16, 128], strides = [1, 1]} : vector<16x384xf32> to vector<16x128xf32>
    %203 = vector.extract_strided_slice %200 {offsets = [0, 256], sizes = [16, 128], strides = [1, 1]} : vector<16x384xf32> to vector<16x128xf32>
    %cst_85 = arith.constant 0.000000e+00 : f32
    %204 = vector.broadcast %cst_85 : f32 to vector<16x128xf32>
    %c0_i32_86 = arith.constant 0 : i32
    %205 = vector.broadcast %c0_i32_86 : i32 to vector<1x128xi32>
    %206 = arith.cmpi sge, %27, %205 : vector<1x128xi32>
    %c64_i32_87 = arith.constant 64 : i32
    %207 = vector.broadcast %c64_i32_87 : i32 to vector<1x128xi32>
    %208 = arith.cmpi slt, %27, %207 : vector<1x128xi32>
    %209 = arith.andi %206, %208 : vector<1x128xi1>
    %210 = arith.extui %209 : vector<1x128xi1> to vector<1x128xi32>
    %211 = arith.sitofp %210 : vector<1x128xi32> to vector<1x128xf32>
    %212 = vector.broadcast %211 : vector<1x128xf32> to vector<16x128xf32>
    %213 = arith.mulf %201, %212 : vector<16x128xf32>
    %214 = arith.truncf %213 : vector<16x128xf32> to vector<16x128xbf16>
    %215 = vector.broadcast %211 : vector<1x128xf32> to vector<16x128xf32>
    %216 = arith.mulf %202, %215 : vector<16x128xf32>
    %217 = arith.truncf %216 : vector<16x128xf32> to vector<16x128xbf16>
    %218 = vector.broadcast %211 : vector<1x128xf32> to vector<16x128xf32>
    %219 = arith.mulf %203, %218 : vector<16x128xf32>
    %220 = arith.truncf %219 : vector<16x128xf32> to vector<16x128xbf16>
    %cst_88 = arith.constant dense<0.000000e+00> : vector<16x16xf32>
    %221 = tpu.matmul %214, %217, %cst_88 {dimension_numbers = #tpu.dot_dimension_numbers<[1], [1], [0], [0], [0, 0, 1, 0], [], []>} : vector<16x128xbf16>, vector<16x128xbf16>, vector<16x16xf32> -> vector<16x16xf32>
    %cst_89 = arith.constant 1.250000e-01 : f32
    %222 = vector.broadcast %cst_89 : f32 to vector<16x16xf32>
    %223 = arith.mulf %221, %222 : vector<16x16xf32>
    %224 = arith.addf %223, %26 : vector<16x16xf32>
    %cst_90 = arith.constant dense<0xFF800000> : vector<16xf32>
    %225 = vector.multi_reduction <maximumf>, %224, %cst_90 [1] : vector<16x16xf32> to vector<16xf32>
    %226 = vector.shape_cast %225 : vector<16xf32> to vector<16x1xf32>
    %227 = vector.broadcast %226 : vector<16x1xf32> to vector<16x16xf32>
    %228 = arith.subf %224, %227 : vector<16x16xf32>
    %229 = math.exp %228 : vector<16x16xf32>
    %cst_91 = arith.constant dense<0.000000e+00> : vector<16xf32>
    %230 = vector.multi_reduction <add>, %229, %cst_91 [1] : vector<16x16xf32> to vector<16xf32>
    %231 = vector.shape_cast %230 : vector<16xf32> to vector<16x1xf32>
    %232 = tpu.reciprocal %231 {approx = true} : vector<16x1xf32> -> vector<16x1xf32>
    %233 = vector.broadcast %232 : vector<16x1xf32> to vector<16x16xf32>
    %234 = arith.mulf %229, %233 : vector<16x16xf32>
    %235 = arith.truncf %234 : vector<16x16xf32> to vector<16x16xbf16>
    %cst_92 = arith.constant dense<0.000000e+00> : vector<16x128xf32>
    %236 = tpu.matmul %235, %220, %cst_92 {dimension_numbers = #tpu.dot_dimension_numbers<[1], [0], [0], [1], [0, 0, 1, 1], [], []>} : vector<16x16xbf16>, vector<16x128xbf16>, vector<16x128xf32> -> vector<16x128xf32>
    %237 = arith.addf %204, %236 : vector<16x128xf32>
    %c64_i32_93 = arith.constant 64 : i32
    %238 = vector.broadcast %c64_i32_93 : i32 to vector<1x128xi32>
    %239 = arith.cmpi sge, %27, %238 : vector<1x128xi32>
    %c128_i32_94 = arith.constant 128 : i32
    %240 = vector.broadcast %c128_i32_94 : i32 to vector<1x128xi32>
    %241 = arith.cmpi slt, %27, %240 : vector<1x128xi32>
    %242 = arith.andi %239, %241 : vector<1x128xi1>
    %243 = arith.extui %242 : vector<1x128xi1> to vector<1x128xi32>
    %244 = arith.sitofp %243 : vector<1x128xi32> to vector<1x128xf32>
    %245 = vector.broadcast %244 : vector<1x128xf32> to vector<16x128xf32>
    %246 = arith.mulf %201, %245 : vector<16x128xf32>
    %247 = arith.truncf %246 : vector<16x128xf32> to vector<16x128xbf16>
    %248 = vector.broadcast %244 : vector<1x128xf32> to vector<16x128xf32>
    %249 = arith.mulf %202, %248 : vector<16x128xf32>
    %250 = arith.truncf %249 : vector<16x128xf32> to vector<16x128xbf16>
    %251 = vector.broadcast %244 : vector<1x128xf32> to vector<16x128xf32>
    %252 = arith.mulf %203, %251 : vector<16x128xf32>
    %253 = arith.truncf %252 : vector<16x128xf32> to vector<16x128xbf16>
    %cst_95 = arith.constant dense<0.000000e+00> : vector<16x16xf32>
    %254 = tpu.matmul %247, %250, %cst_95 {dimension_numbers = #tpu.dot_dimension_numbers<[1], [1], [0], [0], [0, 0, 1, 0], [], []>} : vector<16x128xbf16>, vector<16x128xbf16>, vector<16x16xf32> -> vector<16x16xf32>
    %cst_96 = arith.constant 1.250000e-01 : f32
    %255 = vector.broadcast %cst_96 : f32 to vector<16x16xf32>
    %256 = arith.mulf %254, %255 : vector<16x16xf32>
    %257 = arith.addf %256, %26 : vector<16x16xf32>
    %cst_97 = arith.constant dense<0xFF800000> : vector<16xf32>
    %258 = vector.multi_reduction <maximumf>, %257, %cst_97 [1] : vector<16x16xf32> to vector<16xf32>
    %259 = vector.shape_cast %258 : vector<16xf32> to vector<16x1xf32>
    %260 = vector.broadcast %259 : vector<16x1xf32> to vector<16x16xf32>
    %261 = arith.subf %257, %260 : vector<16x16xf32>
    %262 = math.exp %261 : vector<16x16xf32>
    %cst_98 = arith.constant dense<0.000000e+00> : vector<16xf32>
    %263 = vector.multi_reduction <add>, %262, %cst_98 [1] : vector<16x16xf32> to vector<16xf32>
    %264 = vector.shape_cast %263 : vector<16xf32> to vector<16x1xf32>
    %265 = tpu.reciprocal %264 {approx = true} : vector<16x1xf32> -> vector<16x1xf32>
    %266 = vector.broadcast %265 : vector<16x1xf32> to vector<16x16xf32>
    %267 = arith.mulf %262, %266 : vector<16x16xf32>
    %268 = arith.truncf %267 : vector<16x16xf32> to vector<16x16xbf16>
    %cst_99 = arith.constant dense<0.000000e+00> : vector<16x128xf32>
    %269 = tpu.matmul %268, %253, %cst_99 {dimension_numbers = #tpu.dot_dimension_numbers<[1], [0], [0], [1], [0, 0, 1, 1], [], []>} : vector<16x16xbf16>, vector<16x128xbf16>, vector<16x128xf32> -> vector<16x128xf32>
    %270 = arith.addf %237, %269 : vector<16x128xf32>
    %271 = arith.truncf %270 : vector<16x128xf32> to vector<16x128xbf16>
    %c1_100 = arith.constant 1 : index
    %c0_101 = arith.constant 0 : index
    %c0_102 = arith.constant 0 : index
    %272 = vector.load %arg8[%c1_100, %c0_101, %c0_102] : memref<2x128x128xbf16, #tpu.memory_space<vmem>>, vector<1x128x128xbf16>
    %273 = vector.shape_cast %272 : vector<1x128x128xbf16> to vector<128x128xbf16>
    %cst_103 = arith.constant dense<0.000000e+00> : vector<16x128xf32>
    %274 = tpu.matmul %271, %273, %cst_103 {dimension_numbers = #tpu.dot_dimension_numbers<[1], [0], [0], [1], [0, 0, 1, 1], [], []>} : vector<16x128xbf16>, vector<128x128xbf16>, vector<16x128xf32> -> vector<16x128xf32>
    %c1_104 = arith.constant 1 : index
    %c0_105 = arith.constant 0 : index
    %c0_106 = arith.constant 0 : index
    %275 = vector.load %arg9[%c1_104, %c0_105, %c0_106] : memref<2x1x128xf32, #tpu.memory_space<vmem>>, vector<1x1x128xf32>
    %276 = vector.shape_cast %275 : vector<1x1x128xf32> to vector<1x128xf32>
    %277 = vector.broadcast %276 : vector<1x128xf32> to vector<16x128xf32>
    %278 = arith.addf %274, %277 : vector<16x128xf32>
    %279 = arith.addf %192, %278 : vector<16x128xf32>
    %c1_107 = arith.constant 1 : index
    %c0_108 = arith.constant 0 : index
    %c0_109 = arith.constant 0 : index
    %280 = vector.load %arg10[%c1_107, %c0_108, %c0_109] : memref<2x1x128xf32, #tpu.memory_space<vmem>>, vector<1x1x128xf32>
    %281 = vector.shape_cast %280 : vector<1x1x128xf32> to vector<1x128xf32>
    %c1_110 = arith.constant 1 : index
    %c0_111 = arith.constant 0 : index
    %c0_112 = arith.constant 0 : index
    %282 = vector.load %arg11[%c1_110, %c0_111, %c0_112] : memref<2x1x128xf32, #tpu.memory_space<vmem>>, vector<1x1x128xf32>
    %283 = vector.shape_cast %282 : vector<1x1x128xf32> to vector<1x128xf32>
    %cst_113 = arith.constant dense<0.000000e+00> : vector<16xf32>
    %284 = vector.multi_reduction <add>, %279, %cst_113 [1] : vector<16x128xf32> to vector<16xf32>
    %285 = vector.shape_cast %284 : vector<16xf32> to vector<16x1xf32>
    %cst_114 = arith.constant 1.280000e+02 : f32
    %286 = vector.broadcast %cst_114 : f32 to vector<16x1xf32>
    %287 = arith.divf %285, %286 : vector<16x1xf32>
    %288 = vector.broadcast %287 : vector<16x1xf32> to vector<16x128xf32>
    %289 = arith.subf %279, %288 : vector<16x128xf32>
    %290 = arith.mulf %289, %289 : vector<16x128xf32>
    %cst_115 = arith.constant dense<0.000000e+00> : vector<16xf32>
    %291 = vector.multi_reduction <add>, %290, %cst_115 [1] : vector<16x128xf32> to vector<16xf32>
    %292 = vector.shape_cast %291 : vector<16xf32> to vector<16x1xf32>
    %cst_116 = arith.constant 1.280000e+02 : f32
    %293 = vector.broadcast %cst_116 : f32 to vector<16x1xf32>
    %294 = arith.divf %292, %293 : vector<16x1xf32>
    %cst_117 = arith.constant 9.99999996E-13 : f32
    %295 = vector.broadcast %cst_117 : f32 to vector<16x1xf32>
    %296 = arith.addf %294, %295 : vector<16x1xf32>
    %297 = math.rsqrt %296 : vector<16x1xf32>
    %298 = vector.broadcast %297 : vector<16x1xf32> to vector<16x128xf32>
    %299 = arith.mulf %289, %298 : vector<16x128xf32>
    %300 = vector.broadcast %281 : vector<1x128xf32> to vector<16x128xf32>
    %301 = arith.mulf %299, %300 : vector<16x128xf32>
    %302 = vector.broadcast %283 : vector<1x128xf32> to vector<16x128xf32>
    %303 = arith.addf %301, %302 : vector<16x128xf32>
    %304 = arith.truncf %303 : vector<16x128xf32> to vector<16x128xbf16>
    %c1_118 = arith.constant 1 : index
    %c0_119 = arith.constant 0 : index
    %c0_120 = arith.constant 0 : index
    %305 = vector.load %arg12[%c1_118, %c0_119, %c0_120] : memref<2x128x256xbf16, #tpu.memory_space<vmem>>, vector<1x128x256xbf16>
    %306 = vector.shape_cast %305 : vector<1x128x256xbf16> to vector<128x256xbf16>
    %cst_121 = arith.constant dense<0.000000e+00> : vector<16x256xf32>
    %307 = tpu.matmul %304, %306, %cst_121 {dimension_numbers = #tpu.dot_dimension_numbers<[1], [0], [0], [1], [0, 0, 1, 1], [], []>} : vector<16x128xbf16>, vector<128x256xbf16>, vector<16x256xf32> -> vector<16x256xf32>
    %c1_122 = arith.constant 1 : index
    %c0_123 = arith.constant 0 : index
    %c0_124 = arith.constant 0 : index
    %308 = vector.load %arg13[%c1_122, %c0_123, %c0_124] : memref<2x1x256xf32, #tpu.memory_space<vmem>>, vector<1x1x256xf32>
    %309 = vector.shape_cast %308 : vector<1x1x256xf32> to vector<1x256xf32>
    %310 = vector.broadcast %309 : vector<1x256xf32> to vector<16x256xf32>
    %311 = arith.addf %307, %310 : vector<16x256xf32>
    %312 = arith.mulf %311, %311 : vector<16x256xf32>
    %313 = arith.mulf %311, %312 : vector<16x256xf32>
    %cst_125 = arith.constant 4.471500e-02 : f32
    %314 = vector.broadcast %cst_125 : f32 to vector<16x256xf32>
    %315 = arith.mulf %314, %313 : vector<16x256xf32>
    %316 = arith.addf %311, %315 : vector<16x256xf32>
    %cst_126 = arith.constant 0.797884583 : f32
    %317 = vector.broadcast %cst_126 : f32 to vector<16x256xf32>
    %318 = arith.mulf %317, %316 : vector<16x256xf32>
    %319 = math.tanh %318 : vector<16x256xf32>
    %cst_127 = arith.constant 1.000000e+00 : f32
    %320 = vector.broadcast %cst_127 : f32 to vector<16x256xf32>
    %321 = arith.addf %320, %319 : vector<16x256xf32>
    %cst_128 = arith.constant 5.000000e-01 : f32
    %322 = vector.broadcast %cst_128 : f32 to vector<16x256xf32>
    %323 = arith.mulf %322, %321 : vector<16x256xf32>
    %324 = arith.mulf %311, %323 : vector<16x256xf32>
    %325 = arith.truncf %324 : vector<16x256xf32> to vector<16x256xbf16>
    %c1_129 = arith.constant 1 : index
    %c0_130 = arith.constant 0 : index
    %c0_131 = arith.constant 0 : index
    %326 = vector.load %arg14[%c1_129, %c0_130, %c0_131] : memref<2x256x128xbf16, #tpu.memory_space<vmem>>, vector<1x256x128xbf16>
    %327 = vector.shape_cast %326 : vector<1x256x128xbf16> to vector<256x128xbf16>
    %cst_132 = arith.constant dense<0.000000e+00> : vector<16x128xf32>
    %328 = tpu.matmul %325, %327, %cst_132 {dimension_numbers = #tpu.dot_dimension_numbers<[1], [0], [0], [1], [0, 0, 1, 1], [], []>} : vector<16x256xbf16>, vector<256x128xbf16>, vector<16x128xf32> -> vector<16x128xf32>
    %c1_133 = arith.constant 1 : index
    %c0_134 = arith.constant 0 : index
    %c0_135 = arith.constant 0 : index
    %329 = vector.load %arg15[%c1_133, %c0_134, %c0_135] : memref<2x1x128xf32, #tpu.memory_space<vmem>>, vector<1x1x128xf32>
    %330 = vector.shape_cast %329 : vector<1x1x128xf32> to vector<1x128xf32>
    %331 = vector.broadcast %330 : vector<1x128xf32> to vector<16x128xf32>
    %332 = arith.addf %328, %331 : vector<16x128xf32>
    %333 = arith.addf %303, %332 : vector<16x128xf32>
    %c1_136 = arith.constant 1 : index
    %c0_137 = arith.constant 0 : index
    %c0_138 = arith.constant 0 : index
    %334 = vector.load %arg16[%c1_136, %c0_137, %c0_138] : memref<2x1x128xf32, #tpu.memory_space<vmem>>, vector<1x1x128xf32>
    %335 = vector.shape_cast %334 : vector<1x1x128xf32> to vector<1x128xf32>
    %c1_139 = arith.constant 1 : index
    %c0_140 = arith.constant 0 : index
    %c0_141 = arith.constant 0 : index
    %336 = vector.load %arg17[%c1_139, %c0_140, %c0_141] : memref<2x1x128xf32, #tpu.memory_space<vmem>>, vector<1x1x128xf32>
    %337 = vector.shape_cast %336 : vector<1x1x128xf32> to vector<1x128xf32>
    %cst_142 = arith.constant dense<0.000000e+00> : vector<16xf32>
    %338 = vector.multi_reduction <add>, %333, %cst_142 [1] : vector<16x128xf32> to vector<16xf32>
    %339 = vector.shape_cast %338 : vector<16xf32> to vector<16x1xf32>
    %cst_143 = arith.constant 1.280000e+02 : f32
    %340 = vector.broadcast %cst_143 : f32 to vector<16x1xf32>
    %341 = arith.divf %339, %340 : vector<16x1xf32>
    %342 = vector.broadcast %341 : vector<16x1xf32> to vector<16x128xf32>
    %343 = arith.subf %333, %342 : vector<16x128xf32>
    %344 = arith.mulf %343, %343 : vector<16x128xf32>
    %cst_144 = arith.constant dense<0.000000e+00> : vector<16xf32>
    %345 = vector.multi_reduction <add>, %344, %cst_144 [1] : vector<16x128xf32> to vector<16xf32>
    %346 = vector.shape_cast %345 : vector<16xf32> to vector<16x1xf32>
    %cst_145 = arith.constant 1.280000e+02 : f32
    %347 = vector.broadcast %cst_145 : f32 to vector<16x1xf32>
    %348 = arith.divf %346, %347 : vector<16x1xf32>
    %cst_146 = arith.constant 9.99999996E-13 : f32
    %349 = vector.broadcast %cst_146 : f32 to vector<16x1xf32>
    %350 = arith.addf %348, %349 : vector<16x1xf32>
    %351 = math.rsqrt %350 : vector<16x1xf32>
    %352 = vector.broadcast %351 : vector<16x1xf32> to vector<16x128xf32>
    %353 = arith.mulf %343, %352 : vector<16x128xf32>
    %354 = vector.broadcast %335 : vector<1x128xf32> to vector<16x128xf32>
    %355 = arith.mulf %353, %354 : vector<16x128xf32>
    %356 = vector.broadcast %337 : vector<1x128xf32> to vector<16x128xf32>
    %357 = arith.addf %355, %356 : vector<16x128xf32>
    %c0_147 = arith.constant 0 : index
    %c0_148 = arith.constant 0 : index
    %358 = vector.load %arg3[%c0_147, %c0_148] : memref<2x16xf32, #tpu.memory_space<vmem>>, vector<2x16xf32>
    %cst_149 = arith.constant dense<0.000000e+00> : vector<2x128xf32>
    %359 = tpu.matmul %358, %357, %cst_149 {dimension_numbers = #tpu.dot_dimension_numbers<[1], [0], [0], [1], [0, 0, 1, 1], [], []>} : vector<2x16xf32>, vector<16x128xf32>, vector<2x128xf32> -> vector<2x128xf32>
    %360 = arith.truncf %359 : vector<2x128xf32> to vector<2x128xbf16>
    %c0_150 = arith.constant 0 : index
    %c0_151 = arith.constant 0 : index
    %361 = vector.load %arg18[%c0_150, %c0_151] : memref<128x128xbf16, #tpu.memory_space<vmem>>, vector<128x128xbf16>
    %cst_152 = arith.constant dense<0.000000e+00> : vector<2x128xf32>
    %362 = tpu.matmul %360, %361, %cst_152 {dimension_numbers = #tpu.dot_dimension_numbers<[1], [0], [0], [1], [0, 0, 1, 1], [], []>} : vector<2x128xbf16>, vector<128x128xbf16>, vector<2x128xf32> -> vector<2x128xf32>
    %c0_153 = arith.constant 0 : index
    %c0_154 = arith.constant 0 : index
    %363 = vector.load %arg19[%c0_153, %c0_154] : memref<1x128xf32, #tpu.memory_space<vmem>>, vector<1x128xf32>
    %364 = vector.broadcast %363 : vector<1x128xf32> to vector<2x128xf32>
    %365 = arith.addf %362, %364 : vector<2x128xf32>
    %366 = math.tanh %365 : vector<2x128xf32>
    %367 = arith.truncf %366 : vector<2x128xf32> to vector<2x128xbf16>
    %c0_155 = arith.constant 0 : index
    %c0_156 = arith.constant 0 : index
    %368 = vector.load %arg20[%c0_155, %c0_156] : memref<128x128xbf16, #tpu.memory_space<vmem>>, vector<128x128xbf16>
    %cst_157 = arith.constant dense<0.000000e+00> : vector<2x128xf32>
    %369 = tpu.matmul %367, %368, %cst_157 {dimension_numbers = #tpu.dot_dimension_numbers<[1], [0], [0], [1], [0, 0, 1, 1], [], []>} : vector<2x128xbf16>, vector<128x128xbf16>, vector<2x128xf32> -> vector<2x128xf32>
    %c0_158 = arith.constant 0 : index
    %c0_159 = arith.constant 0 : index
    %370 = vector.load %arg21[%c0_158, %c0_159] : memref<1x128xf32, #tpu.memory_space<vmem>>, vector<1x128xf32>
    %371 = vector.broadcast %370 : vector<1x128xf32> to vector<2x128xf32>
    %372 = arith.addf %369, %371 : vector<2x128xf32>
    %cst_160 = arith.constant 0.000000e+00 : f32
    %373 = vector.broadcast %cst_160 : f32 to vector<2x128xf32>
    %374 = arith.maximumf %372, %373 : vector<2x128xf32>
    %c0_161 = arith.constant 0 : index
    %c0_162 = arith.constant 0 : index
    %375 = vector.load %arg22[%c0_161, %c0_162] : memref<2x128xf32, #tpu.memory_space<vmem>>, vector<2x128xf32>
    tpu.vector_store %arg22[%c0_161, %c0_162], %374 {strides = array<i32>} : memref<2x128xf32, #tpu.memory_space<vmem>>, vector<2x128xf32>,
    return
  }
}

</mosaic_0001>

<llo_original>
// kernel: bert_classifier_forward.1
$region0: #{bert_classifier_forward.1}
  #allocation0 [shape = 'u32[]', space=smem, size = 0x4, offset = 0x4, fixed_abs, tag = 'smem constant byte address 0x4 - core index']
  #allocation1 [shape = 'u32[144,128]{1,0:T(1,128)}', space=vmem, size = 0x12000, scoped, tag = 'internal scratch']
  %s0 = inlined_call_operand.vmem [shape: f32[16,128], index: 0, kind: input, shape index: {}]
  %s1 = inlined_call_operand.vmem [shape: f32[8,128], index: 1, kind: input, shape index: {}]
  %s2 = inlined_call_operand.vmem [shape: f32[16,16], index: 2, kind: input, shape index: {}]
  %s3 = inlined_call_operand.vmem [shape: f32[2,16], index: 3, kind: input, shape index: {}]
  %s4 = inlined_call_operand.vmem [shape: f32[1,128], index: 4, kind: input, shape index: {}]
  %s5 = inlined_call_operand.vmem [shape: f32[1,128], index: 5, kind: input, shape index: {}]
  %s6 = inlined_call_operand.hbm [shape: bf16[2,128,384], index: 6, kind: input, shape index: {}]
  %s7 = inlined_call_operand.vmem [shape: f32[2,1,384], index: 7, kind: input, shape index: {}]
  %s8 = inlined_call_operand.hbm [shape: bf16[2,128,128], index: 8, kind: input, shape index: {}]
  %s9 = inlined_call_operand.vmem [shape: f32[2,1,128], index: 9, kind: input, shape index: {}]
  %s10 = inlined_call_operand.vmem [shape: f32[2,1,128], index: 10, kind: input, shape index: {}]
  %s11 = inlined_call_operand.vmem [shape: f32[2,1,128], index: 11, kind: input, shape index: {}]
  %s12 = inlined_call_operand.vmem [shape: bf16[2,128,256], index: 12, kind: input, shape index: {}]
  %s13 = inlined_call_operand.vmem [shape: f32[2,1,256], index: 13, kind: input, shape index: {}]
  %s14 = inlined_call_operand.hbm [shape: bf16[2,256,128], index: 14, kind: input, shape index: {}]
  %s15 = inlined_call_operand.vmem [shape: f32[2,1,128], index: 15, kind: input, shape index: {}]
  %s16 = inlined_call_operand.vmem [shape: f32[2,1,128], index: 16, kind: input, shape index: {}]
  %s17 = inlined_call_operand.vmem [shape: f32[2,1,128], index: 17, kind: input, shape index: {}]
  %s18 = inlined_call_operand.hbm [shape: bf16[128,128], index: 18, kind: input, shape index: {}]
  %s19 = inlined_call_operand.vmem [shape: f32[1,128], index: 19, kind: input, shape index: {}]
  %s20 = inlined_call_operand.hbm [shape: bf16[128,128], index: 20, kind: input, shape index: {}]
  %s21 = inlined_call_operand.vmem [shape: f32[1,128], index: 21, kind: input, shape index: {}]
  %s22 = inlined_call_operand.hbm [shape: f32[2,128], index: 22, kind: output, shape index: {}]
  %s23 = sld [smem:[#allocation0]]
  $region118: #{bert_classifier_forward.1} parent=0
    _
  %s25 = ssub.s32 1, %s23
  %s26 = scalar_select 0, %s25, %s23
  $region1: #{bert_classifier_forward.1} parent=0
    #allocation2 [shape = 'u8[196608]{0}', space=vmem, size = 0x30000, scoped, tag = 'input window, operand 6, single buffered']
    #allocation3 [shape = 's32[1]{0}', space=sflag, size = 0x4, scoped, tag = 'scoped memory for bert_classifier_forward.1']
    #allocation4 [shape = 's32[1]{0}', space=sflag, size = 0x4, scoped, tag = 'scoped memory for bert_classifier_forward.1']
    #allocation5 [shape = 'u8[65536]{0}', space=vmem, size = 0x10000, scoped, tag = 'input window, operand 8, single buffered']
    #allocation6 [shape = 's32[1]{0}', space=sflag, size = 0x4, scoped, tag = 'scoped memory for bert_classifier_forward.1']
    #allocation7 [shape = 'u8[131072]{0}', space=vmem, size = 0x20000, scoped, tag = 'input window, operand 14, single buffered']
    #allocation8 [shape = 'u8[32768]{0}', space=vmem, size = 0x8000, scoped, tag = 'input window, operand 18, single buffered']
    #allocation9 [shape = 's32[1]{0}', space=sflag, size = 0x4, scoped, tag = 'scoped memory for bert_classifier_forward.1']
    #allocation10 [shape = 'u8[32768]{0}', space=vmem, size = 0x8000, scoped, tag = 'input window, operand 20, single buffered']
    #allocation11 [shape = 'u8[1024]{0}', space=vmem, size = 0x400, scoped, tag = 'output window, operand 0, single buffered']
    %27 = vsyncpa [#allocation3], 0
    %28 = vsyncpa [#allocation6], 0
    %29 = vsyncpa [#allocation9], 0
    %30 = vsyncpa [#allocation4], 0
    // Predicated region
    $region2: #{bert_classifier_forward.1} parent=1 // pred_check
      _
    $region3: #{bert_classifier_forward.1} parent=1 // pred_check_branch
      %32 = sbr.rel (0) target = $region5
    $region4: #{bert_classifier_forward.1} parent=1 // pred_region
      _
    $region5: #{bert_classifier_forward.1} parent=1 // pred_fallthru
      _
    // Predicated region
    $region6: #{bert_classifier_forward.1} parent=1 // pred_check
      _
    $region7: #{bert_classifier_forward.1} parent=1 // pred_check_branch
      %34 = sbr.rel (0) target = $region9
    $region8: #{bert_classifier_forward.1} parent=1 // pred_region
      _
    $region9: #{bert_classifier_forward.1} parent=1 // pred_fallthru
      _
    // Predicated region
    $region10: #{bert_classifier_forward.1} parent=1 // pred_check
      _
    $region11: #{bert_classifier_forward.1} parent=1 // pred_check_branch
      %36 = sbr.rel (0) target = $region13
    $region12: #{bert_classifier_forward.1} parent=1 // pred_region
      _
    $region13: #{bert_classifier_forward.1} parent=1 // pred_fallthru
      _
    // Predicated region
    $region14: #{bert_classifier_forward.1} parent=1 // pred_check
      _
    $region15: #{bert_classifier_forward.1} parent=1 // pred_check_branch
      %38 = sbr.rel (0) target = $region17
    $region16: #{bert_classifier_forward.1} parent=1 // pred_region
      _
    $region17: #{bert_classifier_forward.1} parent=1 // pred_fallthru
      _
    // Predicated region
    $region18: #{bert_classifier_forward.1} parent=1 // pred_check
      _
    $region19: #{bert_classifier_forward.1} parent=1 // pred_check_branch
      %40 = sbr.rel (0) target = $region21
    $region20: #{bert_classifier_forward.1} parent=1 // pred_region
      _
    $region21: #{bert_classifier_forward.1} parent=1 // pred_fallthru
      _
    // Predicated region
    $region22: #{bert_classifier_forward.1} parent=1 // pred_check
      _
    $region23: #{bert_classifier_forward.1} parent=1 // pred_check_branch
      %42 = sbr.rel (0) target = $region25
    $region24: #{bert_classifier_forward.1} parent=1 // pred_region
      _
    $region25: #{bert_classifier_forward.1} parent=1 // pred_fallthru
      _
    // Predicated region
    $region26: #{bert_classifier_forward.1} parent=1 // pred_check
      _
    $region27: #{bert_classifier_forward.1} parent=1 // pred_check_branch
      %44 = sbr.rel (0) target = $region29
    $region28: #{bert_classifier_forward.1} parent=1 // pred_region
      %s46 = ssub.s32 6144, 6144
      %47 = vsyncadd [#allocation3], %s46
      %s48 = sshll.u32 [#allocation2], 4
      %s49 = int_to_ptr.vmem [resolvable:$true] %s48
      %54 = dma.hbm_to_vmem [thread:$0]  %s6, 6144, %s49, [#allocation3], 192, 192, 12
    $region29: #{bert_classifier_forward.1} parent=1 // pred_fallthru
      _
    // Predicated region
    $region30: #{bert_classifier_forward.1} parent=1 // pred_check
      _
    $region31: #{bert_classifier_forward.1} parent=1 // pred_check_branch
      %56 = sbr.rel (0) target = $region33
    $region32: #{bert_classifier_forward.1} parent=1 // pred_region
      _
    $region33: #{bert_classifier_forward.1} parent=1 // pred_fallthru
      _
    // Predicated region
    $region34: #{bert_classifier_forward.1} parent=1 // pred_check
      _
    $region35: #{bert_classifier_forward.1} parent=1 // pred_check_branch
      %58 = sbr.rel (0) target = $region37
    $region36: #{bert_classifier_forward.1} parent=1 // pred_region
      %s60 = ssub.s32 2048, 2048
      %61 = vsyncadd [#allocation6], %s60
      %s62 = sshll.u32 [#allocation5], 4
      %s63 = int_to_ptr.vmem [resolvable:$true] %s62
      %68 = dma.hbm_to_vmem [thread:$0]  %s8, 2048, %s63, [#allocation6], 64, 64, 4
    $region37: #{bert_classifier_forward.1} parent=1 // pred_fallthru
      _
    // Predicated region
    $region38: #{bert_classifier_forward.1} parent=1 // pred_check
      _
    $region39: #{bert_classifier_forward.1} parent=1 // pred_check_branch
      %70 = sbr.rel (0) target = $region41
    $region40: #{bert_classifier_forward.1} parent=1 // pred_region
      _
    $region41: #{bert_classifier_forward.1} parent=1 // pred_fallthru
      _
    // Predicated region
    $region42: #{bert_classifier_forward.1} parent=1 // pred_check
      _
    $region43: #{bert_classifier_forward.1} parent=1 // pred_check_branch
      %72 = sbr.rel (0) target = $region45
    $region44: #{bert_classifier_forward.1} parent=1 // pred_region
      _
    $region45: #{bert_classifier_forward.1} parent=1 // pred_fallthru
      _
    // Predicated region
    $region46: #{bert_classifier_forward.1} parent=1 // pred_check
      _
    $region47: #{bert_classifier_forward.1} parent=1 // pred_check_branch
      %74 = sbr.rel (0) target = $region49
    $region48: #{bert_classifier_forward.1} parent=1 // pred_region
      _
    $region49: #{bert_classifier_forward.1} parent=1 // pred_fallthru
      _
    // Predicated region
    $region50: #{bert_classifier_forward.1} parent=1 // pred_check
      _
    $region51: #{bert_classifier_forward.1} parent=1 // pred_check_branch
      %76 = sbr.rel (0) target = $region53
    $region52: #{bert_classifier_forward.1} parent=1 // pred_region
      _
    $region53: #{bert_classifier_forward.1} parent=1 // pred_fallthru
      _
    // Predicated region
    $region54: #{bert_classifier_forward.1} parent=1 // pred_check
      _
    $region55: #{bert_classifier_forward.1} parent=1 // pred_check_branch
      %78 = sbr.rel (0) target = $region57
    $region56: #{bert_classifier_forward.1} parent=1 // pred_region
      _
    $region57: #{bert_classifier_forward.1} parent=1 // pred_fallthru
      _
    // Predicated region
    $region58: #{bert_classifier_forward.1} parent=1 // pred_check
      _
    $region59: #{bert_classifier_forward.1} parent=1 // pred_check_branch
      %80 = sbr.rel (0) target = $region61
    $region60: #{bert_classifier_forward.1} parent=1 // pred_region
      %s82 = ssub.s32 4096, 4096
      %83 = vsyncadd [#allocation6], %s82
      %s84 = sshll.u32 [#allocation7], 4
      %s85 = int_to_ptr.vmem [resolvable:$true] %s84
      %90 = dma.hbm_to_vmem [thread:$0]  %s14, 4096, %s85, [#allocation6], 64, 64, 4
    $region61: #{bert_classifier_forward.1} parent=1 // pred_fallthru
      _
    // Predicated region
    $region62: #{bert_classifier_forward.1} parent=1 // pred_check
      _
    $region63: #{bert_classifier_forward.1} parent=1 // pred_check_branch
      %92 = sbr.rel (0) target = $region65
    $region64: #{bert_classifier_forward.1} parent=1 // pred_region
      _
    $region65: #{bert_classifier_forward.1} parent=1 // pred_fallthru
      _
    // Predicated region
    $region66: #{bert_classifier_forward.1} parent=1 // pred_check
      _
    $region67: #{bert_classifier_forward.1} parent=1 // pred_check_branch
      %94 = sbr.rel (0) target = $region69
    $region68: #{bert_classifier_forward.1} parent=1 // pred_region
      _
    $region69: #{bert_classifier_forward.1} parent=1 // pred_fallthru
      _
    // Predicated region
    $region70: #{bert_classifier_forward.1} parent=1 // pred_check
      _
    $region71: #{bert_classifier_forward.1} parent=1 // pred_check_branch
      %96 = sbr.rel (0) target = $region73
    $region72: #{bert_classifier_forward.1} parent=1 // pred_region
      _
    $region73: #{bert_classifier_forward.1} parent=1 // pred_fallthru
      _
    // Predicated region
    $region74: #{bert_classifier_forward.1} parent=1 // pred_check
      _
    $region75: #{bert_classifier_forward.1} parent=1 // pred_check_branch
      %98 = sbr.rel (0) target = $region77
    $region76: #{bert_classifier_forward.1} parent=1 // pred_region
      %s100 = ssub.s32 1024, 1024
      %101 = vsyncadd [#allocation9], %s100
      %s102 = sshll.u32 [#allocation8], 4
      %s103 = int_to_ptr.vmem [resolvable:$true] %s102
      %108 = dma.hbm_to_vmem [thread:$0]  %s18, 1024, %s103, [#allocation9], 64, 64, 4
    $region77: #{bert_classifier_forward.1} parent=1 // pred_fallthru
      _
    // Predicated region
    $region78: #{bert_classifier_forward.1} parent=1 // pred_check
      _
    $region79: #{bert_classifier_forward.1} parent=1 // pred_check_branch
      %110 = sbr.rel (0) target = $region81
    $region80: #{bert_classifier_forward.1} parent=1 // pred_region
      _
    $region81: #{bert_classifier_forward.1} parent=1 // pred_fallthru
      _
    // Predicated region
    $region82: #{bert_classifier_forward.1} parent=1 // pred_check
      _
    $region83: #{bert_classifier_forward.1} parent=1 // pred_check_branch
      %112 = sbr.rel (0) target = $region85
    $region84: #{bert_classifier_forward.1} parent=1 // pred_region
      %s114 = ssub.s32 1024, 1024
      %115 = vsyncadd [#allocation9], %s114
      %s116 = sshll.u32 [#allocation10], 4
      %s117 = int_to_ptr.vmem [resolvable:$true] %s116
      %122 = dma.hbm_to_vmem [thread:$0]  %s20, 1024, %s117, [#allocation9], 64, 64, 4
    $region85: #{bert_classifier_forward.1} parent=1 // pred_fallthru
      _
    // Predicated region
    $region86: #{bert_classifier_forward.1} parent=1 // pred_check
      _
    $region87: #{bert_classifier_forward.1} parent=1 // pred_check_branch
      %124 = sbr.rel (0) target = $region89
    $region88: #{bert_classifier_forward.1} parent=1 // pred_region
      _
    $region89: #{bert_classifier_forward.1} parent=1 // pred_fallthru
      _
    // Predicated region
    $region90: #{bert_classifier_forward.1} parent=1 // pred_check
      _
    $region91: #{bert_classifier_forward.1} parent=1 // pred_check_branch
      %126 = sbr.rel (0) target = $region93
    $region92: #{bert_classifier_forward.1} parent=1 // pred_region
      %127 = dma.done [#allocation3], 6144
    $region93: #{bert_classifier_forward.1} parent=1 // pred_fallthru
      _
    // Predicated region
    $region94: #{bert_classifier_forward.1} parent=1 // pred_check
      _
    $region95: #{bert_classifier_forward.1} parent=1 // pred_check_branch
      %129 = sbr.rel (0) target = $region97
    $region96: #{bert_classifier_forward.1} parent=1 // pred_region
      %130 = dma.done [#allocation6], 2048
    $region97: #{bert_classifier_forward.1} parent=1 // pred_fallthru
      _
    // Predicated region
    $region98: #{bert_classifier_forward.1} parent=1 // pred_check
      _
    $region99: #{bert_classifier_forward.1} parent=1 // pred_check_branch
      %132 = sbr.rel (0) target = $region101
    $region100: #{bert_classifier_forward.1} parent=1 // pred_region
      %133 = dma.done [#allocation6], 4096
    $region101: #{bert_classifier_forward.1} parent=1 // pred_fallthru
      _
    // Predicated region
    $region102: #{bert_classifier_forward.1} parent=1 // pred_check
      _
    $region103: #{bert_classifier_forward.1} parent=1 // pred_check_branch
      %135 = sbr.rel (0) target = $region105
    $region104: #{bert_classifier_forward.1} parent=1 // pred_region
      %136 = dma.done [#allocation9], 1024
    $region105: #{bert_classifier_forward.1} parent=1 // pred_fallthru
      _
    // Predicated region
    $region106: #{bert_classifier_forward.1} parent=1 // pred_check
      _
    $region107: #{bert_classifier_forward.1} parent=1 // pred_check_branch
      %138 = sbr.rel (0) target = $region109
    $region108: #{bert_classifier_forward.1} parent=1 // pred_region
      %139 = dma.done [#allocation9], 1024
    $region109: #{bert_classifier_forward.1} parent=1 // pred_fallthru
      _
    %v141 = vld [vmem:[%s1] sm:$0xff]
    %v142 = vld [vmem:[%s0] sm:$0xff]
    %v143 = vld [vmem:[%s0 + $0x8] sm:$0xff]
    %v144 = vadd.f32 %v142, %v141
    %v145 = vadd.f32 %v143, %v141
    %v146 = vld [vmem:[%s4] sm:$0x1]
    %v147 = vld [vmem:[%s5] sm:$0x1]
    %148 = vadd.xlane.f32.xlu0 %v144
    %v149 = vpop.xlane.xlu0 %148
    %150 = vadd.xlane.f32.xlu0 %v145
    %v151 = vpop.xlane.xlu0 %150
    %v152 = vrcp.pop 128.0
    %v153 = vmul.f32 %v149, %v152
    %v154 = vmul.f32 %v151, %v152
    %v155 = vsub.f32 %v144, %v153
    %v156 = vsub.f32 %v145, %v154
    %v157 = vmul.f32 %v155, %v155
    %v158 = vmul.f32 %v156, %v156
    %159 = vadd.xlane.f32.xlu0 %v157
    %v160 = vpop.xlane.xlu0 %159
    %161 = vadd.xlane.f32.xlu0 %v158
    %v162 = vpop.xlane.xlu0 %161
    %v163 = vmul.f32 %v160, %v152
    %v164 = vmul.f32 %v162, %v152
    %v165 = vadd.f32 %v163, 1e-12
    %v166 = vadd.f32 %v164, 1e-12
    %v167 = vrsqrt.pop %v165
    %v168 = vrsqrt.pop %v166
    %v169 = vmul.f32 %v155, %v167
    %v170 = vmul.f32 %v156, %v168
    %v172 = vlaneseq
    %v173 = vshrl.u32 %v172, 7
    %v174 = vsub.s32 0, %v173
    %v175 = vrot.slane %v146, %v174
    %v177 = vmul.f32 %v169, %v175
    %v178 = vmul.f32 %v170, %v175
    %v180 = vlaneseq
    %v181 = vshrl.u32 %v180, 7
    %v182 = vsub.s32 0, %v181
    %v183 = vrot.slane %v147, %v182
    %v185 = vadd.f32 %v177, %v183
    %v186 = vadd.f32 %v178, %v183
    %v187 = vld [vmem:[%s2] sm:$0xff]
    %v188 = vld [vmem:[%s2 + $0x8] sm:$0xff]
    %v189 = vlaneseq
    %v190 = vand.u32 %v189, 127
    %v191 = vpack.c.bf16 %v186, %v185
    %v192 = vld [vmem:[#allocation2] sm:$0xff]
    %v193 = vld [vmem:[#allocation2 + $0x8] sm:$0xf]
    %v194 = vld [vmem:[#allocation2 + $0xc] sm:$0xff]
    %v195 = vld [vmem:[#allocation2 + $0x14] sm:$0xf]
    %v196 = vld [vmem:[#allocation2 + $0x18] sm:$0xff]
    %v197 = vld [vmem:[#allocation2 + $0x20] sm:$0xf]
    %v198 = vld [vmem:[#allocation2 + $0x24] sm:$0xff]
    %v199 = vld [vmem:[#allocation2 + $0x2c] sm:$0xf]
    %v200 = vld [vmem:[#allocation2 + $0x30] sm:$0xff]
    %v201 = vld [vmem:[#allocation2 + $0x38] sm:$0xf]
    %v202 = vld [vmem:[#allocation2 + $0x3c] sm:$0xff]
    %v203 = vld [vmem:[#allocation2 + $0x44] sm:$0xf]
    %v204 = vld [vmem:[#allocation2 + $0x48] sm:$0xff]
    %v205 = vld [vmem:[#allocation2 + $0x50] sm:$0xf]
    %v206 = vld [vmem:[#allocation2 + $0x54] sm:$0xff]
    %v207 = vld [vmem:[#allocation2 + $0x5c] sm:$0xf]
    %v208 = vld [vmem:[#allocation2 + $0x60] sm:$0xff]
    %v209 = vld [vmem:[#allocation2 + $0x68] sm:$0xf]
    %v210 = vld [vmem:[#allocation2 + $0x6c] sm:$0xff]
    %v211 = vld [vmem:[#allocation2 + $0x74] sm:$0xf]
    %v212 = vld [vmem:[#allocation2 + $0x78] sm:$0xff]
    %v213 = vld [vmem:[#allocation2 + $0x80] sm:$0xf]
    %v214 = vld [vmem:[#allocation2 + $0x84] sm:$0xff]
    %v215 = vld [vmem:[#allocation2 + $0x8c] sm:$0xf]
    %v216 = vld [vmem:[#allocation2 + $0x90] sm:$0xff]
    %v217 = vld [vmem:[#allocation2 + $0x98] sm:$0xf]
    %v218 = vld [vmem:[#allocation2 + $0x9c] sm:$0xff]
    %v219 = vld [vmem:[#allocation2 + $0xa4] sm:$0xf]
    %v220 = vld [vmem:[#allocation2 + $0xa8] sm:$0xff]
    %v221 = vld [vmem:[#allocation2 + $0xb0] sm:$0xf]
    %v222 = vld [vmem:[#allocation2 + $0xb4] sm:$0xff]
    %v223 = vld [vmem:[#allocation2 + $0xbc] sm:$0xf]
    %v224 = vld [vmem:[%s7] sm:$0x7]
    %v226 = vlaneseq
    %v227 = vshrl.u32 %v226, 7
    %v228 = vsub.s32 0, %v227
    %v229 = vrot.slane %v224, %v228
    %v230 = vlaneseq
    %v231 = vshrl.u32 %v230, 7
    %v232 = vsub.s32 1, %v231
    %v233 = vrot.slane %v224, %v232
    %v234 = vlaneseq
    %v235 = vshrl.u32 %v234, 7
    %v236 = vsub.s32 2, %v235
    %v237 = vrot.slane %v224, %v236
    %v273 = vunpack.c.l.b16 %v192
    %v274 = vunpack.c.h.b16 %v192
    %v275 = vunpack.c.l.b16 %v193
    %v276 = vunpack.c.l.b16 %v194
    %v277 = vunpack.c.h.b16 %v194
    %v278 = vunpack.c.l.b16 %v195
    %v279 = vunpack.c.l.b16 %v196
    %v280 = vunpack.c.h.b16 %v196
    %v281 = vunpack.c.l.b16 %v197
    %v282 = vunpack.c.l.b16 %v198
    %v283 = vunpack.c.h.b16 %v198
    %v284 = vunpack.c.l.b16 %v199
    %v285 = vunpack.c.l.b16 %v200
    %v286 = vunpack.c.h.b16 %v200
    %v287 = vunpack.c.l.b16 %v201
    %v288 = vunpack.c.l.b16 %v202
    %v289 = vunpack.c.h.b16 %v202
    %v290 = vunpack.c.l.b16 %v203
    %v291 = vunpack.c.l.b16 %v204
    %v292 = vunpack.c.h.b16 %v204
    %v293 = vunpack.c.l.b16 %v205
    %v294 = vunpack.c.l.b16 %v206
    %v295 = vunpack.c.h.b16 %v206
    %v296 = vunpack.c.l.b16 %v207
    %v297 = vunpack.c.l.b16 %v208
    %v298 = vunpack.c.h.b16 %v208
    %v299 = vunpack.c.l.b16 %v209
    %v300 = vunpack.c.l.b16 %v210
    %v301 = vunpack.c.h.b16 %v210
    %v302 = vunpack.c.l.b16 %v211
    %v303 = vunpack.c.l.b16 %v212
    %v304 = vunpack.c.h.b16 %v212
    %v305 = vunpack.c.l.b16 %v213
    %v306 = vunpack.c.l.b16 %v214
    %v307 = vunpack.c.h.b16 %v214
    %v308 = vunpack.c.l.b16 %v215
    %v309 = vunpack.c.l.b16 %v216
    %v310 = vunpack.c.h.b16 %v216
    %v311 = vunpack.c.l.b16 %v217
    %v312 = vunpack.c.l.b16 %v218
    %v313 = vunpack.c.h.b16 %v218
    %v314 = vunpack.c.l.b16 %v219
    %v315 = vunpack.c.l.b16 %v220
    %v316 = vunpack.c.h.b16 %v220
    %v317 = vunpack.c.l.b16 %v221
    %v318 = vunpack.c.l.b16 %v222
    %v319 = vunpack.c.h.b16 %v222
    %v320 = vunpack.c.l.b16 %v223
    %v321 = vpack.c.b16 %v276, %v273
    %v322 = vpack.c.b16 %v277, %v274
    %v323 = vpack.c.b16 %v278, %v275
    %v324 = vpack.c.b16 %v282, %v279
    %v325 = vpack.c.b16 %v283, %v280
    %v326 = vpack.c.b16 %v284, %v281
    %v327 = vpack.c.b16 %v288, %v285
    %v328 = vpack.c.b16 %v289, %v286
    %v329 = vpack.c.b16 %v290, %v287
    %v330 = vpack.c.b16 %v294, %v291
    %v331 = vpack.c.b16 %v295, %v292
    %v332 = vpack.c.b16 %v296, %v293
    %v333 = vpack.c.b16 %v300, %v297
    %v334 = vpack.c.b16 %v301, %v298
    %v335 = vpack.c.b16 %v302, %v299
    %v336 = vpack.c.b16 %v306, %v303
    %v337 = vpack.c.b16 %v307, %v304
    %v338 = vpack.c.b16 %v308, %v305
    %v339 = vpack.c.b16 %v312, %v309
    %v340 = vpack.c.b16 %v313, %v310
    %v341 = vpack.c.b16 %v314, %v311
    %v342 = vpack.c.b16 %v318, %v315
    %v343 = vpack.c.b16 %v319, %v316
    %v344 = vpack.c.b16 %v320, %v317
    %369 = vmatprep.subr.bf16.mxu0 %v322
    %370 = vmatpush1.bf16.msra.mxu0 %v321
    %371 = vmatprep.subr.bf16.mxu0 %v325
    %372 = vmatpush1.bf16.msra.mxu0 %v324
    %373 = vmatprep.subr.bf16.mxu0 %v328
    %374 = vmatpush1.bf16.msra.mxu0 %v327
    %375 = vmatprep.subr.bf16.mxu0 %v331
    %376 = vmatpush1.bf16.msra.mxu0 %v330
    %377 = vmatprep.subr.bf16.mxu0 %v334
    %378 = vmatpush1.bf16.msra.mxu0 %v333
    %379 = vmatprep.subr.bf16.mxu0 %v337
    %380 = vmatpush1.bf16.msra.mxu0 %v336
    %381 = vmatprep.subr.bf16.mxu0 %v340
    %382 = vmatpush1.bf16.msra.mxu0 %v339
    %383 = vmatprep.subr.bf16.mxu0 %v343
    %384 = vmatpush1.bf16.msra.mxu0 %v342
    %385 = vmatprep.subr.bf16.mxu0 0
    %386 = vmatpush1.bf16.msra.mxu0 0
    %387 = vmatprep.subr.bf16.mxu0 0
    %388 = vmatpush1.bf16.msra.mxu0 0
    %389 = vmatprep.subr.bf16.mxu0 0
    %390 = vmatpush1.bf16.msra.mxu0 0
    %391 = vmatprep.subr.bf16.mxu0 0
    %392 = vmatpush1.bf16.msra.mxu0 0
    %393 = vmatprep.subr.bf16.mxu0 0
    %394 = vmatpush1.bf16.msra.mxu0 0
    %395 = vmatprep.subr.bf16.mxu0 0
    %396 = vmatpush1.bf16.msra.mxu0 0
    %397 = vmatprep.subr.bf16.mxu0 0
    %398 = vmatpush1.bf16.msra.mxu0 0
    %399 = vmatprep.subr.bf16.mxu0 0
    %400 = vmatpush1.bf16.msra.mxu0 0
    %401 = vmatprep.mubr.bf16.mxu0 0
    %402 = vmatmul.mubr.bf16.gmra.mrb[0].mxu0 %v191
    %v403 = vpop.f32.mrb[0].mxu0
    %v404 = vadd.f32 %v229, %v403
    %v405 = vpop.f32.mrb[0].mxu0
    %v406 = vadd.f32 %v233, %v405
    %v407 = vpop.f32.mrb[0].mxu0
    %v408 = vadd.f32 %v229, %v407
    %v409 = vpop.f32.mrb[0].mxu0
    %v410 = vadd.f32 %v233, %v409
    %411 = vdwg.mxu0
    %412 = vmatprep.subr.bf16.mxu0 0
    %413 = vmatpush1.bf16.msra.mxu0 %v323
    %414 = vmatprep.subr.bf16.mxu0 0
    %415 = vmatpush1.bf16.msra.mxu0 %v326
    %416 = vmatprep.subr.bf16.mxu0 0
    %417 = vmatpush1.bf16.msra.mxu0 %v329
    %418 = vmatprep.subr.bf16.mxu0 0
    %419 = vmatpush1.bf16.msra.mxu0 %v332
    %420 = vmatprep.subr.bf16.mxu0 0
    %421 = vmatpush1.bf16.msra.mxu0 %v335
    %422 = vmatprep.subr.bf16.mxu0 0
    %423 = vmatpush1.bf16.msra.mxu0 %v338
    %424 = vmatprep.subr.bf16.mxu0 0
    %425 = vmatpush1.bf16.msra.mxu0 %v341
    %426 = vmatprep.subr.bf16.mxu0 0
    %427 = vmatpush1.bf16.msra.mxu0 %v344
    %428 = vmatprep.subr.bf16.mxu0 0
    %429 = vmatpush1.bf16.msra.mxu0 0
    %430 = vmatprep.subr.bf16.mxu0 0
    %431 = vmatpush1.bf16.msra.mxu0 0
    %432 = vmatprep.subr.bf16.mxu0 0
    %433 = vmatpush1.bf16.msra.mxu0 0
    %434 = vmatprep.subr.bf16.mxu0 0
    %435 = vmatpush1.bf16.msra.mxu0 0
    %436 = vmatprep.subr.bf16.mxu0 0
    %437 = vmatpush1.bf16.msra.mxu0 0
    %438 = vmatprep.subr.bf16.mxu0 0
    %439 = vmatpush1.bf16.msra.mxu0 0
    %440 = vmatprep.subr.bf16.mxu0 0
    %441 = vmatpush1.bf16.msra.mxu0 0
    %442 = vmatprep.subr.bf16.mxu0 0
    %443 = vmatpush1.bf16.msra.mxu0 0
    %444 = vmatprep.mubr.bf16.mxu0 0
    %445 = vmatmul.mubr.bf16.gmra.mrb[0].mxu0 %v191
    %v446 = vpop.f32.mrb[0].mxu0
    %v447 = vadd.f32 %v237, %v446
    %v448 = vpop.f32.mrb[0].mxu0
    %v449 = vpop.f32.mrb[0].mxu0
    %v450 = vadd.f32 %v237, %v449
    %v451 = vpop.f32.mrb[0].mxu0
    %452 = vdwg.mxu0
    %vm453 = vcmp.ge.s32.totalorder %v190, 0
    %vm454 = vcmp.lt.s32.totalorder %v190, 64
    %vm455 = vmand %vm453, %vm454
    %v456 = vsel %vm455, 1, 0
    %v457 = vcvt.s32.f32 %v456
    %v458 = vmul.f32 %v404, %v457
    %v459 = vmul.f32 %v408, %v457
    %v460 = vpack.c.bf16 %v459, %v458
    %v461 = vmul.f32 %v406, %v457
    %v462 = vmul.f32 %v410, %v457
    %v463 = vpack.c.bf16 %v462, %v461
    %v464 = vmul.f32 %v447, %v457
    %v465 = vmul.f32 %v450, %v457
    %v466 = vpack.c.bf16 %v465, %v464
    %467 = vmatprep.subr.bf16.mxu0 0
    %468 = vmatpush1.bf16.xpose.msra.mxu0 %v463
    %469 = vmatprep.subr.bf16.mxu0 0
    %470 = vmatpush1.bf16.xpose.msra.mxu0 0
    %471 = vmatprep.subr.bf16.mxu0 0
    %472 = vmatpush1.bf16.xpose.msra.mxu0 0
    %473 = vmatprep.subr.bf16.mxu0 0
    %474 = vmatpush1.bf16.xpose.msra.mxu0 0
    %475 = vmatprep.subr.bf16.mxu0 0
    %476 = vmatpush1.bf16.xpose.msra.mxu0 0
    %477 = vmatprep.subr.bf16.mxu0 0
    %478 = vmatpush1.bf16.xpose.msra.mxu0 0
    %479 = vmatprep.subr.bf16.mxu0 0
    %480 = vmatpush1.bf16.xpose.msra.mxu0 0
    %481 = vmatprep.subr.bf16.mxu0 0
    %482 = vmatpush1.bf16.xpose.msra.mxu0 0
    %483 = vmatprep.subr.bf16.mxu0 0
    %484 = vmatpush1.bf16.xpose.msra.mxu0 0
    %485 = vmatprep.subr.bf16.mxu0 0
    %486 = vmatpush1.bf16.xpose.msra.mxu0 0
    %487 = vmatprep.subr.bf16.mxu0 0
    %488 = vmatpush1.bf16.xpose.msra.mxu0 0
    %489 = vmatprep.subr.bf16.mxu0 0
    %490 = vmatpush1.bf16.xpose.msra.mxu0 0
    %491 = vmatprep.subr.bf16.mxu0 0
    %492 = vmatpush1.bf16.xpose.msra.mxu0 0
    %493 = vmatprep.subr.bf16.mxu0 0
    %494 = vmatpush1.bf16.xpose.msra.mxu0 0
    %495 = vmatprep.subr.bf16.mxu0 0
    %496 = vmatpush1.bf16.xpose.msra.mxu0 0
    %497 = vmatprep.subr.bf16.mxu0 0
    %498 = vmatpush1.bf16.xpose.msra.mxu0 0
    %499 = vmatprep.mubr.bf16.mxu0 0
    %500 = vmatmul.mubr.bf16.gmra.mrb[0].mxu0 %v460
    %v501 = vpop.f32.mrb[0].mxu0
    %v502 = vadd.f32 0.0, %v501
    %v503 = vpop.f32.mrb[0].mxu0
    %v504 = vpop.f32.mrb[0].mxu0
    %v505 = vadd.f32 0.0, %v504
    %v506 = vpop.f32.mrb[0].mxu0
    %507 = vdwg.mxu0
    %v508 = vmul.f32 %v502, 0.125
    %v509 = vmul.f32 %v505, 0.125
    %v510 = vadd.f32 %v508, %v187
    %v511 = vadd.f32 %v509, %v188
    %vm512 = vcmask 130048
    %v513 = vsel %vm512, %v510, -inf
    %514 = vmax.xlane.f32.xlu0 %v513
    %v515 = vpop.xlane.xlu0 %514
    %v516 = vsel %vm512, %v511, -inf
    %517 = vmax.xlane.f32.xlu0 %v516
    %v518 = vpop.xlane.xlu0 %517
    %v519 = vsub.f32 %v510, %v515
    %v520 = vsub.f32 %v511, %v518
    %v521 = vmul.f32 %v519, 1.442695
    %v522 = vpow.pop %v521
    %v523 = vmul.f32 %v520, 1.442695
    %v524 = vpow.pop %v523
    %v525 = vsel %vm512, %v522, 0.0
    %526 = vadd.xlane.f32.xlu0 %v525
    %v527 = vpop.xlane.xlu0 %526
    %v528 = vsel %vm512, %v524, 0.0
    %529 = vadd.xlane.f32.xlu0 %v528
    %v530 = vpop.xlane.xlu0 %529
    %v531 = vrcp.pop %v527
    %v532 = vrcp.pop %v530
    %v533 = vmul.f32 %v522, %v531
    %v534 = vmul.f32 %v524, %v532
    %v535 = vpack.c.bf16 %v534, %v533
    %vm536 = vcmp.ge.s32.totalorder %v190, 64
    %vm537 = vcmp.lt.s32.totalorder %v190, 128
    %vm538 = vmand %vm536, %vm537
    %v539 = vsel %vm538, 1, 0
    %v540 = vcvt.s32.f32 %v539
    %v541 = vmul.f32 %v404, %v540
    %v542 = vmul.f32 %v408, %v540
    %v543 = vpack.c.bf16 %v542, %v541
    %v544 = vmul.f32 %v406, %v540
    %v545 = vmul.f32 %v410, %v540
    %v546 = vpack.c.bf16 %v545, %v544
    %v547 = vmul.f32 %v447, %v540
    %v548 = vmul.f32 %v450, %v540
    %v549 = vpack.c.bf16 %v548, %v547
    %550 = vmatprep.subr.bf16.mxu0 0
    %551 = vmatpush1.bf16.xpose.msra.mxu0 %v546
    %552 = vmatprep.subr.bf16.mxu0 0
    %553 = vmatpush1.bf16.xpose.msra.mxu0 0
    %554 = vmatprep.subr.bf16.mxu0 0
    %555 = vmatpush1.bf16.xpose.msra.mxu0 0
    %556 = vmatprep.subr.bf16.mxu0 0
    %557 = vmatpush1.bf16.xpose.msra.mxu0 0
    %558 = vmatprep.subr.bf16.mxu0 0
    %559 = vmatpush1.bf16.xpose.msra.mxu0 0
    %560 = vmatprep.subr.bf16.mxu0 0
    %561 = vmatpush1.bf16.xpose.msra.mxu0 0
    %562 = vmatprep.subr.bf16.mxu0 0
    %563 = vmatpush1.bf16.xpose.msra.mxu0 0
    %564 = vmatprep.subr.bf16.mxu0 0
    %565 = vmatpush1.bf16.xpose.msra.mxu0 0
    %566 = vmatprep.subr.bf16.mxu0 0
    %567 = vmatpush1.bf16.xpose.msra.mxu0 0
    %568 = vmatprep.subr.bf16.mxu0 0
    %569 = vmatpush1.bf16.xpose.msra.mxu0 0
    %570 = vmatprep.subr.bf16.mxu0 0
    %571 = vmatpush1.bf16.xpose.msra.mxu0 0
    %572 = vmatprep.subr.bf16.mxu0 0
    %573 = vmatpush1.bf16.xpose.msra.mxu0 0
    %574 = vmatprep.subr.bf16.mxu0 0
    %575 = vmatpush1.bf16.xpose.msra.mxu0 0
    %576 = vmatprep.subr.bf16.mxu0 0
    %577 = vmatpush1.bf16.xpose.msra.mxu0 0
    %578 = vmatprep.subr.bf16.mxu0 0
    %579 = vmatpush1.bf16.xpose.msra.mxu0 0
    %580 = vmatprep.subr.bf16.mxu0 0
    %581 = vmatpush1.bf16.xpose.msra.mxu0 0
    %582 = vmatprep.mubr.bf16.mxu0 0
    %583 = vmatmul.mubr.bf16.gmra.mrb[0].mxu0 %v543
    %v584 = vpop.f32.mrb[0].mxu0
    %v585 = vadd.f32 0.0, %v584
    %v586 = vpop.f32.mrb[0].mxu0
    %v587 = vpop.f32.mrb[0].mxu0
    %v588 = vadd.f32 0.0, %v587
    %v589 = vpop.f32.mrb[0].mxu0
    %590 = vdwg.mxu0
    %v591 = vmul.f32 %v585, 0.125
    %v592 = vmul.f32 %v588, 0.125
    %v593 = vadd.f32 %v591, %v187
    %v594 = vadd.f32 %v592, %v188
    %v595 = vsel %vm512, %v593, -inf
    %596 = vmax.xlane.f32.xlu0 %v595
    %v597 = vpop.xlane.xlu0 %596
    %v598 = vsel %vm512, %v594, -inf
    %599 = vmax.xlane.f32.xlu0 %v598
    %v600 = vpop.xlane.xlu0 %599
    %v601 = vsub.f32 %v593, %v597
    %v602 = vsub.f32 %v594, %v600
    %v603 = vmul.f32 %v601, 1.442695
    %v604 = vpow.pop %v603
    %v605 = vmul.f32 %v602, 1.442695
    %v606 = vpow.pop %v605
    %v607 = vsel %vm512, %v604, 0.0
    %608 = vadd.xlane.f32.xlu0 %v607
    %v609 = vpop.xlane.xlu0 %608
    %v610 = vsel %vm512, %v606, 0.0
    %611 = vadd.xlane.f32.xlu0 %v610
    %v612 = vpop.xlane.xlu0 %611
    %v613 = vrcp.pop %v609
    %v614 = vrcp.pop %v612
    %v615 = vmul.f32 %v604, %v613
    %v616 = vmul.f32 %v606, %v614
    %v617 = vpack.c.bf16 %v616, %v615
    %v619 = vsel %vm512, %v617, 0
    %621 = vmatprep.subr.bf16.mxu0 0
    %622 = vmatpush1.bf16.msra.mxu0 %v549
    %623 = vmatprep.subr.bf16.mxu0 0
    %624 = vmatpush1.bf16.msra.mxu0 0
    %625 = vmatprep.subr.bf16.mxu0 0
    %626 = vmatpush1.bf16.msra.mxu0 0
    %627 = vmatprep.subr.bf16.mxu0 0
    %628 = vmatpush1.bf16.msra.mxu0 0
    %629 = vmatprep.subr.bf16.mxu0 0
    %630 = vmatpush1.bf16.msra.mxu0 0
    %631 = vmatprep.subr.bf16.mxu0 0
    %632 = vmatpush1.bf16.msra.mxu0 0
    %633 = vmatprep.subr.bf16.mxu0 0
    %634 = vmatpush1.bf16.msra.mxu0 0
    %635 = vmatprep.subr.bf16.mxu0 0
    %636 = vmatpush1.bf16.msra.mxu0 0
    %637 = vmatprep.subr.bf16.mxu0 0
    %638 = vmatpush1.bf16.msra.mxu0 0
    %639 = vmatprep.subr.bf16.mxu0 0
    %640 = vmatpush1.bf16.msra.mxu0 0
    %641 = vmatprep.subr.bf16.mxu0 0
    %642 = vmatpush1.bf16.msra.mxu0 0
    %643 = vmatprep.subr.bf16.mxu0 0
    %644 = vmatpush1.bf16.msra.mxu0 0
    %645 = vmatprep.subr.bf16.mxu0 0
    %646 = vmatpush1.bf16.msra.mxu0 0
    %647 = vmatprep.subr.bf16.mxu0 0
    %648 = vmatpush1.bf16.msra.mxu0 0
    %649 = vmatprep.subr.bf16.mxu0 0
    %650 = vmatpush1.bf16.msra.mxu0 0
    %651 = vmatprep.subr.bf16.mxu0 0
    %652 = vmatpush1.bf16.msra.mxu0 0
    %653 = vmatprep.mubr.bf16.mxu0 0
    %654 = vmatmul.mubr.bf16.gmra.mrb[0].mxu0 %v619
    %v655 = vpop.f32.mrb[0].mxu0
    %v656 = vadd.f32 0.0, %v655
    %v657 = vpop.f32.mrb[0].mxu0
    %v658 = vpop.f32.mrb[0].mxu0
    %v659 = vadd.f32 0.0, %v658
    %v660 = vpop.f32.mrb[0].mxu0
    %661 = vdwg.mxu0
    %v663 = vsel %vm512, %v535, 0
    %665 = vmatprep.subr.bf16.mxu0 0
    %666 = vmatpush1.bf16.msra.mxu0 %v466
    %667 = vmatprep.subr.bf16.mxu0 0
    %668 = vmatpush1.bf16.msra.mxu0 0
    %669 = vmatprep.subr.bf16.mxu0 0
    %670 = vmatpush1.bf16.msra.mxu0 0
    %671 = vmatprep.subr.bf16.mxu0 0
    %672 = vmatpush1.bf16.msra.mxu0 0
    %673 = vmatprep.subr.bf16.mxu0 0
    %674 = vmatpush1.bf16.msra.mxu0 0
    %675 = vmatprep.subr.bf16.mxu0 0
    %676 = vmatpush1.bf16.msra.mxu0 0
    %677 = vmatprep.subr.bf16.mxu0 0
    %678 = vmatpush1.bf16.msra.mxu0 0
    %679 = vmatprep.subr.bf16.mxu0 0
    %680 = vmatpush1.bf16.msra.mxu0 0
    %681 = vmatprep.subr.bf16.mxu0 0
    %682 = vmatpush1.bf16.msra.mxu0 0
    %683 = vmatprep.subr.bf16.mxu0 0
    %684 = vmatpush1.bf16.msra.mxu0 0
    %685 = vmatprep.subr.bf16.mxu0 0
    %686 = vmatpush1.bf16.msra.mxu0 0
    %687 = vmatprep.subr.bf16.mxu0 0
    %688 = vmatpush1.bf16.msra.mxu0 0
    %689 = vmatprep.subr.bf16.mxu0 0
    %690 = vmatpush1.bf16.msra.mxu0 0
    %691 = vmatprep.subr.bf16.mxu0 0
    %692 = vmatpush1.bf16.msra.mxu0 0
    %693 = vmatprep.subr.bf16.mxu0 0
    %694 = vmatpush1.bf16.msra.mxu0 0
    %695 = vmatprep.subr.bf16.mxu0 0
    %696 = vmatpush1.bf16.msra.mxu0 0
    %697 = vmatprep.mubr.bf16.mxu0 0
    %698 = vmatmul.mubr.bf16.gmra.mrb[0].mxu0 %v663
    %v699 = vpop.f32.mrb[0].mxu0
    %v700 = vadd.f32 %v656, %v699
    %v701 = vpop.f32.mrb[0].mxu0
    %v702 = vpop.f32.mrb[0].mxu0
    %v703 = vadd.f32 %v659, %v702
    %v704 = vpop.f32.mrb[0].mxu0
    %705 = vdwg.mxu0
    %v706 = vpack.c.bf16 %v703, %v700
    %v707 = vld [vmem:[#allocation5] sm:$0xf]
    %v708 = vld [vmem:[#allocation5 + $0x4] sm:$0xf]
    %v709 = vld [vmem:[#allocation5 + $0x8] sm:$0xf]
    %v710 = vld [vmem:[#allocation5 + $0xc] sm:$0xf]
    %v711 = vld [vmem:[#allocation5 + $0x10] sm:$0xf]
    %v712 = vld [vmem:[#allocation5 + $0x14] sm:$0xf]
    %v713 = vld [vmem:[#allocation5 + $0x18] sm:$0xf]
    %v714 = vld [vmem:[#allocation5 + $0x1c] sm:$0xf]
    %v715 = vld [vmem:[#allocation5 + $0x20] sm:$0xf]
    %v716 = vld [vmem:[#allocation5 + $0x24] sm:$0xf]
    %v717 = vld [vmem:[#allocation5 + $0x28] sm:$0xf]
    %v718 = vld [vmem:[#allocation5 + $0x2c] sm:$0xf]
    %v719 = vld [vmem:[#allocation5 + $0x30] sm:$0xf]
    %v720 = vld [vmem:[#allocation5 + $0x34] sm:$0xf]
    %v721 = vld [vmem:[#allocation5 + $0x38] sm:$0xf]
    %v722 = vld [vmem:[#allocation5 + $0x3c] sm:$0xf]
    %v723 = vld [vmem:[%s9] sm:$0x1]
    %v725 = vlaneseq
    %v726 = vshrl.u32 %v725, 7
    %v727 = vsub.s32 0, %v726
    %v728 = vrot.slane %v723, %v727
    %v746 = vunpack.c.l.b16 %v707
    %v747 = vunpack.c.l.b16 %v708
    %v748 = vunpack.c.l.b16 %v709
    %v749 = vunpack.c.l.b16 %v710
    %v750 = vunpack.c.l.b16 %v711
    %v751 = vunpack.c.l.b16 %v712
    %v752 = vunpack.c.l.b16 %v713
    %v753 = vunpack.c.l.b16 %v714
    %v754 = vunpack.c.l.b16 %v715
    %v755 = vunpack.c.l.b16 %v716
    %v756 = vunpack.c.l.b16 %v717
    %v757 = vunpack.c.l.b16 %v718
    %v758 = vunpack.c.l.b16 %v719
    %v759 = vunpack.c.l.b16 %v720
    %v760 = vunpack.c.l.b16 %v721
    %v761 = vunpack.c.l.b16 %v722
    %v762 = vpack.c.b16 %v747, %v746
    %v763 = vpack.c.b16 %v749, %v748
    %v764 = vpack.c.b16 %v751, %v750
    %v765 = vpack.c.b16 %v753, %v752
    %v766 = vpack.c.b16 %v755, %v754
    %v767 = vpack.c.b16 %v757, %v756
    %v768 = vpack.c.b16 %v759, %v758
    %v769 = vpack.c.b16 %v761, %v760
    %778 = vmatprep.subr.bf16.mxu0 0
    %779 = vmatpush1.bf16.msra.mxu0 %v762
    %780 = vmatprep.subr.bf16.mxu0 0
    %781 = vmatpush1.bf16.msra.mxu0 %v763
    %782 = vmatprep.subr.bf16.mxu0 0
    %783 = vmatpush1.bf16.msra.mxu0 %v764
    %784 = vmatprep.subr.bf16.mxu0 0
    %785 = vmatpush1.bf16.msra.mxu0 %v765
    %786 = vmatprep.subr.bf16.mxu0 0
    %787 = vmatpush1.bf16.msra.mxu0 %v766
    %788 = vmatprep.subr.bf16.mxu0 0
    %789 = vmatpush1.bf16.msra.mxu0 %v767
    %790 = vmatprep.subr.bf16.mxu0 0
    %791 = vmatpush1.bf16.msra.mxu0 %v768
    %792 = vmatprep.subr.bf16.mxu0 0
    %793 = vmatpush1.bf16.msra.mxu0 %v769
    %794 = vmatprep.subr.bf16.mxu0 0
    %795 = vmatpush1.bf16.msra.mxu0 0
    %796 = vmatprep.subr.bf16.mxu0 0
    %797 = vmatpush1.bf16.msra.mxu0 0
    %798 = vmatprep.subr.bf16.mxu0 0
    %799 = vmatpush1.bf16.msra.mxu0 0
    %800 = vmatprep.subr.bf16.mxu0 0
    %801 = vmatpush1.bf16.msra.mxu0 0
    %802 = vmatprep.subr.bf16.mxu0 0
    %803 = vmatpush1.bf16.msra.mxu0 0
    %804 = vmatprep.subr.bf16.mxu0 0
    %805 = vmatpush1.bf16.msra.mxu0 0
    %806 = vmatprep.subr.bf16.mxu0 0
    %807 = vmatpush1.bf16.msra.mxu0 0
    %808 = vmatprep.subr.bf16.mxu0 0
    %809 = vmatpush1.bf16.msra.mxu0 0
    %810 = vmatprep.mubr.bf16.mxu0 0
    %811 = vmatmul.mubr.bf16.gmra.mrb[0].mxu0 %v706
    %v812 = vpop.f32.mrb[0].mxu0
    %v813 = vadd.f32 %v728, %v812
    %v814 = vpop.f32.mrb[0].mxu0
    %v815 = vpop.f32.mrb[0].mxu0
    %v816 = vadd.f32 %v728, %v815
    %v817 = vpop.f32.mrb[0].mxu0
    %818 = vdwg.mxu0
    %v819 = vadd.f32 %v185, %v813
    %v820 = vadd.f32 %v186, %v816
    %v821 = vld [vmem:[%s10] sm:$0x1]
    %v822 = vld [vmem:[%s11] sm:$0x1]
    %823 = vadd.xlane.f32.xlu0 %v819
    %v824 = vpop.xlane.xlu0 %823
    %825 = vadd.xlane.f32.xlu0 %v820
    %v826 = vpop.xlane.xlu0 %825
    %v827 = vmul.f32 %v824, %v152
    %v828 = vmul.f32 %v826, %v152
    %v829 = vsub.f32 %v819, %v827
    %v830 = vsub.f32 %v820, %v828
    %v831 = vmul.f32 %v829, %v829
    %v832 = vmul.f32 %v830, %v830
    %833 = vadd.xlane.f32.xlu0 %v831
    %v834 = vpop.xlane.xlu0 %833
    %835 = vadd.xlane.f32.xlu0 %v832
    %v836 = vpop.xlane.xlu0 %835
    %v837 = vmul.f32 %v834, %v152
    %v838 = vmul.f32 %v836, %v152
    %v839 = vadd.f32 %v837, 1e-12
    %v840 = vadd.f32 %v838, 1e-12
    %v841 = vrsqrt.pop %v839
    %v842 = vrsqrt.pop %v840
    %v843 = vmul.f32 %v829, %v841
    %v844 = vmul.f32 %v830, %v842
    %v846 = vlaneseq
    %v847 = vshrl.u32 %v846, 7
    %v848 = vsub.s32 0, %v847
    %v849 = vrot.slane %v821, %v848
    %v851 = vmul.f32 %v843, %v849
    %v852 = vmul.f32 %v844, %v849
    %v854 = vlaneseq
    %v855 = vshrl.u32 %v854, 7
    %v856 = vsub.s32 0, %v855
    %v857 = vrot.slane %v822, %v856
    %v859 = vadd.f32 %v851, %v857
    %v860 = vadd.f32 %v852, %v857
    %v861 = vpack.c.bf16 %v860, %v859
    %v862 = vld [vmem:[%s12] sm:$0xff]
    %v863 = vld [vmem:[%s12 + $0x8] sm:$0xff]
    %v864 = vld [vmem:[%s12 + $0x10] sm:$0xff]
    %v865 = vld [vmem:[%s12 + $0x18] sm:$0xff]
    %v866 = vld [vmem:[%s12 + $0x20] sm:$0xff]
    %v867 = vld [vmem:[%s12 + $0x28] sm:$0xff]
    %v868 = vld [vmem:[%s12 + $0x30] sm:$0xff]
    %v869 = vld [vmem:[%s12 + $0x38] sm:$0xff]
    %v870 = vld [vmem:[%s12 + $0x40] sm:$0xff]
    %v871 = vld [vmem:[%s12 + $0x48] sm:$0xff]
    %v872 = vld [vmem:[%s12 + $0x50] sm:$0xff]
    %v873 = vld [vmem:[%s12 + $0x58] sm:$0xff]
    %v874 = vld [vmem:[%s12 + $0x60] sm:$0xff]
    %v875 = vld [vmem:[%s12 + $0x68] sm:$0xff]
    %v876 = vld [vmem:[%s12 + $0x70] sm:$0xff]
    %v877 = vld [vmem:[%s12 + $0x78] sm:$0xff]
    %v878 = vld [vmem:[%s13] sm:$0x3]
    %v880 = vlaneseq
    %v881 = vshrl.u32 %v880, 7
    %v882 = vsub.s32 0, %v881
    %v883 = vrot.slane %v878, %v882
    %v884 = vlaneseq
    %v885 = vshrl.u32 %v884, 7
    %v886 = vsub.s32 1, %v885
    %v887 = vrot.slane %v878, %v886
    %v906 = vunpack.c.l.b16 %v862
    %v907 = vunpack.c.h.b16 %v862
    %v908 = vunpack.c.l.b16 %v863
    %v909 = vunpack.c.h.b16 %v863
    %v910 = vunpack.c.l.b16 %v864
    %v911 = vunpack.c.h.b16 %v864
    %v912 = vunpack.c.l.b16 %v865
    %v913 = vunpack.c.h.b16 %v865
    %v914 = vunpack.c.l.b16 %v866
    %v915 = vunpack.c.h.b16 %v866
    %v916 = vunpack.c.l.b16 %v867
    %v917 = vunpack.c.h.b16 %v867
    %v918 = vunpack.c.l.b16 %v868
    %v919 = vunpack.c.h.b16 %v868
    %v920 = vunpack.c.l.b16 %v869
    %v921 = vunpack.c.h.b16 %v869
    %v922 = vunpack.c.l.b16 %v870
    %v923 = vunpack.c.h.b16 %v870
    %v924 = vunpack.c.l.b16 %v871
    %v925 = vunpack.c.h.b16 %v871
    %v926 = vunpack.c.l.b16 %v872
    %v927 = vunpack.c.h.b16 %v872
    %v928 = vunpack.c.l.b16 %v873
    %v929 = vunpack.c.h.b16 %v873
    %v930 = vunpack.c.l.b16 %v874
    %v931 = vunpack.c.h.b16 %v874
    %v932 = vunpack.c.l.b16 %v875
    %v933 = vunpack.c.h.b16 %v875
    %v934 = vunpack.c.l.b16 %v876
    %v935 = vunpack.c.h.b16 %v876
    %v936 = vunpack.c.l.b16 %v877
    %v937 = vunpack.c.h.b16 %v877
    %v938 = vpack.c.b16 %v908, %v906
    %v939 = vpack.c.b16 %v909, %v907
    %v940 = vpack.c.b16 %v912, %v910
    %v941 = vpack.c.b16 %v913, %v911
    %v942 = vpack.c.b16 %v916, %v914
    %v943 = vpack.c.b16 %v917, %v915
    %v944 = vpack.c.b16 %v920, %v918
    %v945 = vpack.c.b16 %v921, %v919
    %v946 = vpack.c.b16 %v924, %v922
    %v947 = vpack.c.b16 %v925, %v923
    %v948 = vpack.c.b16 %v928, %v926
    %v949 = vpack.c.b16 %v929, %v927
    %v950 = vpack.c.b16 %v932, %v930
    %v951 = vpack.c.b16 %v933, %v931
    %v952 = vpack.c.b16 %v936, %v934
    %v953 = vpack.c.b16 %v937, %v935
    %970 = vmatprep.subr.bf16.mxu0 %v939
    %971 = vmatpush1.bf16.msra.mxu0 %v938
    %972 = vmatprep.subr.bf16.mxu0 %v941
    %973 = vmatpush1.bf16.msra.mxu0 %v940
    %974 = vmatprep.subr.bf16.mxu0 %v943
    %975 = vmatpush1.bf16.msra.mxu0 %v942
    %976 = vmatprep.subr.bf16.mxu0 %v945
    %977 = vmatpush1.bf16.msra.mxu0 %v944
    %978 = vmatprep.subr.bf16.mxu0 %v947
    %979 = vmatpush1.bf16.msra.mxu0 %v946
    %980 = vmatprep.subr.bf16.mxu0 %v949
    %981 = vmatpush1.bf16.msra.mxu0 %v948
    %982 = vmatprep.subr.bf16.mxu0 %v951
    %983 = vmatpush1.bf16.msra.mxu0 %v950
    %984 = vmatprep.subr.bf16.mxu0 %v953
    %985 = vmatpush1.bf16.msra.mxu0 %v952
    %986 = vmatprep.subr.bf16.mxu0 0
    %987 = vmatpush1.bf16.msra.mxu0 0
    %988 = vmatprep.subr.bf16.mxu0 0
    %989 = vmatpush1.bf16.msra.mxu0 0
    %990 = vmatprep.subr.bf16.mxu0 0
    %991 = vmatpush1.bf16.msra.mxu0 0
    %992 = vmatprep.subr.bf16.mxu0 0
    %993 = vmatpush1.bf16.msra.mxu0 0
    %994 = vmatprep.subr.bf16.mxu0 0
    %995 = vmatpush1.bf16.msra.mxu0 0
    %996 = vmatprep.subr.bf16.mxu0 0
    %997 = vmatpush1.bf16.msra.mxu0 0
    %998 = vmatprep.subr.bf16.mxu0 0
    %999 = vmatpush1.bf16.msra.mxu0 0
    %1000 = vmatprep.subr.bf16.mxu0 0
    %1001 = vmatpush1.bf16.msra.mxu0 0
    %1002 = vmatprep.mubr.bf16.mxu0 0
    %1003 = vmatmul.mubr.bf16.gmra.mrb[0].mxu0 %v861
    %v1004 = vpop.f32.mrb[0].mxu0
    %v1005 = vadd.f32 %v883, %v1004
    %v1006 = vpop.f32.mrb[0].mxu0
    %v1007 = vadd.f32 %v887, %v1006
    %v1008 = vpop.f32.mrb[0].mxu0
    %v1009 = vadd.f32 %v883, %v1008
    %v1010 = vpop.f32.mrb[0].mxu0
    %v1011 = vadd.f32 %v887, %v1010
    %1012 = vdwg.mxu0
    %v1013 = vmul.f32 %v1005, %v1005
    %v1014 = vmul.f32 %v1007, %v1007
    %v1015 = vmul.f32 %v1009, %v1009
    %v1016 = vmul.f32 %v1011, %v1011
    %v1017 = vmul.f32 %v1005, %v1013
    %v1018 = vmul.f32 %v1007, %v1014
    %v1019 = vmul.f32 %v1009, %v1015
    %v1020 = vmul.f32 %v1011, %v1016
    %v1021 = vmul.f32 %v1017, 0.044715
    %v1022 = vmul.f32 %v1018, 0.044715
    %v1023 = vmul.f32 %v1019, 0.044715
    %v1024 = vmul.f32 %v1020, 0.044715
    %v1025 = vadd.f32 %v1005, %v1021
    %v1026 = vadd.f32 %v1007, %v1022
    %v1027 = vadd.f32 %v1009, %v1023
    %v1028 = vadd.f32 %v1011, %v1024
    %v1029 = vmul.f32 %v1025, 0.7978846
    %v1030 = vmul.f32 %v1026, 0.7978846
    %v1031 = vmul.f32 %v1027, 0.7978846
    %v1032 = vmul.f32 %v1028, 0.7978846
    %v1033 = vtanh.pop %v1029
    %v1034 = vtanh.pop %v1030
    %v1035 = vtanh.pop %v1031
    %v1036 = vtanh.pop %v1032
    %v1037 = vadd.f32 %v1033, 1.0
    %v1038 = vadd.f32 %v1034, 1.0
    %v1039 = vadd.f32 %v1035, 1.0
    %v1040 = vadd.f32 %v1036, 1.0
    %v1041 = vmul.f32 %v1037, 0.5
    %v1042 = vmul.f32 %v1038, 0.5
    %v1043 = vmul.f32 %v1039, 0.5
    %v1044 = vmul.f32 %v1040, 0.5
    %v1045 = vmul.f32 %v1005, %v1041
    %v1046 = vmul.f32 %v1007, %v1042
    %v1047 = vmul.f32 %v1009, %v1043
    %v1048 = vmul.f32 %v1011, %v1044
    %v1049 = vpack.c.bf16 %v1047, %v1045
    %v1050 = vpack.c.bf16 %v1048, %v1046
    %v1051 = vld [vmem:[#allocation7] sm:$0xf]
    %v1052 = vld [vmem:[#allocation7 + $0x4] sm:$0xf]
    %v1053 = vld [vmem:[#allocation7 + $0x8] sm:$0xf]
    %v1054 = vld [vmem:[#allocation7 + $0xc] sm:$0xf]
    %v1055 = vld [vmem:[#allocation7 + $0x10] sm:$0xf]
    %v1056 = vld [vmem:[#allocation7 + $0x14] sm:$0xf]
    %v1057 = vld [vmem:[#allocation7 + $0x18] sm:$0xf]
    %v1058 = vld [vmem:[#allocation7 + $0x1c] sm:$0xf]
    %v1059 = vld [vmem:[#allocation7 + $0x20] sm:$0xf]
    %v1060 = vld [vmem:[#allocation7 + $0x24] sm:$0xf]
    %v1061 = vld [vmem:[#allocation7 + $0x28] sm:$0xf]
    %v1062 = vld [vmem:[#allocation7 + $0x2c] sm:$0xf]
    %v1063 = vld [vmem:[#allocation7 + $0x30] sm:$0xf]
    %v1064 = vld [vmem:[#allocation7 + $0x34] sm:$0xf]
    %v1065 = vld [vmem:[#allocation7 + $0x38] sm:$0xf]
    %v1066 = vld [vmem:[#allocation7 + $0x3c] sm:$0xf]
    %v1067 = vld [vmem:[#allocation7 + $0x40] sm:$0xf]
    %v1068 = vld [vmem:[#allocation7 + $0x44] sm:$0xf]
    %v1069 = vld [vmem:[#allocation7 + $0x48] sm:$0xf]
    %v1070 = vld [vmem:[#allocation7 + $0x4c] sm:$0xf]
    %v1071 = vld [vmem:[#allocation7 + $0x50] sm:$0xf]
    %v1072 = vld [vmem:[#allocation7 + $0x54] sm:$0xf]
    %v1073 = vld [vmem:[#allocation7 + $0x58] sm:$0xf]
    %v1074 = vld [vmem:[#allocation7 + $0x5c] sm:$0xf]
    %v1075 = vld [vmem:[#allocation7 + $0x60] sm:$0xf]
    %v1076 = vld [vmem:[#allocation7 + $0x64] sm:$0xf]
    %v1077 = vld [vmem:[#allocation7 + $0x68] sm:$0xf]
    %v1078 = vld [vmem:[#allocation7 + $0x6c] sm:$0xf]
    %v1079 = vld [vmem:[#allocation7 + $0x70] sm:$0xf]
    %v1080 = vld [vmem:[#allocation7 + $0x74] sm:$0xf]
    %v1081 = vld [vmem:[#allocation7 + $0x78] sm:$0xf]
    %v1082 = vld [vmem:[#allocation7 + $0x7c] sm:$0xf]
    %v1083 = vld [vmem:[%s15] sm:$0x1]
    %v1085 = vlaneseq
    %v1086 = vshrl.u32 %v1085, 7
    %v1087 = vsub.s32 0, %v1086
    %v1088 = vrot.slane %v1083, %v1087
    %v1122 = vunpack.c.l.b16 %v1051
    %v1123 = vunpack.c.l.b16 %v1052
    %v1124 = vunpack.c.l.b16 %v1053
    %v1125 = vunpack.c.l.b16 %v1054
    %v1126 = vunpack.c.l.b16 %v1055
    %v1127 = vunpack.c.l.b16 %v1056
    %v1128 = vunpack.c.l.b16 %v1057
    %v1129 = vunpack.c.l.b16 %v1058
    %v1130 = vunpack.c.l.b16 %v1059
    %v1131 = vunpack.c.l.b16 %v1060
    %v1132 = vunpack.c.l.b16 %v1061
    %v1133 = vunpack.c.l.b16 %v1062
    %v1134 = vunpack.c.l.b16 %v1063
    %v1135 = vunpack.c.l.b16 %v1064
    %v1136 = vunpack.c.l.b16 %v1065
    %v1137 = vunpack.c.l.b16 %v1066
    %v1138 = vunpack.c.l.b16 %v1067
    %v1139 = vunpack.c.l.b16 %v1068
    %v1140 = vunpack.c.l.b16 %v1069
    %v1141 = vunpack.c.l.b16 %v1070
    %v1142 = vunpack.c.l.b16 %v1071
    %v1143 = vunpack.c.l.b16 %v1072
    %v1144 = vunpack.c.l.b16 %v1073
    %v1145 = vunpack.c.l.b16 %v1074
    %v1146 = vunpack.c.l.b16 %v1075
    %v1147 = vunpack.c.l.b16 %v1076
    %v1148 = vunpack.c.l.b16 %v1077
    %v1149 = vunpack.c.l.b16 %v1078
    %v1150 = vunpack.c.l.b16 %v1079
    %v1151 = vunpack.c.l.b16 %v1080
    %v1152 = vunpack.c.l.b16 %v1081
    %v1153 = vunpack.c.l.b16 %v1082
    %v1154 = vpack.c.b16 %v1123, %v1122
    %v1155 = vpack.c.b16 %v1125, %v1124
    %v1156 = vpack.c.b16 %v1127, %v1126
    %v1157 = vpack.c.b16 %v1129, %v1128
    %v1158 = vpack.c.b16 %v1131, %v1130
    %v1159 = vpack.c.b16 %v1133, %v1132
    %v1160 = vpack.c.b16 %v1135, %v1134
    %v1161 = vpack.c.b16 %v1137, %v1136
    %v1162 = vpack.c.b16 %v1139, %v1138
    %v1163 = vpack.c.b16 %v1141, %v1140
    %v1164 = vpack.c.b16 %v1143, %v1142
    %v1165 = vpack.c.b16 %v1145, %v1144
    %v1166 = vpack.c.b16 %v1147, %v1146
    %v1167 = vpack.c.b16 %v1149, %v1148
    %v1168 = vpack.c.b16 %v1151, %v1150
    %v1169 = vpack.c.b16 %v1153, %v1152
    %1186 = vmatprep.subr.bf16.mxu0 0
    %1187 = vmatpush1.bf16.msra.mxu0 %v1154
    %1188 = vmatprep.subr.bf16.mxu0 0
    %1189 = vmatpush1.bf16.msra.mxu0 %v1155
    %1190 = vmatprep.subr.bf16.mxu0 0
    %1191 = vmatpush1.bf16.msra.mxu0 %v1156
    %1192 = vmatprep.subr.bf16.mxu0 0
    %1193 = vmatpush1.bf16.msra.mxu0 %v1157
    %1194 = vmatprep.subr.bf16.mxu0 0
    %1195 = vmatpush1.bf16.msra.mxu0 %v1158
    %1196 = vmatprep.subr.bf16.mxu0 0
    %1197 = vmatpush1.bf16.msra.mxu0 %v1159
    %1198 = vmatprep.subr.bf16.mxu0 0
    %1199 = vmatpush1.bf16.msra.mxu0 %v1160
    %1200 = vmatprep.subr.bf16.mxu0 0
    %1201 = vmatpush1.bf16.msra.mxu0 %v1161
    %1202 = vmatprep.subr.bf16.mxu0 0
    %1203 = vmatpush1.bf16.msra.mxu0 %v1162
    %1204 = vmatprep.subr.bf16.mxu0 0
    %1205 = vmatpush1.bf16.msra.mxu0 %v1163
    %1206 = vmatprep.subr.bf16.mxu0 0
    %1207 = vmatpush1.bf16.msra.mxu0 %v1164
    %1208 = vmatprep.subr.bf16.mxu0 0
    %1209 = vmatpush1.bf16.msra.mxu0 %v1165
    %1210 = vmatprep.subr.bf16.mxu0 0
    %1211 = vmatpush1.bf16.msra.mxu0 %v1166
    %1212 = vmatprep.subr.bf16.mxu0 0
    %1213 = vmatpush1.bf16.msra.mxu0 %v1167
    %1214 = vmatprep.subr.bf16.mxu0 0
    %1215 = vmatpush1.bf16.msra.mxu0 %v1168
    %1216 = vmatprep.subr.bf16.mxu0 0
    %1217 = vmatpush1.bf16.msra.mxu0 %v1169
    %1218 = vmatprep.mubr.bf16.mxu0 %v1050
    %1219 = vmatmul.mubr.bf16.gmra.mrb[0].mxu0 %v1049
    %v1220 = vpop.f32.mrb[0].mxu0
    %v1221 = vadd.f32 %v1088, %v1220
    %v1222 = vpop.f32.mrb[0].mxu0
    %v1223 = vpop.f32.mrb[0].mxu0
    %v1224 = vadd.f32 %v1088, %v1223
    %v1225 = vpop.f32.mrb[0].mxu0
    %1226 = vdwg.mxu0
    %v1227 = vadd.f32 %v859, %v1221
    %v1228 = vadd.f32 %v860, %v1224
    %v1229 = vld [vmem:[%s16] sm:$0x1]
    %v1230 = vld [vmem:[%s17] sm:$0x1]
    %1231 = vadd.xlane.f32.xlu0 %v1227
    %v1232 = vpop.xlane.xlu0 %1231
    %1233 = vadd.xlane.f32.xlu0 %v1228
    %v1234 = vpop.xlane.xlu0 %1233
    %v1235 = vmul.f32 %v1232, %v152
    %v1236 = vmul.f32 %v1234, %v152
    %v1237 = vsub.f32 %v1227, %v1235
    %v1238 = vsub.f32 %v1228, %v1236
    %v1239 = vmul.f32 %v1237, %v1237
    %v1240 = vmul.f32 %v1238, %v1238
    %1241 = vadd.xlane.f32.xlu0 %v1239
    %v1242 = vpop.xlane.xlu0 %1241
    %1243 = vadd.xlane.f32.xlu0 %v1240
    %v1244 = vpop.xlane.xlu0 %1243
    %v1245 = vmul.f32 %v1242, %v152
    %v1246 = vmul.f32 %v1244, %v152
    %v1247 = vadd.f32 %v1245, 1e-12
    %v1248 = vadd.f32 %v1246, 1e-12
    %v1249 = vrsqrt.pop %v1247
    %v1250 = vrsqrt.pop %v1248
    %v1251 = vmul.f32 %v1237, %v1249
    %v1252 = vmul.f32 %v1238, %v1250
    %v1254 = vlaneseq
    %v1255 = vshrl.u32 %v1254, 7
    %v1256 = vsub.s32 0, %v1255
    %v1257 = vrot.slane %v1229, %v1256
    %v1259 = vmul.f32 %v1251, %v1257
    %v1260 = vmul.f32 %v1252, %v1257
    %v1262 = vlaneseq
    %v1263 = vshrl.u32 %v1262, 7
    %v1264 = vsub.s32 0, %v1263
    %v1265 = vrot.slane %v1230, %v1264
    %v1267 = vadd.f32 %v1259, %v1265
    %v1268 = vadd.f32 %v1260, %v1265
    %v1269 = vpack.c.bf16 %v1268, %v1267
    %s1270 = scalar_lea.vmem [#allocation2], 192
    %v1271 = vld [vmem:[%s1270] sm:$0xff]
    %v1272 = vld [vmem:[%s1270 + $0x8] sm:$0xf]
    %v1273 = vld [vmem:[%s1270 + $0xc] sm:$0xff]
    %v1274 = vld [vmem:[%s1270 + $0x14] sm:$0xf]
    %v1275 = vld [vmem:[%s1270 + $0x18] sm:$0xff]
    %v1276 = vld [vmem:[%s1270 + $0x20] sm:$0xf]
    %v1277 = vld [vmem:[%s1270 + $0x24] sm:$0xff]
    %v1278 = vld [vmem:[%s1270 + $0x2c] sm:$0xf]
    %v1279 = vld [vmem:[%s1270 + $0x30] sm:$0xff]
    %v1280 = vld [vmem:[%s1270 + $0x38] sm:$0xf]
    %v1281 = vld [vmem:[%s1270 + $0x3c] sm:$0xff]
    %v1282 = vld [vmem:[%s1270 + $0x44] sm:$0xf]
    %v1283 = vld [vmem:[%s1270 + $0x48] sm:$0xff]
    %v1284 = vld [vmem:[%s1270 + $0x50] sm:$0xf]
    %v1285 = vld [vmem:[%s1270 + $0x54] sm:$0xff]
    %v1286 = vld [vmem:[%s1270 + $0x5c] sm:$0xf]
    %v1287 = vld [vmem:[%s1270 + $0x60] sm:$0xff]
    %v1288 = vld [vmem:[%s1270 + $0x68] sm:$0xf]
    %v1289 = vld [vmem:[%s1270 + $0x6c] sm:$0xff]
    %v1290 = vld [vmem:[%s1270 + $0x74] sm:$0xf]
    %v1291 = vld [vmem:[%s1270 + $0x78] sm:$0xff]
    %v1292 = vld [vmem:[%s1270 + $0x80] sm:$0xf]
    %v1293 = vld [vmem:[%s1270 + $0x84] sm:$0xff]
    %v1294 = vld [vmem:[%s1270 + $0x8c] sm:$0xf]
    %v1295 = vld [vmem:[%s1270 + $0x90] sm:$0xff]
    %v1296 = vld [vmem:[%s1270 + $0x98] sm:$0xf]
    %v1297 = vld [vmem:[%s1270 + $0x9c] sm:$0xff]
    %v1298 = vld [vmem:[%s1270 + $0xa4] sm:$0xf]
    %v1299 = vld [vmem:[%s1270 + $0xa8] sm:$0xff]
    %v1300 = vld [vmem:[%s1270 + $0xb0] sm:$0xf]
    %v1301 = vld [vmem:[%s1270 + $0xb4] sm:$0xff]
    %v1302 = vld [vmem:[%s1270 + $0xbc] sm:$0xf]
    %s1303 = scalar_lea.vmem %s7, 3
    %v1304 = vld [vmem:[%s1303] sm:$0x7]
    %v1306 = vlaneseq
    %v1307 = vshrl.u32 %v1306, 7
    %v1308 = vsub.s32 0, %v1307
    %v1309 = vrot.slane %v1304, %v1308
    %v1310 = vlaneseq
    %v1311 = vshrl.u32 %v1310, 7
    %v1312 = vsub.s32 1, %v1311
    %v1313 = vrot.slane %v1304, %v1312
    %v1314 = vlaneseq
    %v1315 = vshrl.u32 %v1314, 7
    %v1316 = vsub.s32 2, %v1315
    %v1317 = vrot.slane %v1304, %v1316
    %v1353 = vunpack.c.l.b16 %v1271
    %v1354 = vunpack.c.h.b16 %v1271
    %v1355 = vunpack.c.l.b16 %v1272
    %v1356 = vunpack.c.l.b16 %v1273
    %v1357 = vunpack.c.h.b16 %v1273
    %v1358 = vunpack.c.l.b16 %v1274
    %v1359 = vunpack.c.l.b16 %v1275
    %v1360 = vunpack.c.h.b16 %v1275
    %v1361 = vunpack.c.l.b16 %v1276
    %v1362 = vunpack.c.l.b16 %v1277
    %v1363 = vunpack.c.h.b16 %v1277
    %v1364 = vunpack.c.l.b16 %v1278
    %v1365 = vunpack.c.l.b16 %v1279
    %v1366 = vunpack.c.h.b16 %v1279
    %v1367 = vunpack.c.l.b16 %v1280
    %v1368 = vunpack.c.l.b16 %v1281
    %v1369 = vunpack.c.h.b16 %v1281
    %v1370 = vunpack.c.l.b16 %v1282
    %v1371 = vunpack.c.l.b16 %v1283
    %v1372 = vunpack.c.h.b16 %v1283
    %v1373 = vunpack.c.l.b16 %v1284
    %v1374 = vunpack.c.l.b16 %v1285
    %v1375 = vunpack.c.h.b16 %v1285
    %v1376 = vunpack.c.l.b16 %v1286
    %v1377 = vunpack.c.l.b16 %v1287
    %v1378 = vunpack.c.h.b16 %v1287
    %v1379 = vunpack.c.l.b16 %v1288
    %v1380 = vunpack.c.l.b16 %v1289
    %v1381 = vunpack.c.h.b16 %v1289
    %v1382 = vunpack.c.l.b16 %v1290
    %v1383 = vunpack.c.l.b16 %v1291
    %v1384 = vunpack.c.h.b16 %v1291
    %v1385 = vunpack.c.l.b16 %v1292
    %v1386 = vunpack.c.l.b16 %v1293
    %v1387 = vunpack.c.h.b16 %v1293
    %v1388 = vunpack.c.l.b16 %v1294
    %v1389 = vunpack.c.l.b16 %v1295
    %v1390 = vunpack.c.h.b16 %v1295
    %v1391 = vunpack.c.l.b16 %v1296
    %v1392 = vunpack.c.l.b16 %v1297
    %v1393 = vunpack.c.h.b16 %v1297
    %v1394 = vunpack.c.l.b16 %v1298
    %v1395 = vunpack.c.l.b16 %v1299
    %v1396 = vunpack.c.h.b16 %v1299
    %v1397 = vunpack.c.l.b16 %v1300
    %v1398 = vunpack.c.l.b16 %v1301
    %v1399 = vunpack.c.h.b16 %v1301
    %v1400 = vunpack.c.l.b16 %v1302
    %v1401 = vpack.c.b16 %v1356, %v1353
    %v1402 = vpack.c.b16 %v1357, %v1354
    %v1403 = vpack.c.b16 %v1358, %v1355
    %v1404 = vpack.c.b16 %v1362, %v1359
    %v1405 = vpack.c.b16 %v1363, %v1360
    %v1406 = vpack.c.b16 %v1364, %v1361
    %v1407 = vpack.c.b16 %v1368, %v1365
    %v1408 = vpack.c.b16 %v1369, %v1366
    %v1409 = vpack.c.b16 %v1370, %v1367
    %v1410 = vpack.c.b16 %v1374, %v1371
    %v1411 = vpack.c.b16 %v1375, %v1372
    %v1412 = vpack.c.b16 %v1376, %v1373
    %v1413 = vpack.c.b16 %v1380, %v1377
    %v1414 = vpack.c.b16 %v1381, %v1378
    %v1415 = vpack.c.b16 %v1382, %v1379
    %v1416 = vpack.c.b16 %v1386, %v1383
    %v1417 = vpack.c.b16 %v1387, %v1384
    %v1418 = vpack.c.b16 %v1388, %v1385
    %v1419 = vpack.c.b16 %v1392, %v1389
    %v1420 = vpack.c.b16 %v1393, %v1390
    %v1421 = vpack.c.b16 %v1394, %v1391
    %v1422 = vpack.c.b16 %v1398, %v1395
    %v1423 = vpack.c.b16 %v1399, %v1396
    %v1424 = vpack.c.b16 %v1400, %v1397
    %1449 = vmatprep.subr.bf16.mxu0 %v1402
    %1450 = vmatpush1.bf16.msra.mxu0 %v1401
    %1451 = vmatprep.subr.bf16.mxu0 %v1405
    %1452 = vmatpush1.bf16.msra.mxu0 %v1404
    %1453 = vmatprep.subr.bf16.mxu0 %v1408
    %1454 = vmatpush1.bf16.msra.mxu0 %v1407
    %1455 = vmatprep.subr.bf16.mxu0 %v1411
    %1456 = vmatpush1.bf16.msra.mxu0 %v1410
    %1457 = vmatprep.subr.bf16.mxu0 %v1414
    %1458 = vmatpush1.bf16.msra.mxu0 %v1413
    %1459 = vmatprep.subr.bf16.mxu0 %v1417
    %1460 = vmatpush1.bf16.msra.mxu0 %v1416
    %1461 = vmatprep.subr.bf16.mxu0 %v1420
    %1462 = vmatpush1.bf16.msra.mxu0 %v1419
    %1463 = vmatprep.subr.bf16.mxu0 %v1423
    %1464 = vmatpush1.bf16.msra.mxu0 %v1422
    %1465 = vmatprep.subr.bf16.mxu0 0
    %1466 = vmatpush1.bf16.msra.mxu0 0
    %1467 = vmatprep.subr.bf16.mxu0 0
    %1468 = vmatpush1.bf16.msra.mxu0 0
    %1469 = vmatprep.subr.bf16.mxu0 0
    %1470 = vmatpush1.bf16.msra.mxu0 0
    %1471 = vmatprep.subr.bf16.mxu0 0
    %1472 = vmatpush1.bf16.msra.mxu0 0
    %1473 = vmatprep.subr.bf16.mxu0 0
    %1474 = vmatpush1.bf16.msra.mxu0 0
    %1475 = vmatprep.subr.bf16.mxu0 0
    %1476 = vmatpush1.bf16.msra.mxu0 0
    %1477 = vmatprep.subr.bf16.mxu0 0
    %1478 = vmatpush1.bf16.msra.mxu0 0
    %1479 = vmatprep.subr.bf16.mxu0 0
    %1480 = vmatpush1.bf16.msra.mxu0 0
    %1481 = vmatprep.mubr.bf16.mxu0 0
    %1482 = vmatmul.mubr.bf16.gmra.mrb[0].mxu0 %v1269
    %v1483 = vpop.f32.mrb[0].mxu0
    %v1484 = vadd.f32 %v1309, %v1483
    %v1485 = vpop.f32.mrb[0].mxu0
    %v1486 = vadd.f32 %v1313, %v1485
    %v1487 = vpop.f32.mrb[0].mxu0
    %v1488 = vadd.f32 %v1309, %v1487
    %v1489 = vpop.f32.mrb[0].mxu0
    %v1490 = vadd.f32 %v1313, %v1489
    %1491 = vdwg.mxu0
    %1492 = vmatprep.subr.bf16.mxu0 0
    %1493 = vmatpush1.bf16.msra.mxu0 %v1403
    %1494 = vmatprep.subr.bf16.mxu0 0
    %1495 = vmatpush1.bf16.msra.mxu0 %v1406
    %1496 = vmatprep.subr.bf16.mxu0 0
    %1497 = vmatpush1.bf16.msra.mxu0 %v1409
    %1498 = vmatprep.subr.bf16.mxu0 0
    %1499 = vmatpush1.bf16.msra.mxu0 %v1412
    %1500 = vmatprep.subr.bf16.mxu0 0
    %1501 = vmatpush1.bf16.msra.mxu0 %v1415
    %1502 = vmatprep.subr.bf16.mxu0 0
    %1503 = vmatpush1.bf16.msra.mxu0 %v1418
    %1504 = vmatprep.subr.bf16.mxu0 0
    %1505 = vmatpush1.bf16.msra.mxu0 %v1421
    %1506 = vmatprep.subr.bf16.mxu0 0
    %1507 = vmatpush1.bf16.msra.mxu0 %v1424
    %1508 = vmatprep.subr.bf16.mxu0 0
    %1509 = vmatpush1.bf16.msra.mxu0 0
    %1510 = vmatprep.subr.bf16.mxu0 0
    %1511 = vmatpush1.bf16.msra.mxu0 0
    %1512 = vmatprep.subr.bf16.mxu0 0
    %1513 = vmatpush1.bf16.msra.mxu0 0
    %1514 = vmatprep.subr.bf16.mxu0 0
    %1515 = vmatpush1.bf16.msra.mxu0 0
    %1516 = vmatprep.subr.bf16.mxu0 0
    %1517 = vmatpush1.bf16.msra.mxu0 0
    %1518 = vmatprep.subr.bf16.mxu0 0
    %1519 = vmatpush1.bf16.msra.mxu0 0
    %1520 = vmatprep.subr.bf16.mxu0 0
    %1521 = vmatpush1.bf16.msra.mxu0 0
    %1522 = vmatprep.subr.bf16.mxu0 0
    %1523 = vmatpush1.bf16.msra.mxu0 0
    %1524 = vmatprep.mubr.bf16.mxu0 0
    %1525 = vmatmul.mubr.bf16.gmra.mrb[0].mxu0 %v1269
    %v1526 = vpop.f32.mrb[0].mxu0
    %v1527 = vadd.f32 %v1317, %v1526
    %v1528 = vpop.f32.mrb[0].mxu0
    %v1529 = vpop.f32.mrb[0].mxu0
    %v1530 = vadd.f32 %v1317, %v1529
    %v1531 = vpop.f32.mrb[0].mxu0
    %1532 = vdwg.mxu0
    %v1533 = vmul.f32 %v1484, %v457
    %v1534 = vmul.f32 %v1488, %v457
    %v1535 = vpack.c.bf16 %v1534, %v1533
    %v1536 = vmul.f32 %v1486, %v457
    %v1537 = vmul.f32 %v1490, %v457
    %v1538 = vpack.c.bf16 %v1537, %v1536
    %v1539 = vmul.f32 %v1527, %v457
    %v1540 = vmul.f32 %v1530, %v457
    %v1541 = vpack.c.bf16 %v1540, %v1539
    %1542 = vmatprep.subr.bf16.mxu0 0
    %1543 = vmatpush1.bf16.xpose.msra.mxu0 %v1538
    %1544 = vmatprep.subr.bf16.mxu0 0
    %1545 = vmatpush1.bf16.xpose.msra.mxu0 0
    %1546 = vmatprep.subr.bf16.mxu0 0
    %1547 = vmatpush1.bf16.xpose.msra.mxu0 0
    %1548 = vmatprep.subr.bf16.mxu0 0
    %1549 = vmatpush1.bf16.xpose.msra.mxu0 0
    %1550 = vmatprep.subr.bf16.mxu0 0
    %1551 = vmatpush1.bf16.xpose.msra.mxu0 0
    %1552 = vmatprep.subr.bf16.mxu0 0
    %1553 = vmatpush1.bf16.xpose.msra.mxu0 0
    %1554 = vmatprep.subr.bf16.mxu0 0
    %1555 = vmatpush1.bf16.xpose.msra.mxu0 0
    %1556 = vmatprep.subr.bf16.mxu0 0
    %1557 = vmatpush1.bf16.xpose.msra.mxu0 0
    %1558 = vmatprep.subr.bf16.mxu0 0
    %1559 = vmatpush1.bf16.xpose.msra.mxu0 0
    %1560 = vmatprep.subr.bf16.mxu0 0
    %1561 = vmatpush1.bf16.xpose.msra.mxu0 0
    %1562 = vmatprep.subr.bf16.mxu0 0
    %1563 = vmatpush1.bf16.xpose.msra.mxu0 0
    %1564 = vmatprep.subr.bf16.mxu0 0
    %1565 = vmatpush1.bf16.xpose.msra.mxu0 0
    %1566 = vmatprep.subr.bf16.mxu0 0
    %1567 = vmatpush1.bf16.xpose.msra.mxu0 0
    %1568 = vmatprep.subr.bf16.mxu0 0
    %1569 = vmatpush1.bf16.xpose.msra.mxu0 0
    %1570 = vmatprep.subr.bf16.mxu0 0
    %1571 = vmatpush1.bf16.xpose.msra.mxu0 0
    %1572 = vmatprep.subr.bf16.mxu0 0
    %1573 = vmatpush1.bf16.xpose.msra.mxu0 0
    %1574 = vmatprep.mubr.bf16.mxu0 0
    %1575 = vmatmul.mubr.bf16.gmra.mrb[0].mxu0 %v1535
    %v1576 = vpop.f32.mrb[0].mxu0
    %v1577 = vadd.f32 0.0, %v1576
    %v1578 = vpop.f32.mrb[0].mxu0
    %v1579 = vpop.f32.mrb[0].mxu0
    %v1580 = vadd.f32 0.0, %v1579
    %v1581 = vpop.f32.mrb[0].mxu0
    %1582 = vdwg.mxu0
    %v1583 = vmul.f32 %v1577, 0.125
    %v1584 = vmul.f32 %v1580, 0.125
    %v1585 = vadd.f32 %v1583, %v187
    %v1586 = vadd.f32 %v1584, %v188
    %v1587 = vsel %vm512, %v1585, -inf
    %1588 = vmax.xlane.f32.xlu0 %v1587
    %v1589 = vpop.xlane.xlu0 %1588
    %v1590 = vsel %vm512, %v1586, -inf
    %1591 = vmax.xlane.f32.xlu0 %v1590
    %v1592 = vpop.xlane.xlu0 %1591
    %v1593 = vsub.f32 %v1585, %v1589
    %v1594 = vsub.f32 %v1586, %v1592
    %v1595 = vmul.f32 %v1593, 1.442695
    %v1596 = vpow.pop %v1595
    %v1597 = vmul.f32 %v1594, 1.442695
    %v1598 = vpow.pop %v1597
    %v1599 = vsel %vm512, %v1596, 0.0
    %1600 = vadd.xlane.f32.xlu0 %v1599
    %v1601 = vpop.xlane.xlu0 %1600
    %v1602 = vsel %vm512, %v1598, 0.0
    %1603 = vadd.xlane.f32.xlu0 %v1602
    %v1604 = vpop.xlane.xlu0 %1603
    %v1605 = vrcp.pop %v1601
    %v1606 = vrcp.pop %v1604
    %v1607 = vmul.f32 %v1596, %v1605
    %v1608 = vmul.f32 %v1598, %v1606
    %v1609 = vpack.c.bf16 %v1608, %v1607
    %v1610 = vmul.f32 %v1484, %v540
    %v1611 = vmul.f32 %v1488, %v540
    %v1612 = vpack.c.bf16 %v1611, %v1610
    %v1613 = vmul.f32 %v1486, %v540
    %v1614 = vmul.f32 %v1490, %v540
    %v1615 = vpack.c.bf16 %v1614, %v1613
    %v1616 = vmul.f32 %v1527, %v540
    %v1617 = vmul.f32 %v1530, %v540
    %v1618 = vpack.c.bf16 %v1617, %v1616
    %1619 = vmatprep.subr.bf16.mxu0 0
    %1620 = vmatpush1.bf16.xpose.msra.mxu0 %v1615
    %1621 = vmatprep.subr.bf16.mxu0 0
    %1622 = vmatpush1.bf16.xpose.msra.mxu0 0
    %1623 = vmatprep.subr.bf16.mxu0 0
    %1624 = vmatpush1.bf16.xpose.msra.mxu0 0
    %1625 = vmatprep.subr.bf16.mxu0 0
    %1626 = vmatpush1.bf16.xpose.msra.mxu0 0
    %1627 = vmatprep.subr.bf16.mxu0 0
    %1628 = vmatpush1.bf16.xpose.msra.mxu0 0
    %1629 = vmatprep.subr.bf16.mxu0 0
    %1630 = vmatpush1.bf16.xpose.msra.mxu0 0
    %1631 = vmatprep.subr.bf16.mxu0 0
    %1632 = vmatpush1.bf16.xpose.msra.mxu0 0
    %1633 = vmatprep.subr.bf16.mxu0 0
    %1634 = vmatpush1.bf16.xpose.msra.mxu0 0
    %1635 = vmatprep.subr.bf16.mxu0 0
    %1636 = vmatpush1.bf16.xpose.msra.mxu0 0
    %1637 = vmatprep.subr.bf16.mxu0 0
    %1638 = vmatpush1.bf16.xpose.msra.mxu0 0
    %1639 = vmatprep.subr.bf16.mxu0 0
    %1640 = vmatpush1.bf16.xpose.msra.mxu0 0
    %1641 = vmatprep.subr.bf16.mxu0 0
    %1642 = vmatpush1.bf16.xpose.msra.mxu0 0
    %1643 = vmatprep.subr.bf16.mxu0 0
    %1644 = vmatpush1.bf16.xpose.msra.mxu0 0
    %1645 = vmatprep.subr.bf16.mxu0 0
    %1646 = vmatpush1.bf16.xpose.msra.mxu0 0
    %1647 = vmatprep.subr.bf16.mxu0 0
    %1648 = vmatpush1.bf16.xpose.msra.mxu0 0
    %1649 = vmatprep.subr.bf16.mxu0 0
    %1650 = vmatpush1.bf16.xpose.msra.mxu0 0
    %1651 = vmatprep.mubr.bf16.mxu0 0
    %1652 = vmatmul.mubr.bf16.gmra.mrb[0].mxu0 %v1612
    %v1653 = vpop.f32.mrb[0].mxu0
    %v1654 = vadd.f32 0.0, %v1653
    %v1655 = vpop.f32.mrb[0].mxu0
    %v1656 = vpop.f32.mrb[0].mxu0
    %v1657 = vadd.f32 0.0, %v1656
    %v1658 = vpop.f32.mrb[0].mxu0
    %1659 = vdwg.mxu0
    %v1660 = vmul.f32 %v1654, 0.125
    %v1661 = vmul.f32 %v1657, 0.125
    %v1662 = vadd.f32 %v1660, %v187
    %v1663 = vadd.f32 %v1661, %v188
    %v1664 = vsel %vm512, %v1662, -inf
    %1665 = vmax.xlane.f32.xlu0 %v1664
    %v1666 = vpop.xlane.xlu0 %1665
    %v1667 = vsel %vm512, %v1663, -inf
    %1668 = vmax.xlane.f32.xlu0 %v1667
    %v1669 = vpop.xlane.xlu0 %1668
    %v1670 = vsub.f32 %v1662, %v1666
    %v1671 = vsub.f32 %v1663, %v1669
    %v1672 = vmul.f32 %v1670, 1.442695
    %v1673 = vpow.pop %v1672
    %v1674 = vmul.f32 %v1671, 1.442695
    %v1675 = vpow.pop %v1674
    %v1676 = vsel %vm512, %v1673, 0.0
    %1677 = vadd.xlane.f32.xlu0 %v1676
    %v1678 = vpop.xlane.xlu0 %1677
    %v1679 = vsel %vm512, %v1675, 0.0
    %1680 = vadd.xlane.f32.xlu0 %v1679
    %v1681 = vpop.xlane.xlu0 %1680
    %v1682 = vrcp.pop %v1678
    %v1683 = vrcp.pop %v1681
    %v1684 = vmul.f32 %v1673, %v1682
    %v1685 = vmul.f32 %v1675, %v1683
    %v1686 = vpack.c.bf16 %v1685, %v1684
    %v1688 = vsel %vm512, %v1686, 0
    %1690 = vmatprep.subr.bf16.mxu0 0
    %1691 = vmatpush1.bf16.msra.mxu0 %v1618
    %1692 = vmatprep.subr.bf16.mxu0 0
    %1693 = vmatpush1.bf16.msra.mxu0 0
    %1694 = vmatprep.subr.bf16.mxu0 0
    %1695 = vmatpush1.bf16.msra.mxu0 0
    %1696 = vmatprep.subr.bf16.mxu0 0
    %1697 = vmatpush1.bf16.msra.mxu0 0
    %1698 = vmatprep.subr.bf16.mxu0 0
    %1699 = vmatpush1.bf16.msra.mxu0 0
    %1700 = vmatprep.subr.bf16.mxu0 0
    %1701 = vmatpush1.bf16.msra.mxu0 0
    %1702 = vmatprep.subr.bf16.mxu0 0
    %1703 = vmatpush1.bf16.msra.mxu0 0
    %1704 = vmatprep.subr.bf16.mxu0 0
    %1705 = vmatpush1.bf16.msra.mxu0 0
    %1706 = vmatprep.subr.bf16.mxu0 0
    %1707 = vmatpush1.bf16.msra.mxu0 0
    %1708 = vmatprep.subr.bf16.mxu0 0
    %1709 = vmatpush1.bf16.msra.mxu0 0
    %1710 = vmatprep.subr.bf16.mxu0 0
    %1711 = vmatpush1.bf16.msra.mxu0 0
    %1712 = vmatprep.subr.bf16.mxu0 0
    %1713 = vmatpush1.bf16.msra.mxu0 0
    %1714 = vmatprep.subr.bf16.mxu0 0
    %1715 = vmatpush1.bf16.msra.mxu0 0
    %1716 = vmatprep.subr.bf16.mxu0 0
    %1717 = vmatpush1.bf16.msra.mxu0 0
    %1718 = vmatprep.subr.bf16.mxu0 0
    %1719 = vmatpush1.bf16.msra.mxu0 0
    %1720 = vmatprep.subr.bf16.mxu0 0
    %1721 = vmatpush1.bf16.msra.mxu0 0
    %1722 = vmatprep.mubr.bf16.mxu0 0
    %1723 = vmatmul.mubr.bf16.gmra.mrb[0].mxu0 %v1688
    %v1724 = vpop.f32.mrb[0].mxu0
    %v1725 = vadd.f32 0.0, %v1724
    %v1726 = vpop.f32.mrb[0].mxu0
    %v1727 = vpop.f32.mrb[0].mxu0
    %v1728 = vadd.f32 0.0, %v1727
    %v1729 = vpop.f32.mrb[0].mxu0
    %1730 = vdwg.mxu0
    %v1732 = vsel %vm512, %v1609, 0
    %1734 = vmatprep.subr.bf16.mxu0 0
    %1735 = vmatpush1.bf16.msra.mxu0 %v1541
    %1736 = vmatprep.subr.bf16.mxu0 0
    %1737 = vmatpush1.bf16.msra.mxu0 0
    %1738 = vmatprep.subr.bf16.mxu0 0
    %1739 = vmatpush1.bf16.msra.mxu0 0
    %1740 = vmatprep.subr.bf16.mxu0 0
    %1741 = vmatpush1.bf16.msra.mxu0 0
    %1742 = vmatprep.subr.bf16.mxu0 0
    %1743 = vmatpush1.bf16.msra.mxu0 0
    %1744 = vmatprep.subr.bf16.mxu0 0
    %1745 = vmatpush1.bf16.msra.mxu0 0
    %1746 = vmatprep.subr.bf16.mxu0 0
    %1747 = vmatpush1.bf16.msra.mxu0 0
    %1748 = vmatprep.subr.bf16.mxu0 0
    %1749 = vmatpush1.bf16.msra.mxu0 0
    %1750 = vmatprep.subr.bf16.mxu0 0
    %1751 = vmatpush1.bf16.msra.mxu0 0
    %1752 = vmatprep.subr.bf16.mxu0 0
    %1753 = vmatpush1.bf16.msra.mxu0 0
    %1754 = vmatprep.subr.bf16.mxu0 0
    %1755 = vmatpush1.bf16.msra.mxu0 0
    %1756 = vmatprep.subr.bf16.mxu0 0
    %1757 = vmatpush1.bf16.msra.mxu0 0
    %1758 = vmatprep.subr.bf16.mxu0 0
    %1759 = vmatpush1.bf16.msra.mxu0 0
    %1760 = vmatprep.subr.bf16.mxu0 0
    %1761 = vmatpush1.bf16.msra.mxu0 0
    %1762 = vmatprep.subr.bf16.mxu0 0
    %1763 = vmatpush1.bf16.msra.mxu0 0
    %1764 = vmatprep.subr.bf16.mxu0 0
    %1765 = vmatpush1.bf16.msra.mxu0 0
    %1766 = vmatprep.mubr.bf16.mxu0 0
    %1767 = vmatmul.mubr.bf16.gmra.mrb[0].mxu0 %v1732
    %v1768 = vpop.f32.mrb[0].mxu0
    %v1769 = vadd.f32 %v1725, %v1768
    %v1770 = vpop.f32.mrb[0].mxu0
    %v1771 = vpop.f32.mrb[0].mxu0
    %v1772 = vadd.f32 %v1728, %v1771
    %v1773 = vpop.f32.mrb[0].mxu0
    %1774 = vdwg.mxu0
    %v1775 = vpack.c.bf16 %v1772, %v1769
    %s1776 = scalar_lea.vmem [#allocation5], 64
    %v1777 = vld [vmem:[%s1776] sm:$0xf]
    %v1778 = vld [vmem:[%s1776 + $0x4] sm:$0xf]
    %v1779 = vld [vmem:[%s1776 + $0x8] sm:$0xf]
    %v1780 = vld [vmem:[%s1776 + $0xc] sm:$0xf]
    %v1781 = vld [vmem:[%s1776 + $0x10] sm:$0xf]
    %v1782 = vld [vmem:[%s1776 + $0x14] sm:$0xf]
    %v1783 = vld [vmem:[%s1776 + $0x18] sm:$0xf]
    %v1784 = vld [vmem:[%s1776 + $0x1c] sm:$0xf]
    %v1785 = vld [vmem:[%s1776 + $0x20] sm:$0xf]
    %v1786 = vld [vmem:[%s1776 + $0x24] sm:$0xf]
    %v1787 = vld [vmem:[%s1776 + $0x28] sm:$0xf]
    %v1788 = vld [vmem:[%s1776 + $0x2c] sm:$0xf]
    %v1789 = vld [vmem:[%s1776 + $0x30] sm:$0xf]
    %v1790 = vld [vmem:[%s1776 + $0x34] sm:$0xf]
    %v1791 = vld [vmem:[%s1776 + $0x38] sm:$0xf]
    %v1792 = vld [vmem:[%s1776 + $0x3c] sm:$0xf]
    %s1793 = scalar_lea.vmem %s9, 1
    %v1794 = vld [vmem:[%s1793] sm:$0x1]
    %v1796 = vlaneseq
    %v1797 = vshrl.u32 %v1796, 7
    %v1798 = vsub.s32 0, %v1797
    %v1799 = vrot.slane %v1794, %v1798
    %v1817 = vunpack.c.l.b16 %v1777
    %v1818 = vunpack.c.l.b16 %v1778
    %v1819 = vunpack.c.l.b16 %v1779
    %v1820 = vunpack.c.l.b16 %v1780
    %v1821 = vunpack.c.l.b16 %v1781
    %v1822 = vunpack.c.l.b16 %v1782
    %v1823 = vunpack.c.l.b16 %v1783
    %v1824 = vunpack.c.l.b16 %v1784
    %v1825 = vunpack.c.l.b16 %v1785
    %v1826 = vunpack.c.l.b16 %v1786
    %v1827 = vunpack.c.l.b16 %v1787
    %v1828 = vunpack.c.l.b16 %v1788
    %v1829 = vunpack.c.l.b16 %v1789
    %v1830 = vunpack.c.l.b16 %v1790
    %v1831 = vunpack.c.l.b16 %v1791
    %v1832 = vunpack.c.l.b16 %v1792
    %v1833 = vpack.c.b16 %v1818, %v1817
    %v1834 = vpack.c.b16 %v1820, %v1819
    %v1835 = vpack.c.b16 %v1822, %v1821
    %v1836 = vpack.c.b16 %v1824, %v1823
    %v1837 = vpack.c.b16 %v1826, %v1825
    %v1838 = vpack.c.b16 %v1828, %v1827
    %v1839 = vpack.c.b16 %v1830, %v1829
    %v1840 = vpack.c.b16 %v1832, %v1831
    %1849 = vmatprep.subr.bf16.mxu0 0
    %1850 = vmatpush1.bf16.msra.mxu0 %v1833
    %1851 = vmatprep.subr.bf16.mxu0 0
    %1852 = vmatpush1.bf16.msra.mxu0 %v1834
    %1853 = vmatprep.subr.bf16.mxu0 0
    %1854 = vmatpush1.bf16.msra.mxu0 %v1835
    %1855 = vmatprep.subr.bf16.mxu0 0
    %1856 = vmatpush1.bf16.msra.mxu0 %v1836
    %1857 = vmatprep.subr.bf16.mxu0 0
    %1858 = vmatpush1.bf16.msra.mxu0 %v1837
    %1859 = vmatprep.subr.bf16.mxu0 0
    %1860 = vmatpush1.bf16.msra.mxu0 %v1838
    %1861 = vmatprep.subr.bf16.mxu0 0
    %1862 = vmatpush1.bf16.msra.mxu0 %v1839
    %1863 = vmatprep.subr.bf16.mxu0 0
    %1864 = vmatpush1.bf16.msra.mxu0 %v1840
    %1865 = vmatprep.subr.bf16.mxu0 0
    %1866 = vmatpush1.bf16.msra.mxu0 0
    %1867 = vmatprep.subr.bf16.mxu0 0
    %1868 = vmatpush1.bf16.msra.mxu0 0
    %1869 = vmatprep.subr.bf16.mxu0 0
    %1870 = vmatpush1.bf16.msra.mxu0 0
    %1871 = vmatprep.subr.bf16.mxu0 0
    %1872 = vmatpush1.bf16.msra.mxu0 0
    %1873 = vmatprep.subr.bf16.mxu0 0
    %1874 = vmatpush1.bf16.msra.mxu0 0
    %1875 = vmatprep.subr.bf16.mxu0 0
    %1876 = vmatpush1.bf16.msra.mxu0 0
    %1877 = vmatprep.subr.bf16.mxu0 0
    %1878 = vmatpush1.bf16.msra.mxu0 0
    %1879 = vmatprep.subr.bf16.mxu0 0
    %1880 = vmatpush1.bf16.msra.mxu0 0
    %1881 = vmatprep.mubr.bf16.mxu0 0
    %1882 = vmatmul.mubr.bf16.gmra.mrb[0].mxu0 %v1775
    %v1883 = vpop.f32.mrb[0].mxu0
    %v1884 = vadd.f32 %v1799, %v1883
    %v1885 = vpop.f32.mrb[0].mxu0
    %v1886 = vpop.f32.mrb[0].mxu0
    %v1887 = vadd.f32 %v1799, %v1886
    %v1888 = vpop.f32.mrb[0].mxu0
    %1889 = vdwg.mxu0
    %v1890 = vadd.f32 %v1267, %v1884
    %v1891 = vadd.f32 %v1268, %v1887
    %s1892 = scalar_lea.vmem %s10, 1
    %v1893 = vld [vmem:[%s1892] sm:$0x1]
    %s1894 = scalar_lea.vmem %s11, 1
    %v1895 = vld [vmem:[%s1894] sm:$0x1]
    %1896 = vadd.xlane.f32.xlu0 %v1890
    %v1897 = vpop.xlane.xlu0 %1896
    %1898 = vadd.xlane.f32.xlu0 %v1891
    %v1899 = vpop.xlane.xlu0 %1898
    %v1900 = vmul.f32 %v1897, %v152
    %v1901 = vmul.f32 %v1899, %v152
    %v1902 = vsub.f32 %v1890, %v1900
    %v1903 = vsub.f32 %v1891, %v1901
    %v1904 = vmul.f32 %v1902, %v1902
    %v1905 = vmul.f32 %v1903, %v1903
    %1906 = vadd.xlane.f32.xlu0 %v1904
    %v1907 = vpop.xlane.xlu0 %1906
    %1908 = vadd.xlane.f32.xlu0 %v1905
    %v1909 = vpop.xlane.xlu0 %1908
    %v1910 = vmul.f32 %v1907, %v152
    %v1911 = vmul.f32 %v1909, %v152
    %v1912 = vadd.f32 %v1910, 1e-12
    %v1913 = vadd.f32 %v1911, 1e-12
    %v1914 = vrsqrt.pop %v1912
    %v1915 = vrsqrt.pop %v1913
    %v1916 = vmul.f32 %v1902, %v1914
    %v1917 = vmul.f32 %v1903, %v1915
    %v1919 = vlaneseq
    %v1920 = vshrl.u32 %v1919, 7
    %v1921 = vsub.s32 0, %v1920
    %v1922 = vrot.slane %v1893, %v1921
    %v1924 = vmul.f32 %v1916, %v1922
    %v1925 = vmul.f32 %v1917, %v1922
    %v1927 = vlaneseq
    %v1928 = vshrl.u32 %v1927, 7
    %v1929 = vsub.s32 0, %v1928
    %v1930 = vrot.slane %v1895, %v1929
    %v1932 = vadd.f32 %v1924, %v1930
    %v1933 = vadd.f32 %v1925, %v1930
    %v1934 = vpack.c.bf16 %v1933, %v1932
    %s1935 = scalar_lea.vmem %s12, 128
    %v1936 = vld [vmem:[%s1935] sm:$0xff]
    %v1937 = vld [vmem:[%s1935 + $0x8] sm:$0xff]
    %v1938 = vld [vmem:[%s1935 + $0x10] sm:$0xff]
    %v1939 = vld [vmem:[%s1935 + $0x18] sm:$0xff]
    %v1940 = vld [vmem:[%s1935 + $0x20] sm:$0xff]
    %v1941 = vld [vmem:[%s1935 + $0x28] sm:$0xff]
    %v1942 = vld [vmem:[%s1935 + $0x30] sm:$0xff]
    %v1943 = vld [vmem:[%s1935 + $0x38] sm:$0xff]
    %v1944 = vld [vmem:[%s1935 + $0x40] sm:$0xff]
    %v1945 = vld [vmem:[%s1935 + $0x48] sm:$0xff]
    %v1946 = vld [vmem:[%s1935 + $0x50] sm:$0xff]
    %v1947 = vld [vmem:[%s1935 + $0x58] sm:$0xff]
    %v1948 = vld [vmem:[%s1935 + $0x60] sm:$0xff]
    %v1949 = vld [vmem:[%s1935 + $0x68] sm:$0xff]
    %v1950 = vld [vmem:[%s1935 + $0x70] sm:$0xff]
    %v1951 = vld [vmem:[%s1935 + $0x78] sm:$0xff]
    %s1952 = scalar_lea.vmem %s13, 2
    %v1953 = vld [vmem:[%s1952] sm:$0x3]
    %v1955 = vlaneseq
    %v1956 = vshrl.u32 %v1955, 7
    %v1957 = vsub.s32 0, %v1956
    %v1958 = vrot.slane %v1953, %v1957
    %v1959 = vlaneseq
    %v1960 = vshrl.u32 %v1959, 7
    %v1961 = vsub.s32 1, %v1960
    %v1962 = vrot.slane %v1953, %v1961
    %v1981 = vunpack.c.l.b16 %v1936
    %v1982 = vunpack.c.h.b16 %v1936
    %v1983 = vunpack.c.l.b16 %v1937
    %v1984 = vunpack.c.h.b16 %v1937
    %v1985 = vunpack.c.l.b16 %v1938
    %v1986 = vunpack.c.h.b16 %v1938
    %v1987 = vunpack.c.l.b16 %v1939
    %v1988 = vunpack.c.h.b16 %v1939
    %v1989 = vunpack.c.l.b16 %v1940
    %v1990 = vunpack.c.h.b16 %v1940
    %v1991 = vunpack.c.l.b16 %v1941
    %v1992 = vunpack.c.h.b16 %v1941
    %v1993 = vunpack.c.l.b16 %v1942
    %v1994 = vunpack.c.h.b16 %v1942
    %v1995 = vunpack.c.l.b16 %v1943
    %v1996 = vunpack.c.h.b16 %v1943
    %v1997 = vunpack.c.l.b16 %v1944
    %v1998 = vunpack.c.h.b16 %v1944
    %v1999 = vunpack.c.l.b16 %v1945
    %v2000 = vunpack.c.h.b16 %v1945
    %v2001 = vunpack.c.l.b16 %v1946
    %v2002 = vunpack.c.h.b16 %v1946
    %v2003 = vunpack.c.l.b16 %v1947
    %v2004 = vunpack.c.h.b16 %v1947
    %v2005 = vunpack.c.l.b16 %v1948
    %v2006 = vunpack.c.h.b16 %v1948
    %v2007 = vunpack.c.l.b16 %v1949
    %v2008 = vunpack.c.h.b16 %v1949
    %v2009 = vunpack.c.l.b16 %v1950
    %v2010 = vunpack.c.h.b16 %v1950
    %v2011 = vunpack.c.l.b16 %v1951
    %v2012 = vunpack.c.h.b16 %v1951
    %v2013 = vpack.c.b16 %v1983, %v1981
    %v2014 = vpack.c.b16 %v1984, %v1982
    %v2015 = vpack.c.b16 %v1987, %v1985
    %v2016 = vpack.c.b16 %v1988, %v1986
    %v2017 = vpack.c.b16 %v1991, %v1989
    %v2018 = vpack.c.b16 %v1992, %v1990
    %v2019 = vpack.c.b16 %v1995, %v1993
    %v2020 = vpack.c.b16 %v1996, %v1994
    %v2021 = vpack.c.b16 %v1999, %v1997
    %v2022 = vpack.c.b16 %v2000, %v1998
    %v2023 = vpack.c.b16 %v2003, %v2001
    %v2024 = vpack.c.b16 %v2004, %v2002
    %v2025 = vpack.c.b16 %v2007, %v2005
    %v2026 = vpack.c.b16 %v2008, %v2006
    %v2027 = vpack.c.b16 %v2011, %v2009
    %v2028 = vpack.c.b16 %v2012, %v2010
    %2045 = vmatprep.subr.bf16.mxu0 %v2014
    %2046 = vmatpush1.bf16.msra.mxu0 %v2013
    %2047 = vmatprep.subr.bf16.mxu0 %v2016
    %2048 = vmatpush1.bf16.msra.mxu0 %v2015
    %2049 = vmatprep.subr.bf16.mxu0 %v2018
    %2050 = vmatpush1.bf16.msra.mxu0 %v2017
    %2051 = vmatprep.subr.bf16.mxu0 %v2020
    %2052 = vmatpush1.bf16.msra.mxu0 %v2019
    %2053 = vmatprep.subr.bf16.mxu0 %v2022
    %2054 = vmatpush1.bf16.msra.mxu0 %v2021
    %2055 = vmatprep.subr.bf16.mxu0 %v2024
    %2056 = vmatpush1.bf16.msra.mxu0 %v2023
    %2057 = vmatprep.subr.bf16.mxu0 %v2026
    %2058 = vmatpush1.bf16.msra.mxu0 %v2025
    %2059 = vmatprep.subr.bf16.mxu0 %v2028
    %2060 = vmatpush1.bf16.msra.mxu0 %v2027
    %2061 = vmatprep.subr.bf16.mxu0 0
    %2062 = vmatpush1.bf16.msra.mxu0 0
    %2063 = vmatprep.subr.bf16.mxu0 0
    %2064 = vmatpush1.bf16.msra.mxu0 0
    %2065 = vmatprep.subr.bf16.mxu0 0
    %2066 = vmatpush1.bf16.msra.mxu0 0
    %2067 = vmatprep.subr.bf16.mxu0 0
    %2068 = vmatpush1.bf16.msra.mxu0 0
    %2069 = vmatprep.subr.bf16.mxu0 0
    %2070 = vmatpush1.bf16.msra.mxu0 0
    %2071 = vmatprep.subr.bf16.mxu0 0
    %2072 = vmatpush1.bf16.msra.mxu0 0
    %2073 = vmatprep.subr.bf16.mxu0 0
    %2074 = vmatpush1.bf16.msra.mxu0 0
    %2075 = vmatprep.subr.bf16.mxu0 0
    %2076 = vmatpush1.bf16.msra.mxu0 0
    %2077 = vmatprep.mubr.bf16.mxu0 0
    %2078 = vmatmul.mubr.bf16.gmra.mrb[0].mxu0 %v1934
    %v2079 = vpop.f32.mrb[0].mxu0
    %v2080 = vadd.f32 %v1958, %v2079
    %v2081 = vpop.f32.mrb[0].mxu0
    %v2082 = vadd.f32 %v1962, %v2081
    %v2083 = vpop.f32.mrb[0].mxu0
    %v2084 = vadd.f32 %v1958, %v2083
    %v2085 = vpop.f32.mrb[0].mxu0
    %v2086 = vadd.f32 %v1962, %v2085
    %2087 = vdwg.mxu0
    %v2088 = vmul.f32 %v2080, %v2080
    %v2089 = vmul.f32 %v2082, %v2082
    %v2090 = vmul.f32 %v2084, %v2084
    %v2091 = vmul.f32 %v2086, %v2086
    %v2092 = vmul.f32 %v2080, %v2088
    %v2093 = vmul.f32 %v2082, %v2089
    %v2094 = vmul.f32 %v2084, %v2090
    %v2095 = vmul.f32 %v2086, %v2091
    %v2096 = vmul.f32 %v2092, 0.044715
    %v2097 = vmul.f32 %v2093, 0.044715
    %v2098 = vmul.f32 %v2094, 0.044715
    %v2099 = vmul.f32 %v2095, 0.044715
    %v2100 = vadd.f32 %v2080, %v2096
    %v2101 = vadd.f32 %v2082, %v2097
    %v2102 = vadd.f32 %v2084, %v2098
    %v2103 = vadd.f32 %v2086, %v2099
    %v2104 = vmul.f32 %v2100, 0.7978846
    %v2105 = vmul.f32 %v2101, 0.7978846
    %v2106 = vmul.f32 %v2102, 0.7978846
    %v2107 = vmul.f32 %v2103, 0.7978846
    %v2108 = vtanh.pop %v2104
    %v2109 = vtanh.pop %v2105
    %v2110 = vtanh.pop %v2106
    %v2111 = vtanh.pop %v2107
    %v2112 = vadd.f32 %v2108, 1.0
    %v2113 = vadd.f32 %v2109, 1.0
    %v2114 = vadd.f32 %v2110, 1.0
    %v2115 = vadd.f32 %v2111, 1.0
    %v2116 = vmul.f32 %v2112, 0.5
    %v2117 = vmul.f32 %v2113, 0.5
    %v2118 = vmul.f32 %v2114, 0.5
    %v2119 = vmul.f32 %v2115, 0.5
    %v2120 = vmul.f32 %v2080, %v2116
    %v2121 = vmul.f32 %v2082, %v2117
    %v2122 = vmul.f32 %v2084, %v2118
    %v2123 = vmul.f32 %v2086, %v2119
    %v2124 = vpack.c.bf16 %v2122, %v2120
    %v2125 = vpack.c.bf16 %v2123, %v2121
    %s2126 = scalar_lea.vmem [#allocation7], 128
    %v2127 = vld [vmem:[%s2126] sm:$0xf]
    %v2128 = vld [vmem:[%s2126 + $0x4] sm:$0xf]
    %v2129 = vld [vmem:[%s2126 + $0x8] sm:$0xf]
    %v2130 = vld [vmem:[%s2126 + $0xc] sm:$0xf]
    %v2131 = vld [vmem:[%s2126 + $0x10] sm:$0xf]
    %v2132 = vld [vmem:[%s2126 + $0x14] sm:$0xf]
    %v2133 = vld [vmem:[%s2126 + $0x18] sm:$0xf]
    %v2134 = vld [vmem:[%s2126 + $0x1c] sm:$0xf]
    %v2135 = vld [vmem:[%s2126 + $0x20] sm:$0xf]
    %v2136 = vld [vmem:[%s2126 + $0x24] sm:$0xf]
    %v2137 = vld [vmem:[%s2126 + $0x28] sm:$0xf]
    %v2138 = vld [vmem:[%s2126 + $0x2c] sm:$0xf]
    %v2139 = vld [vmem:[%s2126 + $0x30] sm:$0xf]
    %v2140 = vld [vmem:[%s2126 + $0x34] sm:$0xf]
    %v2141 = vld [vmem:[%s2126 + $0x38] sm:$0xf]
    %v2142 = vld [vmem:[%s2126 + $0x3c] sm:$0xf]
    %v2143 = vld [vmem:[%s2126 + $0x40] sm:$0xf]
    %v2144 = vld [vmem:[%s2126 + $0x44] sm:$0xf]
    %v2145 = vld [vmem:[%s2126 + $0x48] sm:$0xf]
    %v2146 = vld [vmem:[%s2126 + $0x4c] sm:$0xf]
    %v2147 = vld [vmem:[%s2126 + $0x50] sm:$0xf]
    %v2148 = vld [vmem:[%s2126 + $0x54] sm:$0xf]
    %v2149 = vld [vmem:[%s2126 + $0x58] sm:$0xf]
    %v2150 = vld [vmem:[%s2126 + $0x5c] sm:$0xf]
    %v2151 = vld [vmem:[%s2126 + $0x60] sm:$0xf]
    %v2152 = vld [vmem:[%s2126 + $0x64] sm:$0xf]
    %v2153 = vld [vmem:[%s2126 + $0x68] sm:$0xf]
    %v2154 = vld [vmem:[%s2126 + $0x6c] sm:$0xf]
    %v2155 = vld [vmem:[%s2126 + $0x70] sm:$0xf]
    %v2156 = vld [vmem:[%s2126 + $0x74] sm:$0xf]
    %v2157 = vld [vmem:[%s2126 + $0x78] sm:$0xf]
    %v2158 = vld [vmem:[%s2126 + $0x7c] sm:$0xf]
    %s2159 = scalar_lea.vmem %s15, 1
    %v2160 = vld [vmem:[%s2159] sm:$0x1]
    %v2162 = vlaneseq
    %v2163 = vshrl.u32 %v2162, 7
    %v2164 = vsub.s32 0, %v2163
    %v2165 = vrot.slane %v2160, %v2164
    %v2199 = vunpack.c.l.b16 %v2127
    %v2200 = vunpack.c.l.b16 %v2128
    %v2201 = vunpack.c.l.b16 %v2129
    %v2202 = vunpack.c.l.b16 %v2130
    %v2203 = vunpack.c.l.b16 %v2131
    %v2204 = vunpack.c.l.b16 %v2132
    %v2205 = vunpack.c.l.b16 %v2133
    %v2206 = vunpack.c.l.b16 %v2134
    %v2207 = vunpack.c.l.b16 %v2135
    %v2208 = vunpack.c.l.b16 %v2136
    %v2209 = vunpack.c.l.b16 %v2137
    %v2210 = vunpack.c.l.b16 %v2138
    %v2211 = vunpack.c.l.b16 %v2139
    %v2212 = vunpack.c.l.b16 %v2140
    %v2213 = vunpack.c.l.b16 %v2141
    %v2214 = vunpack.c.l.b16 %v2142
    %v2215 = vunpack.c.l.b16 %v2143
    %v2216 = vunpack.c.l.b16 %v2144
    %v2217 = vunpack.c.l.b16 %v2145
    %v2218 = vunpack.c.l.b16 %v2146
    %v2219 = vunpack.c.l.b16 %v2147
    %v2220 = vunpack.c.l.b16 %v2148
    %v2221 = vunpack.c.l.b16 %v2149
    %v2222 = vunpack.c.l.b16 %v2150
    %v2223 = vunpack.c.l.b16 %v2151
    %v2224 = vunpack.c.l.b16 %v2152
    %v2225 = vunpack.c.l.b16 %v2153
    %v2226 = vunpack.c.l.b16 %v2154
    %v2227 = vunpack.c.l.b16 %v2155
    %v2228 = vunpack.c.l.b16 %v2156
    %v2229 = vunpack.c.l.b16 %v2157
    %v2230 = vunpack.c.l.b16 %v2158
    %v2231 = vpack.c.b16 %v2200, %v2199
    %v2232 = vpack.c.b16 %v2202, %v2201
    %v2233 = vpack.c.b16 %v2204, %v2203
    %v2234 = vpack.c.b16 %v2206, %v2205
    %v2235 = vpack.c.b16 %v2208, %v2207
    %v2236 = vpack.c.b16 %v2210, %v2209
    %v2237 = vpack.c.b16 %v2212, %v2211
    %v2238 = vpack.c.b16 %v2214, %v2213
    %v2239 = vpack.c.b16 %v2216, %v2215
    %v2240 = vpack.c.b16 %v2218, %v2217
    %v2241 = vpack.c.b16 %v2220, %v2219
    %v2242 = vpack.c.b16 %v2222, %v2221
    %v2243 = vpack.c.b16 %v2224, %v2223
    %v2244 = vpack.c.b16 %v2226, %v2225
    %v2245 = vpack.c.b16 %v2228, %v2227
    %v2246 = vpack.c.b16 %v2230, %v2229
    %2263 = vmatprep.subr.bf16.mxu0 0
    %2264 = vmatpush1.bf16.msra.mxu0 %v2231
    %2265 = vmatprep.subr.bf16.mxu0 0
    %2266 = vmatpush1.bf16.msra.mxu0 %v2232
    %2267 = vmatprep.subr.bf16.mxu0 0
    %2268 = vmatpush1.bf16.msra.mxu0 %v2233
    %2269 = vmatprep.subr.bf16.mxu0 0
    %2270 = vmatpush1.bf16.msra.mxu0 %v2234
    %2271 = vmatprep.subr.bf16.mxu0 0
    %2272 = vmatpush1.bf16.msra.mxu0 %v2235
    %2273 = vmatprep.subr.bf16.mxu0 0
    %2274 = vmatpush1.bf16.msra.mxu0 %v2236
    %2275 = vmatprep.subr.bf16.mxu0 0
    %2276 = vmatpush1.bf16.msra.mxu0 %v2237
    %2277 = vmatprep.subr.bf16.mxu0 0
    %2278 = vmatpush1.bf16.msra.mxu0 %v2238
    %2279 = vmatprep.subr.bf16.mxu0 0
    %2280 = vmatpush1.bf16.msra.mxu0 %v2239
    %2281 = vmatprep.subr.bf16.mxu0 0
    %2282 = vmatpush1.bf16.msra.mxu0 %v2240
    %2283 = vmatprep.subr.bf16.mxu0 0
    %2284 = vmatpush1.bf16.msra.mxu0 %v2241
    %2285 = vmatprep.subr.bf16.mxu0 0
    %2286 = vmatpush1.bf16.msra.mxu0 %v2242
    %2287 = vmatprep.subr.bf16.mxu0 0
    %2288 = vmatpush1.bf16.msra.mxu0 %v2243
    %2289 = vmatprep.subr.bf16.mxu0 0
    %2290 = vmatpush1.bf16.msra.mxu0 %v2244
    %2291 = vmatprep.subr.bf16.mxu0 0
    %2292 = vmatpush1.bf16.msra.mxu0 %v2245
    %2293 = vmatprep.subr.bf16.mxu0 0
    %2294 = vmatpush1.bf16.msra.mxu0 %v2246
    %2295 = vmatprep.mubr.bf16.mxu0 %v2125
    %2296 = vmatmul.mubr.bf16.gmra.mrb[0].mxu0 %v2124
    %v2297 = vpop.f32.mrb[0].mxu0
    %v2298 = vadd.f32 %v2165, %v2297
    %v2299 = vpop.f32.mrb[0].mxu0
    %v2300 = vpop.f32.mrb[0].mxu0
    %v2301 = vadd.f32 %v2165, %v2300
    %v2302 = vpop.f32.mrb[0].mxu0
    %2303 = vdwg.mxu0
    %v2304 = vadd.f32 %v1932, %v2298
    %v2305 = vadd.f32 %v1933, %v2301
    %s2306 = scalar_lea.vmem %s16, 1
    %v2307 = vld [vmem:[%s2306] sm:$0x1]
    %s2308 = scalar_lea.vmem %s17, 1
    %v2309 = vld [vmem:[%s2308] sm:$0x1]
    %2310 = vadd.xlane.f32.xlu0 %v2304
    %v2311 = vpop.xlane.xlu0 %2310
    %2312 = vadd.xlane.f32.xlu0 %v2305
    %v2313 = vpop.xlane.xlu0 %2312
    %v2314 = vmul.f32 %v2311, %v152
    %v2315 = vmul.f32 %v2313, %v152
    %v2316 = vsub.f32 %v2304, %v2314
    %v2317 = vsub.f32 %v2305, %v2315
    %v2318 = vmul.f32 %v2316, %v2316
    %v2319 = vmul.f32 %v2317, %v2317
    %2320 = vadd.xlane.f32.xlu0 %v2318
    %v2321 = vpop.xlane.xlu0 %2320
    %2322 = vadd.xlane.f32.xlu0 %v2319
    %v2323 = vpop.xlane.xlu0 %2322
    %v2324 = vmul.f32 %v2321, %v152
    %v2325 = vmul.f32 %v2323, %v152
    %v2326 = vadd.f32 %v2324, 1e-12
    %v2327 = vadd.f32 %v2325, 1e-12
    %v2328 = vrsqrt.pop %v2326
    %v2329 = vrsqrt.pop %v2327
    %v2330 = vmul.f32 %v2316, %v2328
    %v2331 = vmul.f32 %v2317, %v2329
    %v2333 = vlaneseq
    %v2334 = vshrl.u32 %v2333, 7
    %v2335 = vsub.s32 0, %v2334
    %v2336 = vrot.slane %v2307, %v2335
    %v2338 = vmul.f32 %v2330, %v2336
    %v2339 = vmul.f32 %v2331, %v2336
    %v2341 = vlaneseq
    %v2342 = vshrl.u32 %v2341, 7
    %v2343 = vsub.s32 0, %v2342
    %v2344 = vrot.slane %v2309, %v2343
    %v2346 = vadd.f32 %v2338, %v2344
    %v2347 = vadd.f32 %v2339, %v2344
    %v2348 = vld [vmem:[%s3] sm:$0x3]
    %v2350 = vsel %vm512, %v2348, 0
    %2352 = vmatprep.subr.mxu0 0.0
    %2353 = vmatpush1.msra.mxu0 %v2346
    %2354 = vmatprep.subr.mxu0 0.0
    %2355 = vmatpush1.msra.mxu0 %v2347
    %2356 = vmatprep.subr.mxu0 0.0
    %2357 = vmatpush1.msra.mxu0 0.0
    %2358 = vmatprep.subr.mxu0 0.0
    %2359 = vmatpush1.msra.mxu0 0.0
    %2360 = vmatprep.subr.mxu0 0.0
    %2361 = vmatpush1.msra.mxu0 0.0
    %2362 = vmatprep.subr.mxu0 0.0
    %2363 = vmatpush1.msra.mxu0 0.0
    %2364 = vmatprep.subr.mxu0 0.0
    %2365 = vmatpush1.msra.mxu0 0.0
    %2366 = vmatprep.subr.mxu0 0.0
    %2367 = vmatpush1.msra.mxu0 0.0
    %2368 = vmatprep.subr.mxu0 0.0
    %2369 = vmatpush1.msra.mxu0 0.0
    %2370 = vmatprep.subr.mxu0 0.0
    %2371 = vmatpush1.msra.mxu0 0.0
    %2372 = vmatprep.subr.mxu0 0.0
    %2373 = vmatpush1.msra.mxu0 0.0
    %2374 = vmatprep.subr.mxu0 0.0
    %2375 = vmatpush1.msra.mxu0 0.0
    %2376 = vmatprep.subr.mxu0 0.0
    %2377 = vmatpush1.msra.mxu0 0.0
    %2378 = vmatprep.subr.mxu0 0.0
    %2379 = vmatpush1.msra.mxu0 0.0
    %2380 = vmatprep.subr.mxu0 0.0
    %2381 = vmatpush1.msra.mxu0 0.0
    %2382 = vmatprep.subr.mxu0 0.0
    %2383 = vmatpush1.msra.mxu0 0.0
    %2384 = vmatprep.subr.mxu0 0.0
    %2385 = vmatpush1.msra.mxu0 0.0
    %2386 = vmatprep.subr.mxu0 0.0
    %2387 = vmatpush1.msra.mxu0 0.0
    %2388 = vmatprep.subr.mxu0 0.0
    %2389 = vmatpush1.msra.mxu0 0.0
    %2390 = vmatprep.subr.mxu0 0.0
    %2391 = vmatpush1.msra.mxu0 0.0
    %2392 = vmatprep.subr.mxu0 0.0
    %2393 = vmatpush1.msra.mxu0 0.0
    %2394 = vmatprep.subr.mxu0 0.0
    %2395 = vmatpush1.msra.mxu0 0.0
    %2396 = vmatprep.subr.mxu0 0.0
    %2397 = vmatpush1.msra.mxu0 0.0
    %2398 = vmatprep.subr.mxu0 0.0
    %2399 = vmatpush1.msra.mxu0 0.0
    %2400 = vmatprep.subr.mxu0 0.0
    %2401 = vmatpush1.msra.mxu0 0.0
    %2402 = vmatprep.subr.mxu0 0.0
    %2403 = vmatpush1.msra.mxu0 0.0
    %2404 = vmatprep.subr.mxu0 0.0
    %2405 = vmatpush1.msra.mxu0 0.0
    %2406 = vmatprep.subr.mxu0 0.0
    %2407 = vmatpush1.msra.mxu0 0.0
    %2408 = vmatprep.subr.mxu0 0.0
    %2409 = vmatpush1.msra.mxu0 0.0
    %2410 = vmatprep.subr.mxu0 0.0
    %2411 = vmatpush1.msra.mxu0 0.0
    %2412 = vmatprep.subr.mxu0 0.0
    %2413 = vmatpush1.msra.mxu0 0.0
    %2414 = vmatprep.subr.mxu0 0.0
    %2415 = vmatpush1.msra.mxu0 0.0
    %2416 = vmatprep.mubr.f32.mxu0 0.0
    %2417 = vmatmul.mubr.f32.gmra.mrb[0].mxu0 %v2350
    %v2418 = vpop.f32.mrb[0].mxu0
    %v2419 = vadd.f32 0.0, %v2418
    %v2420 = vpop.f32.mrb[0].mxu0
    %2421 = vdwg.mxu0
    %v2422 = vpack.c.bf16 %v2419, %v2419
    %v2423 = vld [vmem:[#allocation8] sm:$0xf]
    %v2424 = vld [vmem:[#allocation8 + $0x4] sm:$0xf]
    %v2425 = vld [vmem:[#allocation8 + $0x8] sm:$0xf]
    %v2426 = vld [vmem:[#allocation8 + $0xc] sm:$0xf]
    %v2427 = vld [vmem:[#allocation8 + $0x10] sm:$0xf]
    %v2428 = vld [vmem:[#allocation8 + $0x14] sm:$0xf]
    %v2429 = vld [vmem:[#allocation8 + $0x18] sm:$0xf]
    %v2430 = vld [vmem:[#allocation8 + $0x1c] sm:$0xf]
    %v2431 = vld [vmem:[#allocation8 + $0x20] sm:$0xf]
    %v2432 = vld [vmem:[#allocation8 + $0x24] sm:$0xf]
    %v2433 = vld [vmem:[#allocation8 + $0x28] sm:$0xf]
    %v2434 = vld [vmem:[#allocation8 + $0x2c] sm:$0xf]
    %v2435 = vld [vmem:[#allocation8 + $0x30] sm:$0xf]
    %v2436 = vld [vmem:[#allocation8 + $0x34] sm:$0xf]
    %v2437 = vld [vmem:[#allocation8 + $0x38] sm:$0xf]
    %v2438 = vld [vmem:[#allocation8 + $0x3c] sm:$0xf]
    %v2439 = vld [vmem:[%s19] sm:$0x1]
    %v2441 = vlaneseq
    %v2442 = vshrl.u32 %v2441, 7
    %v2443 = vsub.s32 0, %v2442
    %v2444 = vrot.slane %v2439, %v2443
    %v2462 = vunpack.c.l.b16 %v2423
    %v2463 = vunpack.c.l.b16 %v2424
    %v2464 = vunpack.c.l.b16 %v2425
    %v2465 = vunpack.c.l.b16 %v2426
    %v2466 = vunpack.c.l.b16 %v2427
    %v2467 = vunpack.c.l.b16 %v2428
    %v2468 = vunpack.c.l.b16 %v2429
    %v2469 = vunpack.c.l.b16 %v2430
    %v2470 = vunpack.c.l.b16 %v2431
    %v2471 = vunpack.c.l.b16 %v2432
    %v2472 = vunpack.c.l.b16 %v2433
    %v2473 = vunpack.c.l.b16 %v2434
    %v2474 = vunpack.c.l.b16 %v2435
    %v2475 = vunpack.c.l.b16 %v2436
    %v2476 = vunpack.c.l.b16 %v2437
    %v2477 = vunpack.c.l.b16 %v2438
    %v2478 = vpack.c.b16 %v2463, %v2462
    %v2479 = vpack.c.b16 %v2465, %v2464
    %v2480 = vpack.c.b16 %v2467, %v2466
    %v2481 = vpack.c.b16 %v2469, %v2468
    %v2482 = vpack.c.b16 %v2471, %v2470
    %v2483 = vpack.c.b16 %v2473, %v2472
    %v2484 = vpack.c.b16 %v2475, %v2474
    %v2485 = vpack.c.b16 %v2477, %v2476
    %2494 = vmatprep.subr.bf16.mxu0 0
    %2495 = vmatpush1.bf16.msra.mxu0 %v2478
    %2496 = vmatprep.subr.bf16.mxu0 0
    %2497 = vmatpush1.bf16.msra.mxu0 %v2479
    %2498 = vmatprep.subr.bf16.mxu0 0
    %2499 = vmatpush1.bf16.msra.mxu0 %v2480
    %2500 = vmatprep.subr.bf16.mxu0 0
    %2501 = vmatpush1.bf16.msra.mxu0 %v2481
    %2502 = vmatprep.subr.bf16.mxu0 0
    %2503 = vmatpush1.bf16.msra.mxu0 %v2482
    %2504 = vmatprep.subr.bf16.mxu0 0
    %2505 = vmatpush1.bf16.msra.mxu0 %v2483
    %2506 = vmatprep.subr.bf16.mxu0 0
    %2507 = vmatpush1.bf16.msra.mxu0 %v2484
    %2508 = vmatprep.subr.bf16.mxu0 0
    %2509 = vmatpush1.bf16.msra.mxu0 %v2485
    %2510 = vmatprep.subr.bf16.mxu0 0
    %2511 = vmatpush1.bf16.msra.mxu0 0
    %2512 = vmatprep.subr.bf16.mxu0 0
    %2513 = vmatpush1.bf16.msra.mxu0 0
    %2514 = vmatprep.subr.bf16.mxu0 0
    %2515 = vmatpush1.bf16.msra.mxu0 0
    %2516 = vmatprep.subr.bf16.mxu0 0
    %2517 = vmatpush1.bf16.msra.mxu0 0
    %2518 = vmatprep.subr.bf16.mxu0 0
    %2519 = vmatpush1.bf16.msra.mxu0 0
    %2520 = vmatprep.subr.bf16.mxu0 0
    %2521 = vmatpush1.bf16.msra.mxu0 0
    %2522 = vmatprep.subr.bf16.mxu0 0
    %2523 = vmatpush1.bf16.msra.mxu0 0
    %2524 = vmatprep.subr.bf16.mxu0 0
    %2525 = vmatpush1.bf16.msra.mxu0 0
    %2526 = vmatprep.mubr.bf16.mxu0 0
    %2527 = vmatmul.mubr.bf16.gmra.mrb[0].mxu0 %v2422
    %v2528 = vpop.f32.mrb[0].mxu0
    %v2529 = vadd.f32 %v2444, %v2528
    %v2530 = vpop.f32.mrb[0].mxu0
    %v2531 = vpop.f32.mrb[0].mxu0
    %v2532 = vpop.f32.mrb[0].mxu0
    %2533 = vdwg.mxu0
    %v2534 = vtanh.pop %v2529
    %v2535 = vpack.c.bf16 %v2534, %v2534
    %v2536 = vld [vmem:[#allocation10] sm:$0xf]
    %v2537 = vld [vmem:[#allocation10 + $0x4] sm:$0xf]
    %v2538 = vld [vmem:[#allocation10 + $0x8] sm:$0xf]
    %v2539 = vld [vmem:[#allocation10 + $0xc] sm:$0xf]
    %v2540 = vld [vmem:[#allocation10 + $0x10] sm:$0xf]
    %v2541 = vld [vmem:[#allocation10 + $0x14] sm:$0xf]
    %v2542 = vld [vmem:[#allocation10 + $0x18] sm:$0xf]
    %v2543 = vld [vmem:[#allocation10 + $0x1c] sm:$0xf]
    %v2544 = vld [vmem:[#allocation10 + $0x20] sm:$0xf]
    %v2545 = vld [vmem:[#allocation10 + $0x24] sm:$0xf]
    %v2546 = vld [vmem:[#allocation10 + $0x28] sm:$0xf]
    %v2547 = vld [vmem:[#allocation10 + $0x2c] sm:$0xf]
    %v2548 = vld [vmem:[#allocation10 + $0x30] sm:$0xf]
    %v2549 = vld [vmem:[#allocation10 + $0x34] sm:$0xf]
    %v2550 = vld [vmem:[#allocation10 + $0x38] sm:$0xf]
    %v2551 = vld [vmem:[#allocation10 + $0x3c] sm:$0xf]
    %v2552 = vld [vmem:[%s21] sm:$0x1]
    %v2554 = vlaneseq
    %v2555 = vshrl.u32 %v2554, 7
    %v2556 = vsub.s32 0, %v2555
    %v2557 = vrot.slane %v2552, %v2556
    %v2575 = vunpack.c.l.b16 %v2536
    %v2576 = vunpack.c.l.b16 %v2537
    %v2577 = vunpack.c.l.b16 %v2538
    %v2578 = vunpack.c.l.b16 %v2539
    %v2579 = vunpack.c.l.b16 %v2540
    %v2580 = vunpack.c.l.b16 %v2541
    %v2581 = vunpack.c.l.b16 %v2542
    %v2582 = vunpack.c.l.b16 %v2543
    %v2583 = vunpack.c.l.b16 %v2544
    %v2584 = vunpack.c.l.b16 %v2545
    %v2585 = vunpack.c.l.b16 %v2546
    %v2586 = vunpack.c.l.b16 %v2547
    %v2587 = vunpack.c.l.b16 %v2548
    %v2588 = vunpack.c.l.b16 %v2549
    %v2589 = vunpack.c.l.b16 %v2550
    %v2590 = vunpack.c.l.b16 %v2551
    %v2591 = vpack.c.b16 %v2576, %v2575
    %v2592 = vpack.c.b16 %v2578, %v2577
    %v2593 = vpack.c.b16 %v2580, %v2579
    %v2594 = vpack.c.b16 %v2582, %v2581
    %v2595 = vpack.c.b16 %v2584, %v2583
    %v2596 = vpack.c.b16 %v2586, %v2585
    %v2597 = vpack.c.b16 %v2588, %v2587
    %v2598 = vpack.c.b16 %v2590, %v2589
    %2607 = vmatprep.subr.bf16.mxu0 0
    %2608 = vmatpush1.bf16.msra.mxu0 %v2591
    %2609 = vmatprep.subr.bf16.mxu0 0
    %2610 = vmatpush1.bf16.msra.mxu0 %v2592
    %2611 = vmatprep.subr.bf16.mxu0 0
    %2612 = vmatpush1.bf16.msra.mxu0 %v2593
    %2613 = vmatprep.subr.bf16.mxu0 0
    %2614 = vmatpush1.bf16.msra.mxu0 %v2594
    %2615 = vmatprep.subr.bf16.mxu0 0
    %2616 = vmatpush1.bf16.msra.mxu0 %v2595
    %2617 = vmatprep.subr.bf16.mxu0 0
    %2618 = vmatpush1.bf16.msra.mxu0 %v2596
    %2619 = vmatprep.subr.bf16.mxu0 0
    %2620 = vmatpush1.bf16.msra.mxu0 %v2597
    %2621 = vmatprep.subr.bf16.mxu0 0
    %2622 = vmatpush1.bf16.msra.mxu0 %v2598
    %2623 = vmatprep.subr.bf16.mxu0 0
    %2624 = vmatpush1.bf16.msra.mxu0 0
    %2625 = vmatprep.subr.bf16.mxu0 0
    %2626 = vmatpush1.bf16.msra.mxu0 0
    %2627 = vmatprep.subr.bf16.mxu0 0
    %2628 = vmatpush1.bf16.msra.mxu0 0
    %2629 = vmatprep.subr.bf16.mxu0 0
    %2630 = vmatpush1.bf16.msra.mxu0 0
    %2631 = vmatprep.subr.bf16.mxu0 0
    %2632 = vmatpush1.bf16.msra.mxu0 0
    %2633 = vmatprep.subr.bf16.mxu0 0
    %2634 = vmatpush1.bf16.msra.mxu0 0
    %2635 = vmatprep.subr.bf16.mxu0 0
    %2636 = vmatpush1.bf16.msra.mxu0 0
    %2637 = vmatprep.subr.bf16.mxu0 0
    %2638 = vmatpush1.bf16.msra.mxu0 0
    %2639 = vmatprep.mubr.bf16.mxu0 0
    %2640 = vmatmul.mubr.bf16.gmra.mrb[0].mxu0 %v2535
    %v2641 = vpop.f32.mrb[0].mxu0
    %v2642 = vadd.f32 %v2557, %v2641
    %v2643 = vpop.f32.mrb[0].mxu0
    %v2644 = vpop.f32.mrb[0].mxu0
    %v2645 = vpop.f32.mrb[0].mxu0
    %2646 = vdwg.mxu0
    %v2647 = vmax.f32 %v2642, 0.0
    %2648 = vst [vmem:[#allocation11] sm:$0x3] %v2647
    // Predicated region
    $region110: #{bert_classifier_forward.1} parent=1 // pred_check
      _
    $region111: #{bert_classifier_forward.1} parent=1 // pred_check_branch
      %2650 = sbr.rel (0) target = $region113
    $region112: #{bert_classifier_forward.1} parent=1 // pred_region
      %s2652 = ssub.s32 32, 32
      %2653 = vsyncadd [#allocation4], %s2652
      %s2655 = sshll.u32 [#allocation11], 4
      %s2656 = int_to_ptr.vmem [resolvable:$true] %s2655
      %2658 = dma.vmem_to_hbm [thread:$0]  %s2656, 32, %s22, [#allocation4]
    $region113: #{bert_classifier_forward.1} parent=1 // pred_fallthru
      _
    // Predicated region
    $region114: #{bert_classifier_forward.1} parent=1 // pred_check
      _
    $region115: #{bert_classifier_forward.1} parent=1 // pred_check_branch
      %2660 = sbr.rel (0) target = $region117
    $region116: #{bert_classifier_forward.1} parent=1 // pred_region
      %2661 = dma.done [#allocation4], 32
    $region117: #{bert_classifier_forward.1} parent=1 // pred_fallthru
      _
    %2662 = vsyncpa [#allocation3], 1
    %2663 = vsyncpa [#allocation6], 1
    %2664 = vsyncpa [#allocation9], 1
    %2665 = vsyncpa [#allocation4], 1

</llo_original>
